<compile_context>
chip_gen: v7x
topology: tpu7x:2x2x1
jax: 0.10.0
libtpu: 0.0.40
codegen_flags: <defaults>
</compile_context>

<pallas_src>
import jax
import jax.numpy as jnp
from jax import lax
from jax.experimental import pallas as pl
from jax.experimental.pallas import tpu as pltpu


# ------------------------------ Pallas kernel ------------------------------- #

def _cfm_fused_kernel(x1u_ref, x1m_ref, x1d_ref,
                      x2u_ref, x2m_ref, x2d_ref,
                      g_ref, wa_ref, wb_ref, lb_ref, wtap_ref, cb_ref,
                      o1_ref, o2_ref, xs_ref):
    """Fused: x_sum = linear(cat(x1,x2)); out_i = x_i + conv3x3(x_sum) + x_sum*g."""
    _, TH, W, Cp = x1m_ref.shape
    f32 = jnp.float32
    t = pl.program_id(1)
    nt = pl.num_programs(1)

    wa = wa_ref[...]                                        # (Cp, Cp) compute dtype
    wb = wb_ref[...]
    lb = lb_ref[...]                                        # (1, Cp)  f32

    def fuse_linear(a, b):                                  # MXU dots, f32 accum
        return (jnp.dot(a, wa, preferred_element_type=f32)
                + jnp.dot(b, wb, preferred_element_type=f32) + lb)

    # ---- stage 1: fused linear on the main TH rows of this tile ------------
    x1m = x1m_ref[...].reshape(TH * W, Cp)
    x2m = x2m_ref[...].reshape(TH * W, Cp)
    xs_main = fuse_linear(x1m, x2m)                         # (TH*W, Cp) f32

    # ---- halo rows (recomputed linear; zeroed at the image borders) --------
    xs_up = fuse_linear(x1u_ref[...].reshape(W, Cp), x2u_ref[...].reshape(W, Cp))
    xs_up = xs_up * jnp.where(t > 0, 1.0, 0.0)
    xs_dn = fuse_linear(x1d_ref[...].reshape(W, Cp), x2d_ref[...].reshape(W, Cp))
    xs_dn = xs_dn * jnp.where(t < nt - 1, 1.0, 0.0)

    # ---- zero-padded (TH+2, W+2, Cp) x_sum tile lives in VMEM scratch ------
    xs_ref[...] = jnp.zeros_like(xs_ref)
    xs_ref[1:TH + 1, 1:W + 1, :] = xs_main.reshape(TH, W, Cp)
    xs_ref[0:1, 1:W + 1, :] = xs_up.reshape(1, W, Cp)
    xs_ref[TH + 1:TH + 2, 1:W + 1, :] = xs_dn.reshape(1, W, Cp)

    # ---- LSA: 3x3 conv as 9 shifted (TH*W, Cp)@(Cp, Cp) MXU matmuls --------
    cdt = wtap_ref.dtype
    acc = jnp.zeros((TH * W, Cp), f32)
    for k in range(9):                                      # static unroll
        dy, dx = k // 3, k % 3
        slab = xs_ref[dy:dy + TH, dx:dx + W, :].reshape(TH * W, Cp)
        acc = acc + jnp.dot(slab.astype(cdt), wtap_ref[k],
                            preferred_element_type=f32)

    # ---- SE gate (hoisted, passed in) + residual adds ----------------------
    g = g_ref[...].reshape(1, Cp)                           # (1, Cp) f32
    x_fusion = acc + cb_ref[...] + xs_main * g              # (TH*W, Cp) f32
    o1_ref[...] = (x1m.astype(f32) + x_fusion).reshape(o1_ref.shape).astype(o1_ref.dtype)
    o2_ref[...] = (x2m.astype(f32) + x_fusion).reshape(o2_ref.shape).astype(o2_ref.dtype)


# ------------------------------ host wrapper -------------------------------- #

def _round_up(x, m):
    return ((x + m - 1) // m) * m


def _choose_tile_rows(H, W, Cp, requested=None, act_bytes=2,
                      budget_bytes=4 * 1024 * 1024):
    """Largest divisor of H whose per-tile working set fits a small VMEM budget
    (valid on every generation incl. v7x's 64 MiB physical VMEM)."""
    divisors = [d for d in range(1, H + 1) if H % d == 0]
    if requested is not None:
        return max(d for d in divisors if d <= max(1, requested))
    best = 1
    for d in divisors:
        tile = ((d + 2) * (W + 2) * Cp * 4                  # f32 x_sum scratch
                + 2 * 2 * d * W * Cp * act_bytes            # x1/x2 main blocks, 2-deep pipe
                + 2 * 2 * d * W * Cp * 4)                   # two f32 out blocks, 2-deep
        if tile <= budget_bytes and d * W <= 4096:          # modest M also suits v5e MXU
            best = d
    return best


def cfm_wogim_forward(x1_nchw, x2_nchw, params, *,
                      compute_dtype=jnp.bfloat16, tile_rows=None):
    f32 = jnp.float32
    cd = compute_dtype
    B, C, H, W = x1_nchw.shape
    Cp = _round_up(C, 128)                                  # lane-dense channels

    # Activations in compute precision (bf16 halves HBM/VMEM traffic).
    x1c = x1_nchw.astype(cd)
    x2c = x2_nchw.astype(cd)

    # ---- SE gate, hoisted out of the kernel --------------------------------
    # The fuse-linear is linear, so mean_N(x_sum) = mean_HW(x1)@Wa +
    # mean_HW(x2)@Wb + b exactly; gate is O(B*C) work in plain JAX.
    wa_c = params["lin_wa"].astype(cd).astype(f32)
    wb_c = params["lin_wb"].astype(cd).astype(f32)
    m1 = jnp.mean(x1c.astype(f32), axis=(2, 3))             # (B, C)
    m2 = jnp.mean(x2c.astype(f32), axis=(2, 3))
    pooled = m1 @ wa_c + m2 @ wb_c + params["lin_b"]
    g = jax.nn.sigmoid(jnp.maximum(pooled @ params["se_w1"], 0.0) @ params["se_w2"])
    g_pad = jnp.pad(g[:, None, :], ((0, 0), (0, 0), (0, Cp - C)))   # (B,1,Cp) f32

    # ---- layout: NCHW -> NHWC (module boundary is NCHW), pad C to 128 lanes
    def to_nhwc(x):
        x = jnp.transpose(x, (0, 2, 3, 1))
        return jnp.pad(x, ((0, 0), (0, 0), (0, 0), (0, Cp - C))) if Cp != C else x
    x1p = to_nhwc(x1c)
    x2p = to_nhwc(x2c)

    # ---- weights, channel-padded; MXU operands in compute precision --------
    pad2 = lambda w: jnp.pad(w, ((0, Cp - w.shape[0]), (0, Cp - w.shape[1])))
    wa_p = pad2(params["lin_wa"]).astype(cd)
    wb_p = pad2(params["lin_wb"]).astype(cd)
    lb_p = jnp.pad(params["lin_b"], ((0, 0), (0, Cp - C)))                 # f32
    wt_p = jnp.pad(params["conv_w"].reshape(9, C, C),
                   ((0, 0), (0, Cp - C), (0, Cp - C))).astype(cd)          # (9,Cp,Cp)
    cb_p = jnp.pad(params["conv_b"], ((0, 0), (0, Cp - C)))                # f32

    TH = _choose_tile_rows(H, W, Cp, tile_rows,
                           act_bytes=jnp.dtype(cd).itemsize)
    nT = H // TH

    main_spec = pl.BlockSpec((1, TH, W, Cp), lambda b, t: (b, t, 0, 0))
    # 1-row halo blocks: block size 1 along H => index_map returns the row.
    up_spec = pl.BlockSpec((1, 1, W, Cp),
                           lambda b, t: (b, jnp.maximum(t * TH - 1, 0), 0, 0))
    dn_spec = pl.BlockSpec((1, 1, W, Cp),
                           lambda b, t: (b, jnp.minimum(t * TH + TH, H - 1), 0, 0))
    g_spec = pl.BlockSpec((1, 1, Cp), lambda b, t: (b, 0, 0))
    wcc_spec = pl.BlockSpec((Cp, Cp), lambda b, t: (0, 0))
    bias_spec = pl.BlockSpec((1, Cp), lambda b, t: (0, 0))
    wtap_spec = pl.BlockSpec((9, Cp, Cp), lambda b, t: (0, 0, 0))

    o1p, o2p = pl.pallas_call(
        _cfm_fused_kernel,
        out_shape=(jax.ShapeDtypeStruct((B, H, W, Cp), f32),
                   jax.ShapeDtypeStruct((B, H, W, Cp), f32)),
        grid=(B, nT),
        in_specs=[up_spec, main_spec, dn_spec,
                  up_spec, main_spec, dn_spec,
                  g_spec, wcc_spec, wcc_spec, bias_spec, wtap_spec, bias_spec],
        out_specs=[main_spec, main_spec],
        scratch_shapes=[pltpu.VMEM((TH + 2, W + 2, Cp), f32)],
        compiler_params=pltpu.CompilerParams(
            dimension_semantics=("parallel", "parallel"),
            vmem_limit_bytes=32 * 1024 * 1024),
    )(x1p, x1p, x1p, x2p, x2p, x2p,
      g_pad, wa_p, wb_p, lb_p, wt_p, cb_p)

    # ---- back to the module's NCHW boundary, drop channel padding ----------
    # TODO(synk): if the surrounding model can consume NHWC, these transposes
    # (one full HBM pass each) can be dropped entirely.
    o1 = jnp.transpose(o1p[..., :C], (0, 3, 1, 2))
    o2 = jnp.transpose(o2p[..., :C], (0, 3, 1, 2))
    return o1, o2


# --------------------------- pure-JAX reference ------------------------------ #

def reference_forward(x1, x2, p, compute_dtype=jnp.bfloat16):
    """Module semantics evaluated at the kernel's compute precision
    (bf16 matmul operands, f32 accumulation) for validation."""
    f32 = jnp.float32
    rnd = lambda a: a.astype(compute_dtype).astype(f32)
    B, C, H, W = x1.shape
    N = H * W
    x1c, x2c = rnd(x1), rnd(x2)
    wa, wb, wc = rnd(p["lin_wa"]), rnd(p["lin_wb"]), rnd(p["conv_w"])
    t1 = jnp.transpose(x1c, (0, 2, 3, 1)).reshape(B, N, C)
    t2 = jnp.transpose(x2c, (0, 2, 3, 1)).reshape(B, N, C)
    xs = t1 @ wa + t2 @ wb + p["lin_b"]                       # (B, N, C) f32
    lsa = lax.conv_general_dilated(
        rnd(xs).reshape(B, H, W, C), wc, (1, 1), "SAME",
        dimension_numbers=("NHWC", "HWIO", "NHWC")) + p["conv_b"]
    lsa = lsa.reshape(B, N, C)
    pooled = jnp.mean(xs, axis=1, keepdims=True)
    g = jax.nn.sigmoid(jnp.maximum(pooled @ p["se_w1"], 0.0) @ p["se_w2"])
    xf = (lsa + xs * g).reshape(B, H, W, C)
    xf = jnp.transpose(xf, (0, 3, 1, 2))
    return x1c + xf, x2c + xf


# ---------------------------------- params ----------------------------------- #

def init_params(key, dim):
    C = dim
    Cr = max(C // 4, 1)
    ks = jax.random.split(key, 7)
    # nn.Linear(dim*2, dim), kaiming_normal_(fan_in=2C, relu): std = sqrt(2/(2C))
    wt = jax.random.normal(ks[0], (2 * C, C), jnp.float32) * jnp.sqrt(2.0 / (2 * C))
    lin_b = jax.random.uniform(ks[1], (1, C), jnp.float32,
                               -1.0 / jnp.sqrt(2.0 * C), 1.0 / jnp.sqrt(2.0 * C))
    # LSA 3x3 conv, HWIO layout (3, 3, Cin, Cout)
    conv_w = jax.random.normal(ks[2], (3, 3, C, C), jnp.float32) * jnp.sqrt(2.0 / (9 * C))
    conv_b = jax.random.uniform(ks[3], (1, C), jnp.float32, -0.05, 0.05)
    # SE bottleneck FCs (bias-free, classic SE)
    se_w1 = jax.random.normal(ks[4], (C, Cr), jnp.float32) / jnp.sqrt(C)
    se_w2 = jax.random.normal(ks[5], (Cr, C), jnp.float32) / jnp.sqrt(Cr)
    return dict(lin_wa=wt[:C], lin_wb=wt[C:], lin_b=lin_b,
                conv_w=conv_w, conv_b=conv_b, se_w1=se_w1, se_w2=se_w2)


# ----------------------------------- main ------------------------------------ #

if __name__ == "__main__":
    B, C, H, W = 2, 8, 16, 16
    key = jax.random.PRNGKey(0)
    k1, k2, kp = jax.random.split(key, 3)
    x1 = jax.random.normal(k1, (B, C, H, W), jnp.float32)
    x2 = jax.random.normal(k2, (B, C, H, W), jnp.float32)
    params = init_params(kp, C)

    # tile_rows=4 -> grid (B, 4): exercises top / interior / bottom halo tiles.
    o1, o2 = cfm_wogim_forward(x1, x2, params,
                               compute_dtype=jnp.bfloat16, tile_rows=4)
    o1 = jax.block_until_ready(o1)
    o2 = jax.block_until_ready(o2)

    r1, r2 = reference_forward(x1, x2, params, compute_dtype=jnp.bfloat16)
    err = max(float(jnp.max(jnp.abs(o1 - r1))), float(jnp.max(jnp.abs(o2 - r2))))
    assert err < 5e-3, f"mismatch vs reference: {err}"

    print("KERNEL_OK")
</pallas_src>

<mosaic_0001>
module attributes {stable_mosaic.version = 11 : i64} {
  func.func @_cfm_fused_kernel(%arg0: i32, %arg1: i32, %arg2: memref<1x1x16x128xbf16, #tpu.memory_space<vmem>>, %arg3: memref<1x4x16x128xbf16, #tpu.memory_space<vmem>>, %arg4: memref<1x1x16x128xbf16, #tpu.memory_space<vmem>>, %arg5: memref<1x1x16x128xbf16, #tpu.memory_space<vmem>>, %arg6: memref<1x4x16x128xbf16, #tpu.memory_space<vmem>>, %arg7: memref<1x1x16x128xbf16, #tpu.memory_space<vmem>>, %arg8: memref<1x1x128xf32, #tpu.memory_space<vmem>>, %arg9: memref<128x128xbf16, #tpu.memory_space<vmem>>, %arg10: memref<128x128xbf16, #tpu.memory_space<vmem>>, %arg11: memref<1x128xf32, #tpu.memory_space<vmem>>, %arg12: memref<9x128x128xbf16, #tpu.memory_space<vmem>>, %arg13: memref<1x128xf32, #tpu.memory_space<vmem>>, %arg14: memref<1x4x16x128xf32, #tpu.memory_space<vmem>>, %arg15: memref<1x4x16x128xf32, #tpu.memory_space<vmem>>, %arg16: memref<6x18x128xf32, #tpu.memory_space<vmem>>) attributes {dimension_semantics = [#tpu.dimension_semantics<parallel>, #tpu.dimension_semantics<parallel>], iteration_bounds = array<i64: 2, 4>, scalar_prefetch = 0 : i64, scratch_operands = 1 : i64, tpu.core_type = #tpu.core_type<tc>, window_params = [{transform_indices = @transform_0, window_bounds = array<i64: 1, 1, 16, 128>}, {transform_indices = @transform_1, window_bounds = array<i64: 1, 4, 16, 128>}, {transform_indices = @transform_2, window_bounds = array<i64: 1, 1, 16, 128>}, {transform_indices = @transform_3, window_bounds = array<i64: 1, 1, 16, 128>}, {transform_indices = @transform_4, window_bounds = array<i64: 1, 4, 16, 128>}, {transform_indices = @transform_5, window_bounds = array<i64: 1, 1, 16, 128>}, {transform_indices = @transform_6, window_bounds = array<i64: 1, 1, 128>}, {pipeline_mode = #tpu.pipeline_mode<synchronous>, transform_indices = @transform_7, window_bounds = array<i64: 128, 128>}, {pipeline_mode = #tpu.pipeline_mode<synchronous>, transform_indices = @transform_8, window_bounds = array<i64: 128, 128>}, {pipeline_mode = #tpu.pipeline_mode<synchronous>, transform_indices = @transform_9, window_bounds = array<i64: 1, 128>}, {pipeline_mode = #tpu.pipeline_mode<synchronous>, transform_indices = @transform_10, window_bounds = array<i64: 9, 128, 128>}, {pipeline_mode = #tpu.pipeline_mode<synchronous>, transform_indices = @transform_11, window_bounds = array<i64: 1, 128>}, {transform_indices = @transform_12, window_bounds = array<i64: 1, 4, 16, 128>}, {transform_indices = @transform_13, window_bounds = array<i64: 1, 4, 16, 128>}]} {
    %c0 = arith.constant 0 : index
    %c0_0 = arith.constant 0 : index
    %0 = vector.load %arg9[%c0, %c0_0] : memref<128x128xbf16, #tpu.memory_space<vmem>>, vector<128x128xbf16>
    %c0_1 = arith.constant 0 : index
    %c0_2 = arith.constant 0 : index
    %1 = vector.load %arg10[%c0_1, %c0_2] : memref<128x128xbf16, #tpu.memory_space<vmem>>, vector<128x128xbf16>
    %c0_3 = arith.constant 0 : index
    %c0_4 = arith.constant 0 : index
    %2 = vector.load %arg11[%c0_3, %c0_4] : memref<1x128xf32, #tpu.memory_space<vmem>>, vector<1x128xf32>
    %c0_5 = arith.constant 0 : index
    %c0_6 = arith.constant 0 : index
    %c0_7 = arith.constant 0 : index
    %c0_8 = arith.constant 0 : index
    %3 = vector.load %arg3[%c0_5, %c0_6, %c0_7, %c0_8] : memref<1x4x16x128xbf16, #tpu.memory_space<vmem>>, vector<1x4x16x128xbf16>
    %4 = vector.shape_cast %3 : vector<1x4x16x128xbf16> to vector<64x128xbf16>
    %c0_9 = arith.constant 0 : index
    %c0_10 = arith.constant 0 : index
    %c0_11 = arith.constant 0 : index
    %c0_12 = arith.constant 0 : index
    %5 = vector.load %arg6[%c0_9, %c0_10, %c0_11, %c0_12] : memref<1x4x16x128xbf16, #tpu.memory_space<vmem>>, vector<1x4x16x128xbf16>
    %6 = vector.shape_cast %5 : vector<1x4x16x128xbf16> to vector<64x128xbf16>
    %cst = arith.constant dense<0.000000e+00> : vector<64x128xf32>
    %7 = tpu.matmul %4, %0, %cst {dimension_numbers = #tpu.dot_dimension_numbers<[1], [0], [0], [1], [0, 0, 1, 1], [], []>} : vector<64x128xbf16>, vector<128x128xbf16>, vector<64x128xf32> -> vector<64x128xf32>
    %cst_13 = arith.constant dense<0.000000e+00> : vector<64x128xf32>
    %8 = tpu.matmul %6, %1, %cst_13 {dimension_numbers = #tpu.dot_dimension_numbers<[1], [0], [0], [1], [0, 0, 1, 1], [], []>} : vector<64x128xbf16>, vector<128x128xbf16>, vector<64x128xf32> -> vector<64x128xf32>
    %9 = arith.addf %7, %8 : vector<64x128xf32>
    %10 = vector.broadcast %2 : vector<1x128xf32> to vector<64x128xf32>
    %11 = arith.addf %9, %10 : vector<64x128xf32>
    %c0_14 = arith.constant 0 : index
    %c0_15 = arith.constant 0 : index
    %c0_16 = arith.constant 0 : index
    %c0_17 = arith.constant 0 : index
    %12 = vector.load %arg2[%c0_14, %c0_15, %c0_16, %c0_17] : memref<1x1x16x128xbf16, #tpu.memory_space<vmem>>, vector<1x1x16x128xbf16>
    %13 = vector.shape_cast %12 : vector<1x1x16x128xbf16> to vector<16x128xbf16>
    %c0_18 = arith.constant 0 : index
    %c0_19 = arith.constant 0 : index
    %c0_20 = arith.constant 0 : index
    %c0_21 = arith.constant 0 : index
    %14 = vector.load %arg5[%c0_18, %c0_19, %c0_20, %c0_21] : memref<1x1x16x128xbf16, #tpu.memory_space<vmem>>, vector<1x1x16x128xbf16>
    %15 = vector.shape_cast %14 : vector<1x1x16x128xbf16> to vector<16x128xbf16>
    %cst_22 = arith.constant dense<0.000000e+00> : vector<16x128xf32>
    %16 = tpu.matmul %13, %0, %cst_22 {dimension_numbers = #tpu.dot_dimension_numbers<[1], [0], [0], [1], [0, 0, 1, 1], [], []>} : vector<16x128xbf16>, vector<128x128xbf16>, vector<16x128xf32> -> vector<16x128xf32>
    %cst_23 = arith.constant dense<0.000000e+00> : vector<16x128xf32>
    %17 = tpu.matmul %15, %1, %cst_23 {dimension_numbers = #tpu.dot_dimension_numbers<[1], [0], [0], [1], [0, 0, 1, 1], [], []>} : vector<16x128xbf16>, vector<128x128xbf16>, vector<16x128xf32> -> vector<16x128xf32>
    %18 = arith.addf %16, %17 : vector<16x128xf32>
    %19 = vector.broadcast %2 : vector<1x128xf32> to vector<16x128xf32>
    %20 = arith.addf %18, %19 : vector<16x128xf32>
    %c0_i32 = arith.constant 0 : i32
    %21 = arith.cmpi sgt, %arg1, %c0_i32 : i32
    %cst_24 = arith.constant 1.000000e+00 : f32
    %cst_25 = arith.constant 0.000000e+00 : f32
    %22 = arith.select %21, %cst_24, %cst_25 : f32
    %23 = vector.broadcast %22 : f32 to vector<16x128xf32>
    %24 = arith.mulf %20, %23 : vector<16x128xf32>
    %c0_26 = arith.constant 0 : index
    %c0_27 = arith.constant 0 : index
    %c0_28 = arith.constant 0 : index
    %c0_29 = arith.constant 0 : index
    %25 = vector.load %arg4[%c0_26, %c0_27, %c0_28, %c0_29] : memref<1x1x16x128xbf16, #tpu.memory_space<vmem>>, vector<1x1x16x128xbf16>
    %26 = vector.shape_cast %25 : vector<1x1x16x128xbf16> to vector<16x128xbf16>
    %c0_30 = arith.constant 0 : index
    %c0_31 = arith.constant 0 : index
    %c0_32 = arith.constant 0 : index
    %c0_33 = arith.constant 0 : index
    %27 = vector.load %arg7[%c0_30, %c0_31, %c0_32, %c0_33] : memref<1x1x16x128xbf16, #tpu.memory_space<vmem>>, vector<1x1x16x128xbf16>
    %28 = vector.shape_cast %27 : vector<1x1x16x128xbf16> to vector<16x128xbf16>
    %cst_34 = arith.constant dense<0.000000e+00> : vector<16x128xf32>
    %29 = tpu.matmul %26, %0, %cst_34 {dimension_numbers = #tpu.dot_dimension_numbers<[1], [0], [0], [1], [0, 0, 1, 1], [], []>} : vector<16x128xbf16>, vector<128x128xbf16>, vector<16x128xf32> -> vector<16x128xf32>
    %cst_35 = arith.constant dense<0.000000e+00> : vector<16x128xf32>
    %30 = tpu.matmul %28, %1, %cst_35 {dimension_numbers = #tpu.dot_dimension_numbers<[1], [0], [0], [1], [0, 0, 1, 1], [], []>} : vector<16x128xbf16>, vector<128x128xbf16>, vector<16x128xf32> -> vector<16x128xf32>
    %31 = arith.addf %29, %30 : vector<16x128xf32>
    %32 = vector.broadcast %2 : vector<1x128xf32> to vector<16x128xf32>
    %33 = arith.addf %31, %32 : vector<16x128xf32>
    %c3_i32 = arith.constant 3 : i32
    %34 = arith.cmpi slt, %arg1, %c3_i32 : i32
    %cst_36 = arith.constant 1.000000e+00 : f32
    %cst_37 = arith.constant 0.000000e+00 : f32
    %35 = arith.select %34, %cst_36, %cst_37 : f32
    %36 = vector.broadcast %35 : f32 to vector<16x128xf32>
    %37 = arith.mulf %33, %36 : vector<16x128xf32>
    %cst_38 = arith.constant 0.000000e+00 : f32
    %38 = vector.broadcast %cst_38 : f32 to vector<6x18x128xf32>
    %c0_39 = arith.constant 0 : index
    %c0_40 = arith.constant 0 : index
    %c0_41 = arith.constant 0 : index
    %39 = vector.load %arg16[%c0_39, %c0_40, %c0_41] : memref<6x18x128xf32, #tpu.memory_space<vmem>>, vector<6x18x128xf32>
    tpu.vector_store %arg16[%c0_39, %c0_40, %c0_41], %38 {strides = array<i32>} : memref<6x18x128xf32, #tpu.memory_space<vmem>>, vector<6x18x128xf32>,
    %40 = vector.shape_cast %11 : vector<64x128xf32> to vector<4x16x128xf32>
    %c1 = arith.constant 1 : index
    %c1_42 = arith.constant 1 : index
    %c0_43 = arith.constant 0 : index
    %41 = vector.load %arg16[%c1, %c1_42, %c0_43] : memref<6x18x128xf32, #tpu.memory_space<vmem>>, vector<4x16x128xf32>
    tpu.vector_store %arg16[%c1, %c1_42, %c0_43], %40 {strides = array<i32>} : memref<6x18x128xf32, #tpu.memory_space<vmem>>, vector<4x16x128xf32>,
    %42 = vector.shape_cast %24 : vector<16x128xf32> to vector<1x16x128xf32>
    %c0_44 = arith.constant 0 : index
    %c1_45 = arith.constant 1 : index
    %c0_46 = arith.constant 0 : index
    %43 = vector.load %arg16[%c0_44, %c1_45, %c0_46] : memref<6x18x128xf32, #tpu.memory_space<vmem>>, vector<1x16x128xf32>
    tpu.vector_store %arg16[%c0_44, %c1_45, %c0_46], %42 {strides = array<i32>} : memref<6x18x128xf32, #tpu.memory_space<vmem>>, vector<1x16x128xf32>,
    %44 = vector.shape_cast %37 : vector<16x128xf32> to vector<1x16x128xf32>
    %c5 = arith.constant 5 : index
    %c1_47 = arith.constant 1 : index
    %c0_48 = arith.constant 0 : index
    %45 = vector.load %arg16[%c5, %c1_47, %c0_48] : memref<6x18x128xf32, #tpu.memory_space<vmem>>, vector<1x16x128xf32>
    tpu.vector_store %arg16[%c5, %c1_47, %c0_48], %44 {strides = array<i32>} : memref<6x18x128xf32, #tpu.memory_space<vmem>>, vector<1x16x128xf32>,
    %cst_49 = arith.constant 0.000000e+00 : f32
    %46 = vector.broadcast %cst_49 : f32 to vector<64x128xf32>
    %c0_50 = arith.constant 0 : index
    %c0_51 = arith.constant 0 : index
    %c0_52 = arith.constant 0 : index
    %47 = vector.load %arg16[%c0_50, %c0_51, %c0_52] : memref<6x18x128xf32, #tpu.memory_space<vmem>>, vector<4x16x128xf32>
    %48 = vector.shape_cast %47 : vector<4x16x128xf32> to vector<64x128xf32>
    %49 = arith.truncf %48 : vector<64x128xf32> to vector<64x128xbf16>
    %c0_53 = arith.constant 0 : index
    %c0_54 = arith.constant 0 : index
    %c0_55 = arith.constant 0 : index
    %50 = vector.load %arg12[%c0_53, %c0_54, %c0_55] : memref<9x128x128xbf16, #tpu.memory_space<vmem>>, vector<1x128x128xbf16>
    %51 = vector.shape_cast %50 : vector<1x128x128xbf16> to vector<128x128xbf16>
    %cst_56 = arith.constant dense<0.000000e+00> : vector<64x128xf32>
    %52 = tpu.matmul %49, %51, %cst_56 {dimension_numbers = #tpu.dot_dimension_numbers<[1], [0], [0], [1], [0, 0, 1, 1], [], []>} : vector<64x128xbf16>, vector<128x128xbf16>, vector<64x128xf32> -> vector<64x128xf32>
    %53 = arith.addf %46, %52 : vector<64x128xf32>
    %c0_57 = arith.constant 0 : index
    %c1_58 = arith.constant 1 : index
    %c0_59 = arith.constant 0 : index
    %54 = vector.load %arg16[%c0_57, %c1_58, %c0_59] : memref<6x18x128xf32, #tpu.memory_space<vmem>>, vector<4x16x128xf32>
    %55 = vector.shape_cast %54 : vector<4x16x128xf32> to vector<64x128xf32>
    %56 = arith.truncf %55 : vector<64x128xf32> to vector<64x128xbf16>
    %c1_60 = arith.constant 1 : index
    %c0_61 = arith.constant 0 : index
    %c0_62 = arith.constant 0 : index
    %57 = vector.load %arg12[%c1_60, %c0_61, %c0_62] : memref<9x128x128xbf16, #tpu.memory_space<vmem>>, vector<1x128x128xbf16>
    %58 = vector.shape_cast %57 : vector<1x128x128xbf16> to vector<128x128xbf16>
    %cst_63 = arith.constant dense<0.000000e+00> : vector<64x128xf32>
    %59 = tpu.matmul %56, %58, %cst_63 {dimension_numbers = #tpu.dot_dimension_numbers<[1], [0], [0], [1], [0, 0, 1, 1], [], []>} : vector<64x128xbf16>, vector<128x128xbf16>, vector<64x128xf32> -> vector<64x128xf32>
    %60 = arith.addf %53, %59 : vector<64x128xf32>
    %c0_64 = arith.constant 0 : index
    %c2 = arith.constant 2 : index
    %c0_65 = arith.constant 0 : index
    %61 = vector.load %arg16[%c0_64, %c2, %c0_65] : memref<6x18x128xf32, #tpu.memory_space<vmem>>, vector<4x16x128xf32>
    %62 = vector.shape_cast %61 : vector<4x16x128xf32> to vector<64x128xf32>
    %63 = arith.truncf %62 : vector<64x128xf32> to vector<64x128xbf16>
    %c2_66 = arith.constant 2 : index
    %c0_67 = arith.constant 0 : index
    %c0_68 = arith.constant 0 : index
    %64 = vector.load %arg12[%c2_66, %c0_67, %c0_68] : memref<9x128x128xbf16, #tpu.memory_space<vmem>>, vector<1x128x128xbf16>
    %65 = vector.shape_cast %64 : vector<1x128x128xbf16> to vector<128x128xbf16>
    %cst_69 = arith.constant dense<0.000000e+00> : vector<64x128xf32>
    %66 = tpu.matmul %63, %65, %cst_69 {dimension_numbers = #tpu.dot_dimension_numbers<[1], [0], [0], [1], [0, 0, 1, 1], [], []>} : vector<64x128xbf16>, vector<128x128xbf16>, vector<64x128xf32> -> vector<64x128xf32>
    %67 = arith.addf %60, %66 : vector<64x128xf32>
    %c1_70 = arith.constant 1 : index
    %c0_71 = arith.constant 0 : index
    %c0_72 = arith.constant 0 : index
    %68 = vector.load %arg16[%c1_70, %c0_71, %c0_72] : memref<6x18x128xf32, #tpu.memory_space<vmem>>, vector<4x16x128xf32>
    %69 = vector.shape_cast %68 : vector<4x16x128xf32> to vector<64x128xf32>
    %70 = arith.truncf %69 : vector<64x128xf32> to vector<64x128xbf16>
    %c3 = arith.constant 3 : index
    %c0_73 = arith.constant 0 : index
    %c0_74 = arith.constant 0 : index
    %71 = vector.load %arg12[%c3, %c0_73, %c0_74] : memref<9x128x128xbf16, #tpu.memory_space<vmem>>, vector<1x128x128xbf16>
    %72 = vector.shape_cast %71 : vector<1x128x128xbf16> to vector<128x128xbf16>
    %cst_75 = arith.constant dense<0.000000e+00> : vector<64x128xf32>
    %73 = tpu.matmul %70, %72, %cst_75 {dimension_numbers = #tpu.dot_dimension_numbers<[1], [0], [0], [1], [0, 0, 1, 1], [], []>} : vector<64x128xbf16>, vector<128x128xbf16>, vector<64x128xf32> -> vector<64x128xf32>
    %74 = arith.addf %67, %73 : vector<64x128xf32>
    %c1_76 = arith.constant 1 : index
    %c1_77 = arith.constant 1 : index
    %c0_78 = arith.constant 0 : index
    %75 = vector.load %arg16[%c1_76, %c1_77, %c0_78] : memref<6x18x128xf32, #tpu.memory_space<vmem>>, vector<4x16x128xf32>
    %76 = vector.shape_cast %75 : vector<4x16x128xf32> to vector<64x128xf32>
    %77 = arith.truncf %76 : vector<64x128xf32> to vector<64x128xbf16>
    %c4 = arith.constant 4 : index
    %c0_79 = arith.constant 0 : index
    %c0_80 = arith.constant 0 : index
    %78 = vector.load %arg12[%c4, %c0_79, %c0_80] : memref<9x128x128xbf16, #tpu.memory_space<vmem>>, vector<1x128x128xbf16>
    %79 = vector.shape_cast %78 : vector<1x128x128xbf16> to vector<128x128xbf16>
    %cst_81 = arith.constant dense<0.000000e+00> : vector<64x128xf32>
    %80 = tpu.matmul %77, %79, %cst_81 {dimension_numbers = #tpu.dot_dimension_numbers<[1], [0], [0], [1], [0, 0, 1, 1], [], []>} : vector<64x128xbf16>, vector<128x128xbf16>, vector<64x128xf32> -> vector<64x128xf32>
    %81 = arith.addf %74, %80 : vector<64x128xf32>
    %c1_82 = arith.constant 1 : index
    %c2_83 = arith.constant 2 : index
    %c0_84 = arith.constant 0 : index
    %82 = vector.load %arg16[%c1_82, %c2_83, %c0_84] : memref<6x18x128xf32, #tpu.memory_space<vmem>>, vector<4x16x128xf32>
    %83 = vector.shape_cast %82 : vector<4x16x128xf32> to vector<64x128xf32>
    %84 = arith.truncf %83 : vector<64x128xf32> to vector<64x128xbf16>
    %c5_85 = arith.constant 5 : index
    %c0_86 = arith.constant 0 : index
    %c0_87 = arith.constant 0 : index
    %85 = vector.load %arg12[%c5_85, %c0_86, %c0_87] : memref<9x128x128xbf16, #tpu.memory_space<vmem>>, vector<1x128x128xbf16>
    %86 = vector.shape_cast %85 : vector<1x128x128xbf16> to vector<128x128xbf16>
    %cst_88 = arith.constant dense<0.000000e+00> : vector<64x128xf32>
    %87 = tpu.matmul %84, %86, %cst_88 {dimension_numbers = #tpu.dot_dimension_numbers<[1], [0], [0], [1], [0, 0, 1, 1], [], []>} : vector<64x128xbf16>, vector<128x128xbf16>, vector<64x128xf32> -> vector<64x128xf32>
    %88 = arith.addf %81, %87 : vector<64x128xf32>
    %c2_89 = arith.constant 2 : index
    %c0_90 = arith.constant 0 : index
    %c0_91 = arith.constant 0 : index
    %89 = vector.load %arg16[%c2_89, %c0_90, %c0_91] : memref<6x18x128xf32, #tpu.memory_space<vmem>>, vector<4x16x128xf32>
    %90 = vector.shape_cast %89 : vector<4x16x128xf32> to vector<64x128xf32>
    %91 = arith.truncf %90 : vector<64x128xf32> to vector<64x128xbf16>
    %c6 = arith.constant 6 : index
    %c0_92 = arith.constant 0 : index
    %c0_93 = arith.constant 0 : index
    %92 = vector.load %arg12[%c6, %c0_92, %c0_93] : memref<9x128x128xbf16, #tpu.memory_space<vmem>>, vector<1x128x128xbf16>
    %93 = vector.shape_cast %92 : vector<1x128x128xbf16> to vector<128x128xbf16>
    %cst_94 = arith.constant dense<0.000000e+00> : vector<64x128xf32>
    %94 = tpu.matmul %91, %93, %cst_94 {dimension_numbers = #tpu.dot_dimension_numbers<[1], [0], [0], [1], [0, 0, 1, 1], [], []>} : vector<64x128xbf16>, vector<128x128xbf16>, vector<64x128xf32> -> vector<64x128xf32>
    %95 = arith.addf %88, %94 : vector<64x128xf32>
    %c2_95 = arith.constant 2 : index
    %c1_96 = arith.constant 1 : index
    %c0_97 = arith.constant 0 : index
    %96 = vector.load %arg16[%c2_95, %c1_96, %c0_97] : memref<6x18x128xf32, #tpu.memory_space<vmem>>, vector<4x16x128xf32>
    %97 = vector.shape_cast %96 : vector<4x16x128xf32> to vector<64x128xf32>
    %98 = arith.truncf %97 : vector<64x128xf32> to vector<64x128xbf16>
    %c7 = arith.constant 7 : index
    %c0_98 = arith.constant 0 : index
    %c0_99 = arith.constant 0 : index
    %99 = vector.load %arg12[%c7, %c0_98, %c0_99] : memref<9x128x128xbf16, #tpu.memory_space<vmem>>, vector<1x128x128xbf16>
    %100 = vector.shape_cast %99 : vector<1x128x128xbf16> to vector<128x128xbf16>
    %cst_100 = arith.constant dense<0.000000e+00> : vector<64x128xf32>
    %101 = tpu.matmul %98, %100, %cst_100 {dimension_numbers = #tpu.dot_dimension_numbers<[1], [0], [0], [1], [0, 0, 1, 1], [], []>} : vector<64x128xbf16>, vector<128x128xbf16>, vector<64x128xf32> -> vector<64x128xf32>
    %102 = arith.addf %95, %101 : vector<64x128xf32>
    %c2_101 = arith.constant 2 : index
    %c2_102 = arith.constant 2 : index
    %c0_103 = arith.constant 0 : index
    %103 = vector.load %arg16[%c2_101, %c2_102, %c0_103] : memref<6x18x128xf32, #tpu.memory_space<vmem>>, vector<4x16x128xf32>
    %104 = vector.shape_cast %103 : vector<4x16x128xf32> to vector<64x128xf32>
    %105 = arith.truncf %104 : vector<64x128xf32> to vector<64x128xbf16>
    %c8 = arith.constant 8 : index
    %c0_104 = arith.constant 0 : index
    %c0_105 = arith.constant 0 : index
    %106 = vector.load %arg12[%c8, %c0_104, %c0_105] : memref<9x128x128xbf16, #tpu.memory_space<vmem>>, vector<1x128x128xbf16>
    %107 = vector.shape_cast %106 : vector<1x128x128xbf16> to vector<128x128xbf16>
    %cst_106 = arith.constant dense<0.000000e+00> : vector<64x128xf32>
    %108 = tpu.matmul %105, %107, %cst_106 {dimension_numbers = #tpu.dot_dimension_numbers<[1], [0], [0], [1], [0, 0, 1, 1], [], []>} : vector<64x128xbf16>, vector<128x128xbf16>, vector<64x128xf32> -> vector<64x128xf32>
    %109 = arith.addf %102, %108 : vector<64x128xf32>
    %c0_107 = arith.constant 0 : index
    %c0_108 = arith.constant 0 : index
    %c0_109 = arith.constant 0 : index
    %110 = vector.load %arg8[%c0_107, %c0_108, %c0_109] : memref<1x1x128xf32, #tpu.memory_space<vmem>>, vector<1x1x128xf32>
    %111 = vector.shape_cast %110 : vector<1x1x128xf32> to vector<1x128xf32>
    %c0_110 = arith.constant 0 : index
    %c0_111 = arith.constant 0 : index
    %112 = vector.load %arg13[%c0_110, %c0_111] : memref<1x128xf32, #tpu.memory_space<vmem>>, vector<1x128xf32>
    %113 = vector.broadcast %112 : vector<1x128xf32> to vector<64x128xf32>
    %114 = arith.addf %109, %113 : vector<64x128xf32>
    %115 = vector.broadcast %111 : vector<1x128xf32> to vector<64x128xf32>
    %116 = arith.mulf %11, %115 : vector<64x128xf32>
    %117 = arith.addf %114, %116 : vector<64x128xf32>
    %118 = arith.extf %4 : vector<64x128xbf16> to vector<64x128xf32>
    %119 = arith.addf %118, %117 : vector<64x128xf32>
    %120 = vector.shape_cast %119 : vector<64x128xf32> to vector<1x4x16x128xf32>
    %c0_112 = arith.constant 0 : index
    %c0_113 = arith.constant 0 : index
    %c0_114 = arith.constant 0 : index
    %c0_115 = arith.constant 0 : index
    %121 = vector.load %arg14[%c0_112, %c0_113, %c0_114, %c0_115] : memref<1x4x16x128xf32, #tpu.memory_space<vmem>>, vector<1x4x16x128xf32>
    tpu.vector_store %arg14[%c0_112, %c0_113, %c0_114, %c0_115], %120 {strides = array<i32>} : memref<1x4x16x128xf32, #tpu.memory_space<vmem>>, vector<1x4x16x128xf32>,
    %122 = arith.extf %6 : vector<64x128xbf16> to vector<64x128xf32>
    %123 = arith.addf %122, %117 : vector<64x128xf32>
    %124 = vector.shape_cast %123 : vector<64x128xf32> to vector<1x4x16x128xf32>
    %c0_116 = arith.constant 0 : index
    %c0_117 = arith.constant 0 : index
    %c0_118 = arith.constant 0 : index
    %c0_119 = arith.constant 0 : index
    %125 = vector.load %arg15[%c0_116, %c0_117, %c0_118, %c0_119] : memref<1x4x16x128xf32, #tpu.memory_space<vmem>>, vector<1x4x16x128xf32>
    tpu.vector_store %arg15[%c0_116, %c0_117, %c0_118, %c0_119], %124 {strides = array<i32>} : memref<1x4x16x128xf32, #tpu.memory_space<vmem>>, vector<1x4x16x128xf32>,
    return
  }
  func.func @transform_0(%arg0: i32, %arg1: i32) -> (i32, i32, i32, i32) {
    %c4_i32 = arith.constant 4 : i32
    %0 = arith.muli %arg1, %c4_i32 : i32
    %c1_i32 = arith.constant 1 : i32
    %1 = arith.subi %0, %c1_i32 : i32
    %c0_i32 = arith.constant 0 : i32
    %2 = arith.maxsi %1, %c0_i32 : i32
    %c0_i32_0 = arith.constant 0 : i32
    %c0_i32_1 = arith.constant 0 : i32
    %c0_i32_2 = arith.constant 0 : i32
    return %arg0, %2, %c0_i32_0, %c0_i32_1 : i32, i32, i32, i32
  }
  func.func @transform_1(%arg0: i32, %arg1: i32) -> (i32, i32, i32, i32) {
    %c0_i32 = arith.constant 0 : i32
    %c0_i32_0 = arith.constant 0 : i32
    %c0_i32_1 = arith.constant 0 : i32
    return %arg0, %arg1, %c0_i32, %c0_i32_0 : i32, i32, i32, i32
  }
  func.func @transform_2(%arg0: i32, %arg1: i32) -> (i32, i32, i32, i32) {
    %c4_i32 = arith.constant 4 : i32
    %0 = arith.muli %arg1, %c4_i32 : i32
    %c4_i32_0 = arith.constant 4 : i32
    %1 = arith.addi %0, %c4_i32_0 : i32
    %c15_i32 = arith.constant 15 : i32
    %2 = arith.minsi %1, %c15_i32 : i32
    %c0_i32 = arith.constant 0 : i32
    %c0_i32_1 = arith.constant 0 : i32
    %c0_i32_2 = arith.constant 0 : i32
    return %arg0, %2, %c0_i32, %c0_i32_1 : i32, i32, i32, i32
  }
  func.func @transform_3(%arg0: i32, %arg1: i32) -> (i32, i32, i32, i32) {
    %c4_i32 = arith.constant 4 : i32
    %0 = arith.muli %arg1, %c4_i32 : i32
    %c1_i32 = arith.constant 1 : i32
    %1 = arith.subi %0, %c1_i32 : i32
    %c0_i32 = arith.constant 0 : i32
    %2 = arith.maxsi %1, %c0_i32 : i32
    %c0_i32_0 = arith.constant 0 : i32
    %c0_i32_1 = arith.constant 0 : i32
    %c0_i32_2 = arith.constant 0 : i32
    return %arg0, %2, %c0_i32_0, %c0_i32_1 : i32, i32, i32, i32
  }
  func.func @transform_4(%arg0: i32, %arg1: i32) -> (i32, i32, i32, i32) {
    %c0_i32 = arith.constant 0 : i32
    %c0_i32_0 = arith.constant 0 : i32
    %c0_i32_1 = arith.constant 0 : i32
    return %arg0, %arg1, %c0_i32, %c0_i32_0 : i32, i32, i32, i32
  }
  func.func @transform_5(%arg0: i32, %arg1: i32) -> (i32, i32, i32, i32) {
    %c4_i32 = arith.constant 4 : i32
    %0 = arith.muli %arg1, %c4_i32 : i32
    %c4_i32_0 = arith.constant 4 : i32
    %1 = arith.addi %0, %c4_i32_0 : i32
    %c15_i32 = arith.constant 15 : i32
    %2 = arith.minsi %1, %c15_i32 : i32
    %c0_i32 = arith.constant 0 : i32
    %c0_i32_1 = arith.constant 0 : i32
    %c0_i32_2 = arith.constant 0 : i32
    return %arg0, %2, %c0_i32, %c0_i32_1 : i32, i32, i32, i32
  }
  func.func @transform_6(%arg0: i32, %arg1: i32) -> (i32, i32, i32) {
    %c0_i32 = arith.constant 0 : i32
    %c0_i32_0 = arith.constant 0 : i32
    %c0_i32_1 = arith.constant 0 : i32
    return %arg0, %c0_i32, %c0_i32_0 : i32, i32, i32
  }
  func.func @transform_7(%arg0: i32, %arg1: i32) -> (i32, i32) {
    %c0_i32 = arith.constant 0 : i32
    %c0_i32_0 = arith.constant 0 : i32
    %c0_i32_1 = arith.constant 0 : i32
    return %c0_i32, %c0_i32_0 : i32, i32
  }
  func.func @transform_8(%arg0: i32, %arg1: i32) -> (i32, i32) {
    %c0_i32 = arith.constant 0 : i32
    %c0_i32_0 = arith.constant 0 : i32
    %c0_i32_1 = arith.constant 0 : i32
    return %c0_i32, %c0_i32_0 : i32, i32
  }
  func.func @transform_9(%arg0: i32, %arg1: i32) -> (i32, i32) {
    %c0_i32 = arith.constant 0 : i32
    %c0_i32_0 = arith.constant 0 : i32
    %c0_i32_1 = arith.constant 0 : i32
    return %c0_i32, %c0_i32_0 : i32, i32
  }
  func.func @transform_10(%arg0: i32, %arg1: i32) -> (i32, i32, i32) {
    %c0_i32 = arith.constant 0 : i32
    %c0_i32_0 = arith.constant 0 : i32
    %c0_i32_1 = arith.constant 0 : i32
    %c0_i32_2 = arith.constant 0 : i32
    return %c0_i32, %c0_i32_0, %c0_i32_1 : i32, i32, i32
  }
  func.func @transform_11(%arg0: i32, %arg1: i32) -> (i32, i32) {
    %c0_i32 = arith.constant 0 : i32
    %c0_i32_0 = arith.constant 0 : i32
    %c0_i32_1 = arith.constant 0 : i32
    return %c0_i32, %c0_i32_0 : i32, i32
  }
  func.func @transform_12(%arg0: i32, %arg1: i32) -> (i32, i32, i32, i32) {
    %c0_i32 = arith.constant 0 : i32
    %c0_i32_0 = arith.constant 0 : i32
    %c0_i32_1 = arith.constant 0 : i32
    return %arg0, %arg1, %c0_i32, %c0_i32_0 : i32, i32, i32, i32
  }
  func.func @transform_13(%arg0: i32, %arg1: i32) -> (i32, i32, i32, i32) {
    %c0_i32 = arith.constant 0 : i32
    %c0_i32_0 = arith.constant 0 : i32
    %c0_i32_1 = arith.constant 0 : i32
    return %arg0, %arg1, %c0_i32, %c0_i32_0 : i32, i32, i32, i32
  }
}

</mosaic_0001>

<llo_original>
// kernel: tpu_custom_call.1
$region0: #{tpu_custom_call.1}
  #allocation0 [shape = 'u32[]', space=smem, size = 0x4, offset = 0x4, fixed_abs, tag = 'smem constant byte address 0x4 - core index']
  #allocation1 [shape = 'u32[144,128]{1,0:T(1,128)}', space=vmem, size = 0x12000, scoped, tag = 'internal scratch']
  #allocation2 [shape = 'f32[6,18,128]{2,1,0:T(8,128)}', space=vmem, size = 0x12000, scoped, tag = 'scratch operand']
  %s0 = inlined_call_operand.hbm [shape: bf16[2,16,16,128], index: 0, kind: input, shape index: {}]
  %s1 = inlined_call_operand.hbm [shape: bf16[2,16,16,128], index: 1, kind: input, shape index: {}]
  %s2 = inlined_call_operand.hbm [shape: bf16[2,16,16,128], index: 2, kind: input, shape index: {}]
  %s3 = inlined_call_operand.hbm [shape: bf16[2,16,16,128], index: 3, kind: input, shape index: {}]
  %s4 = inlined_call_operand.hbm [shape: bf16[2,16,16,128], index: 4, kind: input, shape index: {}]
  %s5 = inlined_call_operand.hbm [shape: bf16[2,16,16,128], index: 5, kind: input, shape index: {}]
  %s6 = inlined_call_operand.vmem [shape: f32[2,1,128], index: 6, kind: input, shape index: {}]
  %s7 = inlined_call_operand.hbm [shape: bf16[128,128], index: 7, kind: input, shape index: {}]
  %s8 = inlined_call_operand.hbm [shape: bf16[128,128], index: 8, kind: input, shape index: {}]
  %s9 = inlined_call_operand.vmem [shape: f32[1,128], index: 9, kind: input, shape index: {}]
  %s10 = inlined_call_operand.hbm [shape: bf16[9,128,128], index: 10, kind: input, shape index: {}]
  %s11 = inlined_call_operand.vmem [shape: f32[1,128], index: 11, kind: input, shape index: {}]
  %s12 = inlined_call_operand.hbm [shape: f32[2,16,16,128], index: 12, kind: output, shape index: {0}]
  %s13 = inlined_call_operand.hbm [shape: f32[2,16,16,128], index: 13, kind: output, shape index: {1}]
  %14 = xla_tuple %s12, %s13
  %s15 = sld [smem:[#allocation0]]
  $region125: #{tpu_custom_call.1} parent=0
    _
  %s17 = ssub.s32 1, %s15
  %s18 = scalar_select 0, %s17, %s15
  $region1: #{tpu_custom_call.1} parent=0
    #allocation3 [shape = 'u8[8192]{0}', space=vmem, size = 0x2000, scoped, tag = 'input window, operand 0']
    #allocation4 [shape = 's32[2]{0}', space=sflag, size = 0x8, scoped, tag = 'scoped memory for tpu_custom_call.1']
    #allocation5 [shape = 's32[2]{0}', space=sflag, size = 0x8, scoped, tag = 'scoped memory for tpu_custom_call.1']
    #allocation6 [shape = 'u8[32768]{0}', space=vmem, size = 0x8000, scoped, tag = 'input window, operand 1']
    #allocation7 [shape = 's32[2]{0}', space=sflag, size = 0x8, scoped, tag = 'scoped memory for tpu_custom_call.1']
    #allocation8 [shape = 'u8[8192]{0}', space=vmem, size = 0x2000, scoped, tag = 'input window, operand 2']
    #allocation9 [shape = 'u8[8192]{0}', space=vmem, size = 0x2000, scoped, tag = 'input window, operand 3']
    #allocation10 [shape = 's32[2]{0}', space=sflag, size = 0x8, scoped, tag = 'scoped memory for tpu_custom_call.1']
    #allocation11 [shape = 'u8[32768]{0}', space=vmem, size = 0x8000, scoped, tag = 'input window, operand 4']
    #allocation12 [shape = 'u8[8192]{0}', space=vmem, size = 0x2000, scoped, tag = 'input window, operand 5']
    #allocation13 [shape = 's32[2]{0}', space=sflag, size = 0x8, scoped, tag = 'scoped memory for tpu_custom_call.1']
    #allocation14 [shape = 'u8[32768]{0}', space=vmem, size = 0x8000, scoped, tag = 'input window, operand 7, single buffered']
    #allocation15 [shape = 'u8[32768]{0}', space=vmem, size = 0x8000, scoped, tag = 'input window, operand 8, single buffered']
    #allocation16 [shape = 's32[1]{0}', space=sflag, size = 0x4, scoped, tag = 'scoped memory for tpu_custom_call.1']
    #allocation17 [shape = 'u8[294912]{0}', space=vmem, size = 0x48000, scoped, tag = 'input window, operand 10, single buffered']
    #allocation18 [shape = 'u8[65536]{0}', space=vmem, size = 0x10000, scoped, tag = 'output window, operand 0']
    #allocation19 [shape = 'u8[65536]{0}', space=vmem, size = 0x10000, scoped, tag = 'output window, operand 1']
    #allocation20 [shape = 's32[2]{0}', space=sflag, size = 0x8, scoped, tag = 'scoped memory for tpu_custom_call.1']
    %19 = vsyncpa [#allocation4], 0
    %s20 = scalar_lea.sflag [#allocation4], 1
    %21 = vsyncpa %s20, 0
    %22 = vsyncpa [#allocation7], 0
    %s23 = scalar_lea.sflag [#allocation7], 1
    %24 = vsyncpa %s23, 0
    %25 = vsyncpa [#allocation10], 0
    %s26 = scalar_lea.sflag [#allocation10], 1
    %27 = vsyncpa %s26, 0
    %28 = vsyncpa [#allocation13], 0
    %s29 = scalar_lea.sflag [#allocation13], 1
    %30 = vsyncpa %s29, 0
    %31 = vsyncpa [#allocation16], 0
    %32 = vsyncpa [#allocation5], 0
    %s33 = scalar_lea.sflag [#allocation5], 1
    %34 = vsyncpa %s33, 0
    %35 = vsyncpa [#allocation20], 0
    %s36 = scalar_lea.sflag [#allocation20], 1
    %37 = vsyncpa %s36, 0
    loop: start=0, step=1, limit=10
    $region2: #{tpu_custom_call.1} parent=1 // loop_pre_header
      _
    $region3: #{tpu_custom_call.1} parent=1 // loop_header
      %s39 = sphi 0, %s43
      %p40 = scmp.ge.s32.totalorder %s39, 10
      %s46 = sphi 0, %s58
      %s47 = sphi 0, %s54
      %s48 = sphi 0, %s46
      %s49 = sphi 0, %s47
      %s50 = sphi 0, %s48
      %s51 = sphi 0, %s49
      %s71 = sphi 0, %s73
      %s74 = sphi 0, %s71
      %s75 = sphi 0, %s74
      %s91 = sphi 0, %s75
      %s99 = sphi 0, %s101
      %s102 = sphi 0, %s99
      %s103 = sphi 0, %s102
      %s119 = sphi 0, %s103
      %s135 = sphi 0, %s137
      %s138 = sphi 0, %s135
      %s139 = sphi 0, %s138
      %s155 = sphi 0, %s139
      %s171 = sphi 0, %s173
      %s174 = sphi 0, %s171
      %s175 = sphi 0, %s174
      %s191 = sphi 0, %s175
      %s199 = sphi 0, %s201
      %s202 = sphi 0, %s199
      %s203 = sphi 0, %s202
      %s219 = sphi 0, %s203
      %s235 = sphi 0, %s237
      %s238 = sphi 0, %s235
      %s239 = sphi 0, %s238
      %s255 = sphi 0, %s239
      %s261 = sphi 0, %s263
      %s264 = sphi 0, %s261
      %s265 = sphi 0, %s264
      %s281 = sphi 0, %s265
      %s285 = sphi 0, %s285
      %s287 = sphi 0, %s285
      %s288 = sphi 0, %s287
      %s302 = sphi 0, %s288
      %s306 = sphi 0, %s306
      %s308 = sphi 0, %s306
      %s309 = sphi 0, %s308
      %s323 = sphi 0, %s309
      %s327 = sphi 0, %s327
      %s329 = sphi 0, %s327
      %s330 = sphi 0, %s329
      %s344 = sphi 0, %s330
      %s348 = sphi 0, %s348
      %s350 = sphi 0, %s348
      %s351 = sphi 0, %s350
      %s365 = sphi 0, %s351
      %s369 = sphi 0, %s369
      %s371 = sphi 0, %s369
      %s372 = sphi 0, %s371
      %s386 = sphi 0, %s372
      %s394 = sphi 0, %s396
      %s397 = sphi 0, %s394
      %s398 = sphi 0, %s397
      %s414 = sphi 0, %s398
      %s422 = sphi 0, %s424
      %s425 = sphi 0, %s422
      %s426 = sphi 0, %s425
      %s442 = sphi 0, %s426
    $region4: #{tpu_custom_call.1} parent=1 // loop_header_branch
      %42 = sbr.rel (%p40) target = $region8
    $region5: #{tpu_custom_call.1} parent=1 // loop_body
      %s44 = ssub.s32 %s39, 1
      %s45 = ssub.s32 %s39, 2
      %s52 = sadd.s32 1, %s47
      %p53 = scmp.ge.s32.totalorder %s52, 4
      %s54 = scalar_select %p53, 0, %s52
      %s55 = sadd.s32 1, %s46
      %s56 = scalar_select %p53, %s55, %s46
      %p57 = scmp.ge.s32.totalorder %s56, 2
      %s58 = scalar_select %p57, 0, %s56
      %s59 = smul.u32 %s47, 4
      %s60 = ssub.s32 %s59, 1
      %p61 = scmp.gt.s32.totalorder %s60, 0
      %s62 = scalar_select %p61, %s60, 0
      %s63 = smul.u32 %s54, 4
      %s64 = ssub.s32 %s63, 1
      %p65 = scmp.gt.s32.totalorder %s64, 0
      %s66 = scalar_select %p65, %s64, 0
      %s67 = ssub.s32 %s46, %s58
      %s68 = ssub.s32 %s62, %s66
      %s69 = sor.u32 %s67, %s68
      %p70 = scmp.eq.s32.totalorder %s69, 0
      %s72 = sadd.s32 %s71, 1
      %s73 = scalar_select %p70, %s71, %s72
      %p76 = pneg %p70
      %p77 = scmp.eq.s32.totalorder %s39, 7
      %p78 = por %p76, %p77
      %p79 = scmp.ne.s32.totalorder %s71, %s74
      %p80 = scmp.eq.s32.totalorder %s39, 0
      %p81 = por %p79, %p80
      %p82 = scmp.ne.s32.totalorder %s71, %s74
      %p83 = scmp.eq.s32.totalorder %s44, 7
      %p84 = por %p82, %p83
      %p85 = scmp.ne.s32.totalorder %s74, %s75
      %p86 = scmp.eq.s32.totalorder %s44, 0
      %p87 = por %p85, %p86
      %p88 = scmp.ne.s32.totalorder %s74, %s75
      %p89 = scmp.eq.s32.totalorder %s45, 7
      %p90 = por %p88, %p89
      %p92 = scmp.ne.s32.totalorder %s75, %s91
      %p93 = scmp.eq.s32.totalorder %s45, 0
      %p94 = por %p92, %p93
      %s95 = ssub.s32 %s46, %s58
      %s96 = ssub.s32 %s47, %s54
      %s97 = sor.u32 %s95, %s96
      %p98 = scmp.eq.s32.totalorder %s97, 0
      %s100 = sadd.s32 %s99, 1
      %s101 = scalar_select %p98, %s99, %s100
      %p104 = pneg %p98
      %p105 = scmp.eq.s32.totalorder %s39, 7
      %p106 = por %p104, %p105
      %p107 = scmp.ne.s32.totalorder %s99, %s102
      %p108 = scmp.eq.s32.totalorder %s39, 0
      %p109 = por %p107, %p108
      %p110 = scmp.ne.s32.totalorder %s99, %s102
      %p111 = scmp.eq.s32.totalorder %s44, 7
      %p112 = por %p110, %p111
      %p113 = scmp.ne.s32.totalorder %s102, %s103
      %p114 = scmp.eq.s32.totalorder %s44, 0
      %p115 = por %p113, %p114
      %p116 = scmp.ne.s32.totalorder %s102, %s103
      %p117 = scmp.eq.s32.totalorder %s45, 7
      %p118 = por %p116, %p117
      %p120 = scmp.ne.s32.totalorder %s103, %s119
      %p121 = scmp.eq.s32.totalorder %s45, 0
      %p122 = por %p120, %p121
      %s123 = smul.u32 %s47, 4
      %s124 = sadd.s32 %s123, 4
      %p125 = scmp.lt.s32.totalorder %s124, 15
      %s126 = scalar_select %p125, %s124, 15
      %s127 = smul.u32 %s54, 4
      %s128 = sadd.s32 %s127, 4
      %p129 = scmp.lt.s32.totalorder %s128, 15
      %s130 = scalar_select %p129, %s128, 15
      %s131 = ssub.s32 %s46, %s58
      %s132 = ssub.s32 %s126, %s130
      %s133 = sor.u32 %s131, %s132
      %p134 = scmp.eq.s32.totalorder %s133, 0
      %s136 = sadd.s32 %s135, 1
      %s137 = scalar_select %p134, %s135, %s136
      %p140 = pneg %p134
      %p141 = scmp.eq.s32.totalorder %s39, 7
      %p142 = por %p140, %p141
      %p143 = scmp.ne.s32.totalorder %s135, %s138
      %p144 = scmp.eq.s32.totalorder %s39, 0
      %p145 = por %p143, %p144
      %p146 = scmp.ne.s32.totalorder %s135, %s138
      %p147 = scmp.eq.s32.totalorder %s44, 7
      %p148 = por %p146, %p147
      %p149 = scmp.ne.s32.totalorder %s138, %s139
      %p150 = scmp.eq.s32.totalorder %s44, 0
      %p151 = por %p149, %p150
      %p152 = scmp.ne.s32.totalorder %s138, %s139
      %p153 = scmp.eq.s32.totalorder %s45, 7
      %p154 = por %p152, %p153
      %p156 = scmp.ne.s32.totalorder %s139, %s155
      %p157 = scmp.eq.s32.totalorder %s45, 0
      %p158 = por %p156, %p157
      %s159 = smul.u32 %s47, 4
      %s160 = ssub.s32 %s159, 1
      %p161 = scmp.gt.s32.totalorder %s160, 0
      %s162 = scalar_select %p161, %s160, 0
      %s163 = smul.u32 %s54, 4
      %s164 = ssub.s32 %s163, 1
      %p165 = scmp.gt.s32.totalorder %s164, 0
      %s166 = scalar_select %p165, %s164, 0
      %s167 = ssub.s32 %s46, %s58
      %s168 = ssub.s32 %s162, %s166
      %s169 = sor.u32 %s167, %s168
      %p170 = scmp.eq.s32.totalorder %s169, 0
      %s172 = sadd.s32 %s171, 1
      %s173 = scalar_select %p170, %s171, %s172
      %p176 = pneg %p170
      %p177 = scmp.eq.s32.totalorder %s39, 7
      %p178 = por %p176, %p177
      %p179 = scmp.ne.s32.totalorder %s171, %s174
      %p180 = scmp.eq.s32.totalorder %s39, 0
      %p181 = por %p179, %p180
      %p182 = scmp.ne.s32.totalorder %s171, %s174
      %p183 = scmp.eq.s32.totalorder %s44, 7
      %p184 = por %p182, %p183
      %p185 = scmp.ne.s32.totalorder %s174, %s175
      %p186 = scmp.eq.s32.totalorder %s44, 0
      %p187 = por %p185, %p186
      %p188 = scmp.ne.s32.totalorder %s174, %s175
      %p189 = scmp.eq.s32.totalorder %s45, 7
      %p190 = por %p188, %p189
      %p192 = scmp.ne.s32.totalorder %s175, %s191
      %p193 = scmp.eq.s32.totalorder %s45, 0
      %p194 = por %p192, %p193
      %s195 = ssub.s32 %s46, %s58
      %s196 = ssub.s32 %s47, %s54
      %s197 = sor.u32 %s195, %s196
      %p198 = scmp.eq.s32.totalorder %s197, 0
      %s200 = sadd.s32 %s199, 1
      %s201 = scalar_select %p198, %s199, %s200
      %p204 = pneg %p198
      %p205 = scmp.eq.s32.totalorder %s39, 7
      %p206 = por %p204, %p205
      %p207 = scmp.ne.s32.totalorder %s199, %s202
      %p208 = scmp.eq.s32.totalorder %s39, 0
      %p209 = por %p207, %p208
      %p210 = scmp.ne.s32.totalorder %s199, %s202
      %p211 = scmp.eq.s32.totalorder %s44, 7
      %p212 = por %p210, %p211
      %p213 = scmp.ne.s32.totalorder %s202, %s203
      %p214 = scmp.eq.s32.totalorder %s44, 0
      %p215 = por %p213, %p214
      %p216 = scmp.ne.s32.totalorder %s202, %s203
      %p217 = scmp.eq.s32.totalorder %s45, 7
      %p218 = por %p216, %p217
      %p220 = scmp.ne.s32.totalorder %s203, %s219
      %p221 = scmp.eq.s32.totalorder %s45, 0
      %p222 = por %p220, %p221
      %s223 = smul.u32 %s47, 4
      %s224 = sadd.s32 %s223, 4
      %p225 = scmp.lt.s32.totalorder %s224, 15
      %s226 = scalar_select %p225, %s224, 15
      %s227 = smul.u32 %s54, 4
      %s228 = sadd.s32 %s227, 4
      %p229 = scmp.lt.s32.totalorder %s228, 15
      %s230 = scalar_select %p229, %s228, 15
      %s231 = ssub.s32 %s46, %s58
      %s232 = ssub.s32 %s226, %s230
      %s233 = sor.u32 %s231, %s232
      %p234 = scmp.eq.s32.totalorder %s233, 0
      %s236 = sadd.s32 %s235, 1
      %s237 = scalar_select %p234, %s235, %s236
      %p240 = pneg %p234
      %p241 = scmp.eq.s32.totalorder %s39, 7
      %p242 = por %p240, %p241
      %p243 = scmp.ne.s32.totalorder %s235, %s238
      %p244 = scmp.eq.s32.totalorder %s39, 0
      %p245 = por %p243, %p244
      %p246 = scmp.ne.s32.totalorder %s235, %s238
      %p247 = scmp.eq.s32.totalorder %s44, 7
      %p248 = por %p246, %p247
      %p249 = scmp.ne.s32.totalorder %s238, %s239
      %p250 = scmp.eq.s32.totalorder %s44, 0
      %p251 = por %p249, %p250
      %p252 = scmp.ne.s32.totalorder %s238, %s239
      %p253 = scmp.eq.s32.totalorder %s45, 7
      %p254 = por %p252, %p253
      %p256 = scmp.ne.s32.totalorder %s239, %s255
      %p257 = scmp.eq.s32.totalorder %s45, 0
      %p258 = por %p256, %p257
      %s259 = ssub.s32 %s46, %s58
      %p260 = scmp.eq.s32.totalorder %s259, 0
      %s262 = sadd.s32 %s261, 1
      %s263 = scalar_select %p260, %s261, %s262
      %p266 = pneg %p260
      %p267 = scmp.eq.s32.totalorder %s39, 7
      %p268 = por %p266, %p267
      %p269 = scmp.ne.s32.totalorder %s261, %s264
      %p270 = scmp.eq.s32.totalorder %s39, 0
      %p271 = por %p269, %p270
      %p272 = scmp.ne.s32.totalorder %s261, %s264
      %p273 = scmp.eq.s32.totalorder %s44, 7
      %p274 = por %p272, %p273
      %p275 = scmp.ne.s32.totalorder %s264, %s265
      %p276 = scmp.eq.s32.totalorder %s44, 0
      %p277 = por %p275, %p276
      %p278 = scmp.ne.s32.totalorder %s264, %s265
      %p279 = scmp.eq.s32.totalorder %s45, 7
      %p280 = por %p278, %p279
      %p282 = scmp.ne.s32.totalorder %s265, %s281
      %p283 = scmp.eq.s32.totalorder %s45, 0
      %p284 = por %p282, %p283
      %s286 = sadd.s32 %s285, 1
      %p289 = scmp.eq.s32.totalorder %s39, 7
      %p290 = scmp.ne.s32.totalorder %s285, %s287
      %p291 = scmp.eq.s32.totalorder %s39, 0
      %p292 = por %p290, %p291
      %p293 = scmp.ne.s32.totalorder %s285, %s287
      %p294 = scmp.eq.s32.totalorder %s44, 7
      %p295 = por %p293, %p294
      %p296 = scmp.ne.s32.totalorder %s287, %s288
      %p297 = scmp.eq.s32.totalorder %s44, 0
      %p298 = por %p296, %p297
      %p299 = scmp.ne.s32.totalorder %s287, %s288
      %p300 = scmp.eq.s32.totalorder %s45, 7
      %p301 = por %p299, %p300
      %p303 = scmp.ne.s32.totalorder %s288, %s302
      %p304 = scmp.eq.s32.totalorder %s45, 0
      %p305 = por %p303, %p304
      %s307 = sadd.s32 %s306, 1
      %p310 = scmp.eq.s32.totalorder %s39, 7
      %p311 = scmp.ne.s32.totalorder %s306, %s308
      %p312 = scmp.eq.s32.totalorder %s39, 0
      %p313 = por %p311, %p312
      %p314 = scmp.ne.s32.totalorder %s306, %s308
      %p315 = scmp.eq.s32.totalorder %s44, 7
      %p316 = por %p314, %p315
      %p317 = scmp.ne.s32.totalorder %s308, %s309
      %p318 = scmp.eq.s32.totalorder %s44, 0
      %p319 = por %p317, %p318
      %p320 = scmp.ne.s32.totalorder %s308, %s309
      %p321 = scmp.eq.s32.totalorder %s45, 7
      %p322 = por %p320, %p321
      %p324 = scmp.ne.s32.totalorder %s309, %s323
      %p325 = scmp.eq.s32.totalorder %s45, 0
      %p326 = por %p324, %p325
      %s328 = sadd.s32 %s327, 1
      %p331 = scmp.eq.s32.totalorder %s39, 7
      %p332 = scmp.ne.s32.totalorder %s327, %s329
      %p333 = scmp.eq.s32.totalorder %s39, 0
      %p334 = por %p332, %p333
      %p335 = scmp.ne.s32.totalorder %s327, %s329
      %p336 = scmp.eq.s32.totalorder %s44, 7
      %p337 = por %p335, %p336
      %p338 = scmp.ne.s32.totalorder %s329, %s330
      %p339 = scmp.eq.s32.totalorder %s44, 0
      %p340 = por %p338, %p339
      %p341 = scmp.ne.s32.totalorder %s329, %s330
      %p342 = scmp.eq.s32.totalorder %s45, 7
      %p343 = por %p341, %p342
      %p345 = scmp.ne.s32.totalorder %s330, %s344
      %p346 = scmp.eq.s32.totalorder %s45, 0
      %p347 = por %p345, %p346
      %s349 = sadd.s32 %s348, 1
      %p352 = scmp.eq.s32.totalorder %s39, 7
      %p353 = scmp.ne.s32.totalorder %s348, %s350
      %p354 = scmp.eq.s32.totalorder %s39, 0
      %p355 = por %p353, %p354
      %p356 = scmp.ne.s32.totalorder %s348, %s350
      %p357 = scmp.eq.s32.totalorder %s44, 7
      %p358 = por %p356, %p357
      %p359 = scmp.ne.s32.totalorder %s350, %s351
      %p360 = scmp.eq.s32.totalorder %s44, 0
      %p361 = por %p359, %p360
      %p362 = scmp.ne.s32.totalorder %s350, %s351
      %p363 = scmp.eq.s32.totalorder %s45, 7
      %p364 = por %p362, %p363
      %p366 = scmp.ne.s32.totalorder %s351, %s365
      %p367 = scmp.eq.s32.totalorder %s45, 0
      %p368 = por %p366, %p367
      %s370 = sadd.s32 %s369, 1
      %p373 = scmp.eq.s32.totalorder %s39, 7
      %p374 = scmp.ne.s32.totalorder %s369, %s371
      %p375 = scmp.eq.s32.totalorder %s39, 0
      %p376 = por %p374, %p375
      %p377 = scmp.ne.s32.totalorder %s369, %s371
      %p378 = scmp.eq.s32.totalorder %s44, 7
      %p379 = por %p377, %p378
      %p380 = scmp.ne.s32.totalorder %s371, %s372
      %p381 = scmp.eq.s32.totalorder %s44, 0
      %p382 = por %p380, %p381
      %p383 = scmp.ne.s32.totalorder %s371, %s372
      %p384 = scmp.eq.s32.totalorder %s45, 7
      %p385 = por %p383, %p384
      %p387 = scmp.ne.s32.totalorder %s372, %s386
      %p388 = scmp.eq.s32.totalorder %s45, 0
      %p389 = por %p387, %p388
      %s390 = ssub.s32 %s46, %s58
      %s391 = ssub.s32 %s47, %s54
      %s392 = sor.u32 %s390, %s391
      %p393 = scmp.eq.s32.totalorder %s392, 0
      %s395 = sadd.s32 %s394, 1
      %s396 = scalar_select %p393, %s394, %s395
      %p399 = pneg %p393
      %p400 = scmp.eq.s32.totalorder %s39, 7
      %p401 = por %p399, %p400
      %p402 = scmp.ne.s32.totalorder %s394, %s397
      %p403 = scmp.eq.s32.totalorder %s39, 0
      %p404 = por %p402, %p403
      %p405 = scmp.ne.s32.totalorder %s394, %s397
      %p406 = scmp.eq.s32.totalorder %s44, 7
      %p407 = por %p405, %p406
      %p408 = scmp.ne.s32.totalorder %s397, %s398
      %p409 = scmp.eq.s32.totalorder %s44, 0
      %p410 = por %p408, %p409
      %p411 = scmp.ne.s32.totalorder %s397, %s398
      %p412 = scmp.eq.s32.totalorder %s45, 7
      %p413 = por %p411, %p412
      %p415 = scmp.ne.s32.totalorder %s398, %s414
      %p416 = scmp.eq.s32.totalorder %s45, 0
      %p417 = por %p415, %p416
      %s418 = ssub.s32 %s46, %s58
      %s419 = ssub.s32 %s47, %s54
      %s420 = sor.u32 %s418, %s419
      %p421 = scmp.eq.s32.totalorder %s420, 0
      %s423 = sadd.s32 %s422, 1
      %s424 = scalar_select %p421, %s422, %s423
      %p427 = pneg %p421
      %p428 = scmp.eq.s32.totalorder %s39, 7
      %p429 = por %p427, %p428
      %p430 = scmp.ne.s32.totalorder %s422, %s425
      %p431 = scmp.eq.s32.totalorder %s39, 0
      %p432 = por %p430, %p431
      %p433 = scmp.ne.s32.totalorder %s422, %s425
      %p434 = scmp.eq.s32.totalorder %s44, 7
      %p435 = por %p433, %p434
      %p436 = scmp.ne.s32.totalorder %s425, %s426
      %p437 = scmp.eq.s32.totalorder %s44, 0
      %p438 = por %p436, %p437
      %p439 = scmp.ne.s32.totalorder %s425, %s426
      %p440 = scmp.eq.s32.totalorder %s45, 7
      %p441 = por %p439, %p440
      %p443 = scmp.ne.s32.totalorder %s426, %s442
      %p444 = scmp.eq.s32.totalorder %s45, 0
      %p445 = por %p443, %p444
      %p446 = scmp.le.s32.totalorder 1, %s39
      %p447 = scmp.lt.s32.totalorder %s39, 9
      %p448 = pnand %p446, %p447
      %p449 = pneg %p448
      // Predicated region
      $region9: #{tpu_custom_call.1} parent=5 // pred_check
        _
      $region10: #{tpu_custom_call.1} parent=5 // pred_check_branch
        %451 = sbr.rel (%p448) target = $region12
      $region11: #{tpu_custom_call.1} parent=5 // pred_region
        %s452 = ssub.s32 %s39, 1
        // Predicated region
        $region13: #{tpu_custom_call.1} parent=11 // pred_check
          %p453 = pneg %p298
        $region14: #{tpu_custom_call.1} parent=11 // pred_check_branch
          %455 = sbr.rel (%p453) target = $region16
        $region15: #{tpu_custom_call.1} parent=11 // pred_region
          %s457 = ssub.s32 1024, 1024
          %458 = vsyncadd [#allocation13], %s457
          %s459 = sshll.u32 [#allocation14], 4
          %s460 = int_to_ptr.vmem [resolvable:$true] %s459
          %465 = dma.hbm_to_vmem [thread:$0]  %s7, 1024, %s460, [#allocation13], 64, 64, 4
        $region16: #{tpu_custom_call.1} parent=11 // pred_fallthru
          _
        // Predicated region
        $region17: #{tpu_custom_call.1} parent=11 // pred_check
          %p466 = pneg %p319
        $region18: #{tpu_custom_call.1} parent=11 // pred_check_branch
          %468 = sbr.rel (%p466) target = $region20
        $region19: #{tpu_custom_call.1} parent=11 // pred_region
          %s470 = ssub.s32 1024, 1024
          %471 = vsyncadd [#allocation16], %s470
          %s472 = sshll.u32 [#allocation15], 4
          %s473 = int_to_ptr.vmem [resolvable:$true] %s472
          %478 = dma.hbm_to_vmem [thread:$0]  %s8, 1024, %s473, [#allocation16], 64, 64, 4
        $region20: #{tpu_custom_call.1} parent=11 // pred_fallthru
          _
        // Predicated region
        $region21: #{tpu_custom_call.1} parent=11 // pred_check
          %p479 = pneg %p340
        $region22: #{tpu_custom_call.1} parent=11 // pred_check_branch
          %481 = sbr.rel (%p479) target = $region24
        $region23: #{tpu_custom_call.1} parent=11 // pred_region
          _
        $region24: #{tpu_custom_call.1} parent=11 // pred_fallthru
          _
        // Predicated region
        $region25: #{tpu_custom_call.1} parent=11 // pred_check
          %p482 = pneg %p361
        $region26: #{tpu_custom_call.1} parent=11 // pred_check_branch
          %484 = sbr.rel (%p482) target = $region28
        $region27: #{tpu_custom_call.1} parent=11 // pred_region
          %s486 = ssub.s32 9216, 9216
          %487 = vsyncadd [#allocation16], %s486
          %s488 = sshll.u32 [#allocation17], 4
          %s489 = int_to_ptr.vmem [resolvable:$true] %s488
          %494 = dma.hbm_to_vmem [thread:$0]  %s10, 9216, %s489, [#allocation16], 64, 64, 4
        $region28: #{tpu_custom_call.1} parent=11 // pred_fallthru
          _
        // Predicated region
        $region29: #{tpu_custom_call.1} parent=11 // pred_check
          %p495 = pneg %p382
        $region30: #{tpu_custom_call.1} parent=11 // pred_check_branch
          %497 = sbr.rel (%p495) target = $region32
        $region31: #{tpu_custom_call.1} parent=11 // pred_region
          _
        $region32: #{tpu_custom_call.1} parent=11 // pred_fallthru
          _
      $region12: #{tpu_custom_call.1} parent=5 // pred_fallthru
        _
      %p498 = scmp.lt.s32.totalorder %s39, 8
      // Predicated region
      $region33: #{tpu_custom_call.1} parent=5 // pred_check
        %p499 = pneg %p498
      $region34: #{tpu_custom_call.1} parent=5 // pred_check_branch
        %501 = sbr.rel (%p499) target = $region36
      $region35: #{tpu_custom_call.1} parent=5 // pred_region
        // Predicated region
        $region37: #{tpu_custom_call.1} parent=35 // pred_check
          %p502 = pneg %p81
        $region38: #{tpu_custom_call.1} parent=35 // pred_check_branch
          %504 = sbr.rel (%p502) target = $region40
        $region39: #{tpu_custom_call.1} parent=35 // pred_region
          %s505 = sand.u32 %s71, 1
          %s506 = scalar_lea.sflag [#allocation4], %s505
          %s507 = sand.u32 %s71, 1
          %s508 = smul.addr %s507, 8
          %s509 = scalar_lea.vmem [#allocation3], %s508
          %s510 = smul.u32 %s47, 4
          %s511 = ssub.s32 %s510, 1
          %p512 = scmp.gt.s32.totalorder %s511, 0
          %s513 = scalar_select %p512, %s511, 0
          %s515 = ssub.s32 128, 128
          %516 = vsyncadd %s506, %s515
          %s517 = smul.addr %s513, 2
          %s518 = smul.addr %s46, 32
          %s519 = sadd.s32 %s517, %s518
          %s520 = smul.addr %s519, 64
          %s521 = scalar_lea.hbm %s0, %s520
          %s522 = sshll.u32 %s509, 4
          %s523 = int_to_ptr.vmem [resolvable:$true] %s522
          %528 = dma.hbm_to_vmem [thread:$0]  %s521, 128, %s523, %s506, 64, 64, 4
        $region40: #{tpu_custom_call.1} parent=35 // pred_fallthru
          _
        // Predicated region
        $region41: #{tpu_custom_call.1} parent=35 // pred_check
          %p529 = pneg %p109
        $region42: #{tpu_custom_call.1} parent=35 // pred_check_branch
          %531 = sbr.rel (%p529) target = $region44
        $region43: #{tpu_custom_call.1} parent=35 // pred_region
          %s532 = sand.u32 %s39, 1
          %s533 = scalar_lea.sflag [#allocation7], %s532
          %s534 = sand.u32 %s99, 1
          %s535 = smul.addr %s534, 32
          %s536 = scalar_lea.vmem [#allocation6], %s535
          %s537 = smul.u32 4, %s47
          %s539 = ssub.s32 512, 512
          %540 = vsyncadd %s533, %s539
          %s541 = smul.addr %s537, 2
          %s542 = smul.addr %s46, 32
          %s543 = sadd.s32 %s541, %s542
          %s544 = smul.addr %s543, 64
          %s545 = scalar_lea.hbm %s1, %s544
          %s546 = sshll.u32 %s536, 4
          %s547 = int_to_ptr.vmem [resolvable:$true] %s546
          %552 = dma.hbm_to_vmem [thread:$0]  %s545, 512, %s547, %s533, 64, 64, 4
        $region44: #{tpu_custom_call.1} parent=35 // pred_fallthru
          _
        // Predicated region
        $region45: #{tpu_custom_call.1} parent=35 // pred_check
          %p553 = pneg %p145
        $region46: #{tpu_custom_call.1} parent=35 // pred_check_branch
          %555 = sbr.rel (%p553) target = $region48
        $region47: #{tpu_custom_call.1} parent=35 // pred_region
          %s556 = sand.u32 %s39, 1
          %s557 = scalar_lea.sflag [#allocation7], %s556
          %s558 = sand.u32 %s135, 1
          %s559 = smul.addr %s558, 8
          %s560 = scalar_lea.vmem [#allocation8], %s559
          %s561 = smul.u32 %s47, 4
          %s562 = sadd.s32 %s561, 4
          %p563 = scmp.lt.s32.totalorder %s562, 15
          %s564 = scalar_select %p563, %s562, 15
          %s566 = ssub.s32 128, 128
          %567 = vsyncadd %s557, %s566
          %s568 = smul.addr %s564, 2
          %s569 = smul.addr %s46, 32
          %s570 = sadd.s32 %s568, %s569
          %s571 = smul.addr %s570, 64
          %s572 = scalar_lea.hbm %s2, %s571
          %s573 = sshll.u32 %s560, 4
          %s574 = int_to_ptr.vmem [resolvable:$true] %s573
          %579 = dma.hbm_to_vmem [thread:$0]  %s572, 128, %s574, %s557, 64, 64, 4
        $region48: #{tpu_custom_call.1} parent=35 // pred_fallthru
          _
        // Predicated region
        $region49: #{tpu_custom_call.1} parent=35 // pred_check
          %p580 = pneg %p181
        $region50: #{tpu_custom_call.1} parent=35 // pred_check_branch
          %582 = sbr.rel (%p580) target = $region52
        $region51: #{tpu_custom_call.1} parent=35 // pred_region
          %s583 = sand.u32 %s39, 1
          %s584 = scalar_lea.sflag [#allocation10], %s583
          %s585 = sand.u32 %s171, 1
          %s586 = smul.addr %s585, 8
          %s587 = scalar_lea.vmem [#allocation9], %s586
          %s588 = smul.u32 %s47, 4
          %s589 = ssub.s32 %s588, 1
          %p590 = scmp.gt.s32.totalorder %s589, 0
          %s591 = scalar_select %p590, %s589, 0
          %s593 = ssub.s32 128, 128
          %594 = vsyncadd %s584, %s593
          %s595 = smul.addr %s591, 2
          %s596 = smul.addr %s46, 32
          %s597 = sadd.s32 %s595, %s596
          %s598 = smul.addr %s597, 64
          %s599 = scalar_lea.hbm %s3, %s598
          %s600 = sshll.u32 %s587, 4
          %s601 = int_to_ptr.vmem [resolvable:$true] %s600
          %606 = dma.hbm_to_vmem [thread:$0]  %s599, 128, %s601, %s584, 64, 64, 4
        $region52: #{tpu_custom_call.1} parent=35 // pred_fallthru
          _
        // Predicated region
        $region53: #{tpu_custom_call.1} parent=35 // pred_check
          %p607 = pneg %p209
        $region54: #{tpu_custom_call.1} parent=35 // pred_check_branch
          %609 = sbr.rel (%p607) target = $region56
        $region55: #{tpu_custom_call.1} parent=35 // pred_region
          %s610 = sand.u32 %s39, 1
          %s611 = scalar_lea.sflag [#allocation10], %s610
          %s612 = sand.u32 %s199, 1
          %s613 = smul.addr %s612, 32
          %s614 = scalar_lea.vmem [#allocation11], %s613
          %s615 = smul.u32 4, %s47
          %s617 = ssub.s32 512, 512
          %618 = vsyncadd %s611, %s617
          %s619 = smul.addr %s615, 2
          %s620 = smul.addr %s46, 32
          %s621 = sadd.s32 %s619, %s620
          %s622 = smul.addr %s621, 64
          %s623 = scalar_lea.hbm %s4, %s622
          %s624 = sshll.u32 %s614, 4
          %s625 = int_to_ptr.vmem [resolvable:$true] %s624
          %630 = dma.hbm_to_vmem [thread:$0]  %s623, 512, %s625, %s611, 64, 64, 4
        $region56: #{tpu_custom_call.1} parent=35 // pred_fallthru
          _
        // Predicated region
        $region57: #{tpu_custom_call.1} parent=35 // pred_check
          %p631 = pneg %p245
        $region58: #{tpu_custom_call.1} parent=35 // pred_check_branch
          %633 = sbr.rel (%p631) target = $region60
        $region59: #{tpu_custom_call.1} parent=35 // pred_region
          %s634 = sand.u32 %s39, 1
          %s635 = scalar_lea.sflag [#allocation13], %s634
          %s636 = sand.u32 %s235, 1
          %s637 = smul.addr %s636, 8
          %s638 = scalar_lea.vmem [#allocation12], %s637
          %s639 = smul.u32 %s47, 4
          %s640 = sadd.s32 %s639, 4
          %p641 = scmp.lt.s32.totalorder %s640, 15
          %s642 = scalar_select %p641, %s640, 15
          %s644 = ssub.s32 128, 128
          %645 = vsyncadd %s635, %s644
          %s646 = smul.addr %s642, 2
          %s647 = smul.addr %s46, 32
          %s648 = sadd.s32 %s646, %s647
          %s649 = smul.addr %s648, 64
          %s650 = scalar_lea.hbm %s5, %s649
          %s651 = sshll.u32 %s638, 4
          %s652 = int_to_ptr.vmem [resolvable:$true] %s651
          %657 = dma.hbm_to_vmem [thread:$0]  %s650, 128, %s652, %s635, 64, 64, 4
        $region60: #{tpu_custom_call.1} parent=35 // pred_fallthru
          _
        // Predicated region
        $region61: #{tpu_custom_call.1} parent=35 // pred_check
          %p658 = pneg %p271
        $region62: #{tpu_custom_call.1} parent=35 // pred_check_branch
          %660 = sbr.rel (%p658) target = $region64
        $region63: #{tpu_custom_call.1} parent=35 // pred_region
          %p661 = scmp.lt.s32.totalorder %s46, 1
          %s662 = scalar_select %p661, %s46, 1
          %s663 = scalar_lea.vmem %s6, %s662
        $region64: #{tpu_custom_call.1} parent=35 // pred_fallthru
          _
      $region36: #{tpu_custom_call.1} parent=5 // pred_fallthru
        _
      %p664 = scmp.le.s32.totalorder 1, %s39
      %p665 = scmp.lt.s32.totalorder %s39, 9
      %p666 = pnand %p664, %p665
      %p667 = pneg %p666
      // Predicated region
      $region65: #{tpu_custom_call.1} parent=5 // pred_check
        _
      $region66: #{tpu_custom_call.1} parent=5 // pred_check_branch
        %669 = sbr.rel (%p666) target = $region68
      $region67: #{tpu_custom_call.1} parent=5 // pred_region
        %s670 = ssub.s32 %s39, 1
        %s671 = sand.u32 %s74, 1
        %s672 = scalar_lea.sflag [#allocation4], %s671
        %s673 = sand.u32 %s74, 1
        %s674 = smul.addr %s673, 8
        %s675 = scalar_lea.vmem [#allocation3], %s674
        // Predicated region
        $region69: #{tpu_custom_call.1} parent=67 // pred_check
          %p676 = pneg %p87
        $region70: #{tpu_custom_call.1} parent=67 // pred_check_branch
          %678 = sbr.rel (%p676) target = $region72
        $region71: #{tpu_custom_call.1} parent=67 // pred_region
          %679 = dma.done %s672, 128
        $region72: #{tpu_custom_call.1} parent=67 // pred_fallthru
          _
        %s680 = sand.u32 %s44, 1
        %s681 = scalar_lea.sflag [#allocation7], %s680
        %s682 = sand.u32 %s102, 1
        %s683 = smul.addr %s682, 32
        %s684 = scalar_lea.vmem [#allocation6], %s683
        // Predicated region
        $region73: #{tpu_custom_call.1} parent=67 // pred_check
          %p685 = pneg %p115
        $region74: #{tpu_custom_call.1} parent=67 // pred_check_branch
          %687 = sbr.rel (%p685) target = $region76
        $region75: #{tpu_custom_call.1} parent=67 // pred_region
          %688 = dma.done %s681, 512
        $region76: #{tpu_custom_call.1} parent=67 // pred_fallthru
          _
        %s689 = sand.u32 %s44, 1
        %s690 = scalar_lea.sflag [#allocation7], %s689
        %s691 = sand.u32 %s138, 1
        %s692 = smul.addr %s691, 8
        %s693 = scalar_lea.vmem [#allocation8], %s692
        // Predicated region
        $region77: #{tpu_custom_call.1} parent=67 // pred_check
          %p694 = pneg %p151
        $region78: #{tpu_custom_call.1} parent=67 // pred_check_branch
          %696 = sbr.rel (%p694) target = $region80
        $region79: #{tpu_custom_call.1} parent=67 // pred_region
          %697 = dma.done %s690, 128
        $region80: #{tpu_custom_call.1} parent=67 // pred_fallthru
          _
        %s698 = sand.u32 %s44, 1
        %s699 = scalar_lea.sflag [#allocation10], %s698
        %s700 = sand.u32 %s174, 1
        %s701 = smul.addr %s700, 8
        %s702 = scalar_lea.vmem [#allocation9], %s701
        // Predicated region
        $region81: #{tpu_custom_call.1} parent=67 // pred_check
          %p703 = pneg %p187
        $region82: #{tpu_custom_call.1} parent=67 // pred_check_branch
          %705 = sbr.rel (%p703) target = $region84
        $region83: #{tpu_custom_call.1} parent=67 // pred_region
          %706 = dma.done %s699, 128
        $region84: #{tpu_custom_call.1} parent=67 // pred_fallthru
          _
        %s707 = sand.u32 %s44, 1
        %s708 = scalar_lea.sflag [#allocation10], %s707
        %s709 = sand.u32 %s202, 1
        %s710 = smul.addr %s709, 32
        %s711 = scalar_lea.vmem [#allocation11], %s710
        // Predicated region
        $region85: #{tpu_custom_call.1} parent=67 // pred_check
          %p712 = pneg %p215
        $region86: #{tpu_custom_call.1} parent=67 // pred_check_branch
          %714 = sbr.rel (%p712) target = $region88
        $region87: #{tpu_custom_call.1} parent=67 // pred_region
          %715 = dma.done %s708, 512
        $region88: #{tpu_custom_call.1} parent=67 // pred_fallthru
          _
        %s716 = sand.u32 %s44, 1
        %s717 = scalar_lea.sflag [#allocation13], %s716
        %s718 = sand.u32 %s238, 1
        %s719 = smul.addr %s718, 8
        %s720 = scalar_lea.vmem [#allocation12], %s719
        // Predicated region
        $region89: #{tpu_custom_call.1} parent=67 // pred_check
          %p721 = pneg %p251
        $region90: #{tpu_custom_call.1} parent=67 // pred_check_branch
          %723 = sbr.rel (%p721) target = $region92
        $region91: #{tpu_custom_call.1} parent=67 // pred_region
          %724 = dma.done %s717, 128
        $region92: #{tpu_custom_call.1} parent=67 // pred_fallthru
          _
        // Predicated region
        $region93: #{tpu_custom_call.1} parent=67 // pred_check
          %p725 = pneg %p298
        $region94: #{tpu_custom_call.1} parent=67 // pred_check_branch
          %727 = sbr.rel (%p725) target = $region96
        $region95: #{tpu_custom_call.1} parent=67 // pred_region
          %728 = dma.done [#allocation13], 1024
        $region96: #{tpu_custom_call.1} parent=67 // pred_fallthru
          _
        // Predicated region
        $region97: #{tpu_custom_call.1} parent=67 // pred_check
          %p729 = pneg %p319
        $region98: #{tpu_custom_call.1} parent=67 // pred_check_branch
          %731 = sbr.rel (%p729) target = $region100
        $region99: #{tpu_custom_call.1} parent=67 // pred_region
          %732 = dma.done [#allocation16], 1024
        $region100: #{tpu_custom_call.1} parent=67 // pred_fallthru
          _
        // Predicated region
        $region101: #{tpu_custom_call.1} parent=67 // pred_check
          %p733 = pneg %p361
        $region102: #{tpu_custom_call.1} parent=67 // pred_check_branch
          %735 = sbr.rel (%p733) target = $region104
        $region103: #{tpu_custom_call.1} parent=67 // pred_region
          %736 = dma.done [#allocation16], 9216
        $region104: #{tpu_custom_call.1} parent=67 // pred_fallthru
          _
        %s737 = sand.u32 %s74, 1
        %s738 = scalar_lea.sflag [#allocation4], %s737
        %s739 = sand.u32 %s74, 1
        %s740 = smul.addr %s739, 8
        %s741 = scalar_lea.vmem [#allocation3], %s740
        %p742 = pneg %p87
        %p743 = pneg %p84
        %s744 = sand.u32 %s44, 1
        %s745 = scalar_lea.sflag [#allocation7], %s744
        %s746 = sand.u32 %s102, 1
        %s747 = smul.addr %s746, 32
        %s748 = scalar_lea.vmem [#allocation6], %s747
        %p749 = pneg %p115
        %p750 = pneg %p112
        %s751 = sand.u32 %s44, 1
        %s752 = scalar_lea.sflag [#allocation7], %s751
        %s753 = sand.u32 %s138, 1
        %s754 = smul.addr %s753, 8
        %s755 = scalar_lea.vmem [#allocation8], %s754
        %p756 = pneg %p151
        %p757 = pneg %p148
        %s758 = sand.u32 %s44, 1
        %s759 = scalar_lea.sflag [#allocation10], %s758
        %s760 = sand.u32 %s174, 1
        %s761 = smul.addr %s760, 8
        %s762 = scalar_lea.vmem [#allocation9], %s761
        %p763 = pneg %p187
        %p764 = pneg %p184
        %s765 = sand.u32 %s44, 1
        %s766 = scalar_lea.sflag [#allocation10], %s765
        %s767 = sand.u32 %s202, 1
        %s768 = smul.addr %s767, 32
        %s769 = scalar_lea.vmem [#allocation11], %s768
        %p770 = pneg %p215
        %p771 = pneg %p212
        %s772 = sand.u32 %s44, 1
        %s773 = scalar_lea.sflag [#allocation13], %s772
        %s774 = sand.u32 %s238, 1
        %s775 = smul.addr %s774, 8
        %s776 = scalar_lea.vmem [#allocation12], %s775
        %p777 = pneg %p251
        %p778 = pneg %p248
        %p779 = scmp.lt.s32.totalorder %s48, 1
        %s780 = scalar_select %p779, %s48, 1
        %s781 = scalar_lea.vmem %s6, %s780
        %p782 = pneg %p277
        %p783 = pneg %p274
        %p784 = pneg %p298
        %p785 = pneg %p295
        %p786 = pneg %p319
        %p787 = pneg %p316
        %p788 = pneg %p340
        %p789 = pneg %p337
        %p790 = pneg %p361
        %p791 = pneg %p358
        %p792 = pneg %p382
        %p793 = pneg %p379
        %p794 = pneg %p410
        %p795 = pneg %p407
        %s796 = sand.u32 %s397, 1
        %s797 = scalar_lea.sflag [#allocation5], %s796
        %s798 = sand.u32 %s397, 1
        %s799 = smul.addr %s798, 64
        %s800 = scalar_lea.vmem [#allocation18], %s799
        %p801 = pneg %p438
        %p802 = pneg %p435
        %s803 = sand.u32 %s425, 1
        %s804 = scalar_lea.sflag [#allocation20], %s803
        %s805 = sand.u32 %s425, 1
        %s806 = smul.addr %s805, 64
        %s807 = scalar_lea.vmem [#allocation19], %s806
        %s808 = smul.u32 %s49, 4
        %s809 = ssub.s32 %s808, 1
        %p810 = scmp.gt.s32.totalorder %s809, 0
        %s811 = scalar_select %p810, %s809, 0
        %s812 = smul.u32 4, %s49
        %s813 = smul.u32 %s49, 4
        %s814 = sadd.s32 %s813, 4
        %p815 = scmp.lt.s32.totalorder %s814, 15
        %s816 = scalar_select %p815, %s814, 15
        %s817 = smul.u32 %s49, 4
        %s818 = ssub.s32 %s817, 1
        %p819 = scmp.gt.s32.totalorder %s818, 0
        %s820 = scalar_select %p819, %s818, 0
        %s821 = smul.u32 4, %s49
        %s822 = smul.u32 %s49, 4
        %s823 = sadd.s32 %s822, 4
        %p824 = scmp.lt.s32.totalorder %s823, 15
        %s825 = scalar_select %p824, %s823, 15
        %p826 = scmp.lt.s32.totalorder %s48, 1
        %s827 = scalar_select %p826, %s48, 1
        %s828 = scalar_lea.vmem %s6, %s827
        %s829 = smul.u32 4, %s49
        %s830 = smul.u32 4, %s49
        %v832 = vld [vmem:[#allocation14] sm:$0xf]
        %v833 = vld [vmem:[#allocation14 + $0x4] sm:$0xf]
        %v834 = vld [vmem:[#allocation14 + $0x8] sm:$0xf]
        %v835 = vld [vmem:[#allocation14 + $0xc] sm:$0xf]
        %v836 = vld [vmem:[#allocation14 + $0x10] sm:$0xf]
        %v837 = vld [vmem:[#allocation14 + $0x14] sm:$0xf]
        %v838 = vld [vmem:[#allocation14 + $0x18] sm:$0xf]
        %v839 = vld [vmem:[#allocation14 + $0x1c] sm:$0xf]
        %v840 = vld [vmem:[#allocation14 + $0x20] sm:$0xf]
        %v841 = vld [vmem:[#allocation14 + $0x24] sm:$0xf]
        %v842 = vld [vmem:[#allocation14 + $0x28] sm:$0xf]
        %v843 = vld [vmem:[#allocation14 + $0x2c] sm:$0xf]
        %v844 = vld [vmem:[#allocation14 + $0x30] sm:$0xf]
        %v845 = vld [vmem:[#allocation14 + $0x34] sm:$0xf]
        %v846 = vld [vmem:[#allocation14 + $0x38] sm:$0xf]
        %v847 = vld [vmem:[#allocation14 + $0x3c] sm:$0xf]
        %v848 = vld [vmem:[#allocation15] sm:$0xf]
        %v849 = vld [vmem:[#allocation15 + $0x4] sm:$0xf]
        %v850 = vld [vmem:[#allocation15 + $0x8] sm:$0xf]
        %v851 = vld [vmem:[#allocation15 + $0xc] sm:$0xf]
        %v852 = vld [vmem:[#allocation15 + $0x10] sm:$0xf]
        %v853 = vld [vmem:[#allocation15 + $0x14] sm:$0xf]
        %v854 = vld [vmem:[#allocation15 + $0x18] sm:$0xf]
        %v855 = vld [vmem:[#allocation15 + $0x1c] sm:$0xf]
        %v856 = vld [vmem:[#allocation15 + $0x20] sm:$0xf]
        %v857 = vld [vmem:[#allocation15 + $0x24] sm:$0xf]
        %v858 = vld [vmem:[#allocation15 + $0x28] sm:$0xf]
        %v859 = vld [vmem:[#allocation15 + $0x2c] sm:$0xf]
        %v860 = vld [vmem:[#allocation15 + $0x30] sm:$0xf]
        %v861 = vld [vmem:[#allocation15 + $0x34] sm:$0xf]
        %v862 = vld [vmem:[#allocation15 + $0x38] sm:$0xf]
        %v863 = vld [vmem:[#allocation15 + $0x3c] sm:$0xf]
        %v864 = vld [vmem:[%s9] sm:$0x1]
        %v865 = vld [vmem:[%s684] sm:$0xf]
        %v866 = vld [vmem:[%s684 + $0x4] sm:$0xf]
        %v867 = vld [vmem:[%s684 + $0x8] sm:$0xf]
        %v868 = vld [vmem:[%s684 + $0xc] sm:$0xf]
        %v869 = vld [vmem:[%s684 + $0x10] sm:$0xf]
        %v870 = vld [vmem:[%s684 + $0x14] sm:$0xf]
        %v871 = vld [vmem:[%s684 + $0x18] sm:$0xf]
        %v872 = vld [vmem:[%s684 + $0x1c] sm:$0xf]
        %v873 = vld [vmem:[%s711] sm:$0xf]
        %v874 = vld [vmem:[%s711 + $0x4] sm:$0xf]
        %v875 = vld [vmem:[%s711 + $0x8] sm:$0xf]
        %v876 = vld [vmem:[%s711 + $0xc] sm:$0xf]
        %v877 = vld [vmem:[%s711 + $0x10] sm:$0xf]
        %v878 = vld [vmem:[%s711 + $0x14] sm:$0xf]
        %v879 = vld [vmem:[%s711 + $0x18] sm:$0xf]
        %v880 = vld [vmem:[%s711 + $0x1c] sm:$0xf]
        %v889 = vunpack.c.l.b16 %v873
        %v890 = vunpack.c.l.b16 %v874
        %v891 = vunpack.c.l.b16 %v875
        %v892 = vunpack.c.l.b16 %v876
        %v893 = vunpack.c.l.b16 %v877
        %v894 = vunpack.c.l.b16 %v878
        %v895 = vunpack.c.l.b16 %v879
        %v896 = vunpack.c.l.b16 %v880
        %v897 = vpack.c.b16 %v890, %v889
        %v898 = vpack.c.b16 %v892, %v891
        %v899 = vpack.c.b16 %v894, %v893
        %v900 = vpack.c.b16 %v896, %v895
        %v921 = vunpack.c.l.b16 %v848
        %v922 = vunpack.c.l.b16 %v849
        %v923 = vunpack.c.l.b16 %v850
        %v924 = vunpack.c.l.b16 %v851
        %v925 = vunpack.c.l.b16 %v852
        %v926 = vunpack.c.l.b16 %v853
        %v927 = vunpack.c.l.b16 %v854
        %v928 = vunpack.c.l.b16 %v855
        %v929 = vunpack.c.l.b16 %v856
        %v930 = vunpack.c.l.b16 %v857
        %v931 = vunpack.c.l.b16 %v858
        %v932 = vunpack.c.l.b16 %v859
        %v933 = vunpack.c.l.b16 %v860
        %v934 = vunpack.c.l.b16 %v861
        %v935 = vunpack.c.l.b16 %v862
        %v936 = vunpack.c.l.b16 %v863
        %v937 = vpack.c.b16 %v922, %v921
        %v938 = vpack.c.b16 %v924, %v923
        %v939 = vpack.c.b16 %v926, %v925
        %v940 = vpack.c.b16 %v928, %v927
        %v941 = vpack.c.b16 %v930, %v929
        %v942 = vpack.c.b16 %v932, %v931
        %v943 = vpack.c.b16 %v934, %v933
        %v944 = vpack.c.b16 %v936, %v935
        %953 = vmatprep.subr.bf16.mxu0 0
        %954 = vmatpush1.bf16.msra.mxu0 %v937
        %955 = vmatprep.subr.bf16.mxu0 0
        %956 = vmatpush1.bf16.msra.mxu0 %v938
        %957 = vmatprep.subr.bf16.mxu0 0
        %958 = vmatpush1.bf16.msra.mxu0 %v939
        %959 = vmatprep.subr.bf16.mxu0 0
        %960 = vmatpush1.bf16.msra.mxu0 %v940
        %961 = vmatprep.subr.bf16.mxu0 0
        %962 = vmatpush1.bf16.msra.mxu0 %v941
        %963 = vmatprep.subr.bf16.mxu0 0
        %964 = vmatpush1.bf16.msra.mxu0 %v942
        %965 = vmatprep.subr.bf16.mxu0 0
        %966 = vmatpush1.bf16.msra.mxu0 %v943
        %967 = vmatprep.subr.bf16.mxu0 0
        %968 = vmatpush1.bf16.msra.mxu0 %v944
        %969 = vmatprep.subr.bf16.mxu0 0
        %970 = vmatpush1.bf16.msra.mxu0 0
        %971 = vmatprep.subr.bf16.mxu0 0
        %972 = vmatpush1.bf16.msra.mxu0 0
        %973 = vmatprep.subr.bf16.mxu0 0
        %974 = vmatpush1.bf16.msra.mxu0 0
        %975 = vmatprep.subr.bf16.mxu0 0
        %976 = vmatpush1.bf16.msra.mxu0 0
        %977 = vmatprep.subr.bf16.mxu0 0
        %978 = vmatpush1.bf16.msra.mxu0 0
        %979 = vmatprep.subr.bf16.mxu0 0
        %980 = vmatpush1.bf16.msra.mxu0 0
        %981 = vmatprep.subr.bf16.mxu0 0
        %982 = vmatpush1.bf16.msra.mxu0 0
        %983 = vmatprep.subr.bf16.mxu0 0
        %984 = vmatpush1.bf16.msra.mxu0 0
        %985 = vmatprep.mubr.bf16.mxu0 0
        %986 = vmatmul.mubr.bf16.gmra.mrb[0].mxu0 %v897
        %v987 = vpop.f32.mrb[0].mxu0
        %v988 = vadd.f32 0.0, %v987
        %v989 = vpop.f32.mrb[0].mxu0
        %v990 = vpop.f32.mrb[0].mxu0
        %v991 = vadd.f32 0.0, %v990
        %v992 = vpop.f32.mrb[0].mxu0
        %993 = vmatprep.mubr.bf16.mxu0 0
        %994 = vmatmul.mubr.bf16.gmra.mrb[0].mxu0 %v898
        %v995 = vpop.f32.mrb[0].mxu0
        %v996 = vadd.f32 0.0, %v995
        %v997 = vpop.f32.mrb[0].mxu0
        %v998 = vpop.f32.mrb[0].mxu0
        %v999 = vadd.f32 0.0, %v998
        %v1000 = vpop.f32.mrb[0].mxu0
        %1001 = vmatprep.mubr.bf16.mxu0 0
        %1002 = vmatmul.mubr.bf16.gmra.mrb[0].mxu0 %v899
        %v1003 = vpop.f32.mrb[0].mxu0
        %v1004 = vadd.f32 0.0, %v1003
        %v1005 = vpop.f32.mrb[0].mxu0
        %v1006 = vpop.f32.mrb[0].mxu0
        %v1007 = vadd.f32 0.0, %v1006
        %v1008 = vpop.f32.mrb[0].mxu0
        %1009 = vmatprep.mubr.bf16.mxu0 0
        %1010 = vmatmul.mubr.bf16.gmra.mrb[0].mxu0 %v900
        %v1011 = vpop.f32.mrb[0].mxu0
        %v1012 = vadd.f32 0.0, %v1011
        %v1013 = vpop.f32.mrb[0].mxu0
        %v1014 = vpop.f32.mrb[0].mxu0
        %v1015 = vadd.f32 0.0, %v1014
        %v1016 = vpop.f32.mrb[0].mxu0
        %1017 = vdwg.mxu0
        %v1026 = vunpack.c.l.b16 %v865
        %v1027 = vunpack.c.l.b16 %v866
        %v1028 = vunpack.c.l.b16 %v867
        %v1029 = vunpack.c.l.b16 %v868
        %v1030 = vunpack.c.l.b16 %v869
        %v1031 = vunpack.c.l.b16 %v870
        %v1032 = vunpack.c.l.b16 %v871
        %v1033 = vunpack.c.l.b16 %v872
        %v1034 = vpack.c.b16 %v1027, %v1026
        %v1035 = vpack.c.b16 %v1029, %v1028
        %v1036 = vpack.c.b16 %v1031, %v1030
        %v1037 = vpack.c.b16 %v1033, %v1032
        %v1058 = vunpack.c.l.b16 %v832
        %v1059 = vunpack.c.l.b16 %v833
        %v1060 = vunpack.c.l.b16 %v834
        %v1061 = vunpack.c.l.b16 %v835
        %v1062 = vunpack.c.l.b16 %v836
        %v1063 = vunpack.c.l.b16 %v837
        %v1064 = vunpack.c.l.b16 %v838
        %v1065 = vunpack.c.l.b16 %v839
        %v1066 = vunpack.c.l.b16 %v840
        %v1067 = vunpack.c.l.b16 %v841
        %v1068 = vunpack.c.l.b16 %v842
        %v1069 = vunpack.c.l.b16 %v843
        %v1070 = vunpack.c.l.b16 %v844
        %v1071 = vunpack.c.l.b16 %v845
        %v1072 = vunpack.c.l.b16 %v846
        %v1073 = vunpack.c.l.b16 %v847
        %v1074 = vpack.c.b16 %v1059, %v1058
        %v1075 = vpack.c.b16 %v1061, %v1060
        %v1076 = vpack.c.b16 %v1063, %v1062
        %v1077 = vpack.c.b16 %v1065, %v1064
        %v1078 = vpack.c.b16 %v1067, %v1066
        %v1079 = vpack.c.b16 %v1069, %v1068
        %v1080 = vpack.c.b16 %v1071, %v1070
        %v1081 = vpack.c.b16 %v1073, %v1072
        %1090 = vmatprep.subr.bf16.mxu0 0
        %1091 = vmatpush1.bf16.msra.mxu0 %v1074
        %1092 = vmatprep.subr.bf16.mxu0 0
        %1093 = vmatpush1.bf16.msra.mxu0 %v1075
        %1094 = vmatprep.subr.bf16.mxu0 0
        %1095 = vmatpush1.bf16.msra.mxu0 %v1076
        %1096 = vmatprep.subr.bf16.mxu0 0
        %1097 = vmatpush1.bf16.msra.mxu0 %v1077
        %1098 = vmatprep.subr.bf16.mxu0 0
        %1099 = vmatpush1.bf16.msra.mxu0 %v1078
        %1100 = vmatprep.subr.bf16.mxu0 0
        %1101 = vmatpush1.bf16.msra.mxu0 %v1079
        %1102 = vmatprep.subr.bf16.mxu0 0
        %1103 = vmatpush1.bf16.msra.mxu0 %v1080
        %1104 = vmatprep.subr.bf16.mxu0 0
        %1105 = vmatpush1.bf16.msra.mxu0 %v1081
        %1106 = vmatprep.subr.bf16.mxu0 0
        %1107 = vmatpush1.bf16.msra.mxu0 0
        %1108 = vmatprep.subr.bf16.mxu0 0
        %1109 = vmatpush1.bf16.msra.mxu0 0
        %1110 = vmatprep.subr.bf16.mxu0 0
        %1111 = vmatpush1.bf16.msra.mxu0 0
        %1112 = vmatprep.subr.bf16.mxu0 0
        %1113 = vmatpush1.bf16.msra.mxu0 0
        %1114 = vmatprep.subr.bf16.mxu0 0
        %1115 = vmatpush1.bf16.msra.mxu0 0
        %1116 = vmatprep.subr.bf16.mxu0 0
        %1117 = vmatpush1.bf16.msra.mxu0 0
        %1118 = vmatprep.subr.bf16.mxu0 0
        %1119 = vmatpush1.bf16.msra.mxu0 0
        %1120 = vmatprep.subr.bf16.mxu0 0
        %1121 = vmatpush1.bf16.msra.mxu0 0
        %1122 = vmatprep.mubr.bf16.mxu0 0
        %1123 = vmatmul.mubr.bf16.gmra.mrb[0].mxu0 %v1034
        %v1124 = vpop.f32.mrb[0].mxu0
        %v1125 = vadd.f32 %v988, %v1124
        %v1126 = vpop.f32.mrb[0].mxu0
        %v1127 = vpop.f32.mrb[0].mxu0
        %v1128 = vadd.f32 %v991, %v1127
        %v1129 = vpop.f32.mrb[0].mxu0
        %1130 = vmatprep.mubr.bf16.mxu0 0
        %1131 = vmatmul.mubr.bf16.gmra.mrb[0].mxu0 %v1035
        %v1132 = vpop.f32.mrb[0].mxu0
        %v1133 = vadd.f32 %v996, %v1132
        %v1134 = vpop.f32.mrb[0].mxu0
        %v1135 = vpop.f32.mrb[0].mxu0
        %v1136 = vadd.f32 %v999, %v1135
        %v1137 = vpop.f32.mrb[0].mxu0
        %1138 = vmatprep.mubr.bf16.mxu0 0
        %1139 = vmatmul.mubr.bf16.gmra.mrb[0].mxu0 %v1036
        %v1140 = vpop.f32.mrb[0].mxu0
        %v1141 = vadd.f32 %v1004, %v1140
        %v1142 = vpop.f32.mrb[0].mxu0
        %v1143 = vpop.f32.mrb[0].mxu0
        %v1144 = vadd.f32 %v1007, %v1143
        %v1145 = vpop.f32.mrb[0].mxu0
        %1146 = vmatprep.mubr.bf16.mxu0 0
        %1147 = vmatmul.mubr.bf16.gmra.mrb[0].mxu0 %v1037
        %v1148 = vpop.f32.mrb[0].mxu0
        %v1149 = vadd.f32 %v1012, %v1148
        %v1150 = vpop.f32.mrb[0].mxu0
        %v1151 = vpop.f32.mrb[0].mxu0
        %v1152 = vadd.f32 %v1015, %v1151
        %v1153 = vpop.f32.mrb[0].mxu0
        %1154 = vdwg.mxu0
        %v1156 = vlaneseq
        %v1157 = vshrl.u32 %v1156, 7
        %v1158 = vsub.s32 0, %v1157
        %v1159 = vrot.slane %v864, %v1158
        %v1161 = vadd.f32 %v1125, %v1159
        %v1162 = vadd.f32 %v1128, %v1159
        %v1163 = vadd.f32 %v1133, %v1159
        %v1164 = vadd.f32 %v1136, %v1159
        %v1165 = vadd.f32 %v1141, %v1159
        %v1166 = vadd.f32 %v1144, %v1159
        %v1167 = vadd.f32 %v1149, %v1159
        %v1168 = vadd.f32 %v1152, %v1159
        %v1169 = vld [vmem:[%s675] sm:$0xf]
        %v1170 = vld [vmem:[%s675 + $0x4] sm:$0xf]
        %v1171 = vld [vmem:[%s702] sm:$0xf]
        %v1172 = vld [vmem:[%s702 + $0x4] sm:$0xf]
        %v1175 = vunpack.c.l.b16 %v1171
        %v1176 = vunpack.c.l.b16 %v1172
        %v1177 = vpack.c.b16 %v1176, %v1175
        %1179 = vmatprep.subr.bf16.mxu0 0
        %1180 = vmatpush1.bf16.msra.mxu0 %v937
        %1181 = vmatprep.subr.bf16.mxu0 0
        %1182 = vmatpush1.bf16.msra.mxu0 %v938
        %1183 = vmatprep.subr.bf16.mxu0 0
        %1184 = vmatpush1.bf16.msra.mxu0 %v939
        %1185 = vmatprep.subr.bf16.mxu0 0
        %1186 = vmatpush1.bf16.msra.mxu0 %v940
        %1187 = vmatprep.subr.bf16.mxu0 0
        %1188 = vmatpush1.bf16.msra.mxu0 %v941
        %1189 = vmatprep.subr.bf16.mxu0 0
        %1190 = vmatpush1.bf16.msra.mxu0 %v942
        %1191 = vmatprep.subr.bf16.mxu0 0
        %1192 = vmatpush1.bf16.msra.mxu0 %v943
        %1193 = vmatprep.subr.bf16.mxu0 0
        %1194 = vmatpush1.bf16.msra.mxu0 %v944
        %1195 = vmatprep.subr.bf16.mxu0 0
        %1196 = vmatpush1.bf16.msra.mxu0 0
        %1197 = vmatprep.subr.bf16.mxu0 0
        %1198 = vmatpush1.bf16.msra.mxu0 0
        %1199 = vmatprep.subr.bf16.mxu0 0
        %1200 = vmatpush1.bf16.msra.mxu0 0
        %1201 = vmatprep.subr.bf16.mxu0 0
        %1202 = vmatpush1.bf16.msra.mxu0 0
        %1203 = vmatprep.subr.bf16.mxu0 0
        %1204 = vmatpush1.bf16.msra.mxu0 0
        %1205 = vmatprep.subr.bf16.mxu0 0
        %1206 = vmatpush1.bf16.msra.mxu0 0
        %1207 = vmatprep.subr.bf16.mxu0 0
        %1208 = vmatpush1.bf16.msra.mxu0 0
        %1209 = vmatprep.subr.bf16.mxu0 0
        %1210 = vmatpush1.bf16.msra.mxu0 0
        %1211 = vmatprep.mubr.bf16.mxu0 0
        %1212 = vmatmul.mubr.bf16.gmra.mrb[0].mxu0 %v1177
        %v1213 = vpop.f32.mrb[0].mxu0
        %v1214 = vadd.f32 0.0, %v1213
        %v1215 = vpop.f32.mrb[0].mxu0
        %v1216 = vpop.f32.mrb[0].mxu0
        %v1217 = vadd.f32 0.0, %v1216
        %v1218 = vpop.f32.mrb[0].mxu0
        %1219 = vdwg.mxu0
        %v1222 = vunpack.c.l.b16 %v1169
        %v1223 = vunpack.c.l.b16 %v1170
        %v1224 = vpack.c.b16 %v1223, %v1222
        %1226 = vmatprep.subr.bf16.mxu0 0
        %1227 = vmatpush1.bf16.msra.mxu0 %v1074
        %1228 = vmatprep.subr.bf16.mxu0 0
        %1229 = vmatpush1.bf16.msra.mxu0 %v1075
        %1230 = vmatprep.subr.bf16.mxu0 0
        %1231 = vmatpush1.bf16.msra.mxu0 %v1076
        %1232 = vmatprep.subr.bf16.mxu0 0
        %1233 = vmatpush1.bf16.msra.mxu0 %v1077
        %1234 = vmatprep.subr.bf16.mxu0 0
        %1235 = vmatpush1.bf16.msra.mxu0 %v1078
        %1236 = vmatprep.subr.bf16.mxu0 0
        %1237 = vmatpush1.bf16.msra.mxu0 %v1079
        %1238 = vmatprep.subr.bf16.mxu0 0
        %1239 = vmatpush1.bf16.msra.mxu0 %v1080
        %1240 = vmatprep.subr.bf16.mxu0 0
        %1241 = vmatpush1.bf16.msra.mxu0 %v1081
        %1242 = vmatprep.subr.bf16.mxu0 0
        %1243 = vmatpush1.bf16.msra.mxu0 0
        %1244 = vmatprep.subr.bf16.mxu0 0
        %1245 = vmatpush1.bf16.msra.mxu0 0
        %1246 = vmatprep.subr.bf16.mxu0 0
        %1247 = vmatpush1.bf16.msra.mxu0 0
        %1248 = vmatprep.subr.bf16.mxu0 0
        %1249 = vmatpush1.bf16.msra.mxu0 0
        %1250 = vmatprep.subr.bf16.mxu0 0
        %1251 = vmatpush1.bf16.msra.mxu0 0
        %1252 = vmatprep.subr.bf16.mxu0 0
        %1253 = vmatpush1.bf16.msra.mxu0 0
        %1254 = vmatprep.subr.bf16.mxu0 0
        %1255 = vmatpush1.bf16.msra.mxu0 0
        %1256 = vmatprep.subr.bf16.mxu0 0
        %1257 = vmatpush1.bf16.msra.mxu0 0
        %1258 = vmatprep.mubr.bf16.mxu0 0
        %1259 = vmatmul.mubr.bf16.gmra.mrb[0].mxu0 %v1224
        %v1260 = vpop.f32.mrb[0].mxu0
        %v1261 = vadd.f32 %v1214, %v1260
        %v1262 = vpop.f32.mrb[0].mxu0
        %v1263 = vpop.f32.mrb[0].mxu0
        %v1264 = vadd.f32 %v1217, %v1263
        %v1265 = vpop.f32.mrb[0].mxu0
        %1266 = vdwg.mxu0
        %v1267 = vadd.f32 %v1261, %v1159
        %v1268 = vadd.f32 %v1264, %v1159
        %p1269 = scmp.gt.s32.totalorder %s49, 0
        %s1270 = scalar_select %p1269, 1.0, 0.0
        %v1271 = vstv %s1270
        %v1272 = vmul.f32 %v1267, %v1271
        %v1273 = vmul.f32 %v1268, %v1271
        %v1274 = vld [vmem:[%s693] sm:$0xf]
        %v1275 = vld [vmem:[%s693 + $0x4] sm:$0xf]
        %v1276 = vld [vmem:[%s720] sm:$0xf]
        %v1277 = vld [vmem:[%s720 + $0x4] sm:$0xf]
        %v1280 = vunpack.c.l.b16 %v1276
        %v1281 = vunpack.c.l.b16 %v1277
        %v1282 = vpack.c.b16 %v1281, %v1280
        %1284 = vmatprep.subr.bf16.mxu0 0
        %1285 = vmatpush1.bf16.msra.mxu0 %v937
        %1286 = vmatprep.subr.bf16.mxu0 0
        %1287 = vmatpush1.bf16.msra.mxu0 %v938
        %1288 = vmatprep.subr.bf16.mxu0 0
        %1289 = vmatpush1.bf16.msra.mxu0 %v939
        %1290 = vmatprep.subr.bf16.mxu0 0
        %1291 = vmatpush1.bf16.msra.mxu0 %v940
        %1292 = vmatprep.subr.bf16.mxu0 0
        %1293 = vmatpush1.bf16.msra.mxu0 %v941
        %1294 = vmatprep.subr.bf16.mxu0 0
        %1295 = vmatpush1.bf16.msra.mxu0 %v942
        %1296 = vmatprep.subr.bf16.mxu0 0
        %1297 = vmatpush1.bf16.msra.mxu0 %v943
        %1298 = vmatprep.subr.bf16.mxu0 0
        %1299 = vmatpush1.bf16.msra.mxu0 %v944
        %1300 = vmatprep.subr.bf16.mxu0 0
        %1301 = vmatpush1.bf16.msra.mxu0 0
        %1302 = vmatprep.subr.bf16.mxu0 0
        %1303 = vmatpush1.bf16.msra.mxu0 0
        %1304 = vmatprep.subr.bf16.mxu0 0
        %1305 = vmatpush1.bf16.msra.mxu0 0
        %1306 = vmatprep.subr.bf16.mxu0 0
        %1307 = vmatpush1.bf16.msra.mxu0 0
        %1308 = vmatprep.subr.bf16.mxu0 0
        %1309 = vmatpush1.bf16.msra.mxu0 0
        %1310 = vmatprep.subr.bf16.mxu0 0
        %1311 = vmatpush1.bf16.msra.mxu0 0
        %1312 = vmatprep.subr.bf16.mxu0 0
        %1313 = vmatpush1.bf16.msra.mxu0 0
        %1314 = vmatprep.subr.bf16.mxu0 0
        %1315 = vmatpush1.bf16.msra.mxu0 0
        %1316 = vmatprep.mubr.bf16.mxu0 0
        %1317 = vmatmul.mubr.bf16.gmra.mrb[0].mxu0 %v1282
        %v1318 = vpop.f32.mrb[0].mxu0
        %v1319 = vadd.f32 0.0, %v1318
        %v1320 = vpop.f32.mrb[0].mxu0
        %v1321 = vpop.f32.mrb[0].mxu0
        %v1322 = vadd.f32 0.0, %v1321
        %v1323 = vpop.f32.mrb[0].mxu0
        %1324 = vdwg.mxu0
        %v1327 = vunpack.c.l.b16 %v1274
        %v1328 = vunpack.c.l.b16 %v1275
        %v1329 = vpack.c.b16 %v1328, %v1327
        %1331 = vmatprep.subr.bf16.mxu0 0
        %1332 = vmatpush1.bf16.msra.mxu0 %v1074
        %1333 = vmatprep.subr.bf16.mxu0 0
        %1334 = vmatpush1.bf16.msra.mxu0 %v1075
        %1335 = vmatprep.subr.bf16.mxu0 0
        %1336 = vmatpush1.bf16.msra.mxu0 %v1076
        %1337 = vmatprep.subr.bf16.mxu0 0
        %1338 = vmatpush1.bf16.msra.mxu0 %v1077
        %1339 = vmatprep.subr.bf16.mxu0 0
        %1340 = vmatpush1.bf16.msra.mxu0 %v1078
        %1341 = vmatprep.subr.bf16.mxu0 0
        %1342 = vmatpush1.bf16.msra.mxu0 %v1079
        %1343 = vmatprep.subr.bf16.mxu0 0
        %1344 = vmatpush1.bf16.msra.mxu0 %v1080
        %1345 = vmatprep.subr.bf16.mxu0 0
        %1346 = vmatpush1.bf16.msra.mxu0 %v1081
        %1347 = vmatprep.subr.bf16.mxu0 0
        %1348 = vmatpush1.bf16.msra.mxu0 0
        %1349 = vmatprep.subr.bf16.mxu0 0
        %1350 = vmatpush1.bf16.msra.mxu0 0
        %1351 = vmatprep.subr.bf16.mxu0 0
        %1352 = vmatpush1.bf16.msra.mxu0 0
        %1353 = vmatprep.subr.bf16.mxu0 0
        %1354 = vmatpush1.bf16.msra.mxu0 0
        %1355 = vmatprep.subr.bf16.mxu0 0
        %1356 = vmatpush1.bf16.msra.mxu0 0
        %1357 = vmatprep.subr.bf16.mxu0 0
        %1358 = vmatpush1.bf16.msra.mxu0 0
        %1359 = vmatprep.subr.bf16.mxu0 0
        %1360 = vmatpush1.bf16.msra.mxu0 0
        %1361 = vmatprep.subr.bf16.mxu0 0
        %1362 = vmatpush1.bf16.msra.mxu0 0
        %1363 = vmatprep.mubr.bf16.mxu0 0
        %1364 = vmatmul.mubr.bf16.gmra.mrb[0].mxu0 %v1329
        %v1365 = vpop.f32.mrb[0].mxu0
        %v1366 = vadd.f32 %v1319, %v1365
        %v1367 = vpop.f32.mrb[0].mxu0
        %v1368 = vpop.f32.mrb[0].mxu0
        %v1369 = vadd.f32 %v1322, %v1368
        %v1370 = vpop.f32.mrb[0].mxu0
        %1371 = vdwg.mxu0
        %v1372 = vadd.f32 %v1366, %v1159
        %v1373 = vadd.f32 %v1369, %v1159
        %p1374 = scmp.lt.s32.totalorder %s49, 3
        %s1375 = scalar_select %p1374, 1.0, 0.0
        %v1376 = vstv %s1375
        %v1377 = vmul.f32 %v1372, %v1376
        %v1378 = vmul.f32 %v1373, %v1376
        %1379 = vst [vmem:[#allocation2] sm:$0xff] 0.0
        %1380 = vst [vmem:[#allocation2 + $0x8] sm:$0xff] 0.0
        %1381 = vst [vmem:[#allocation2 + $0x10] sm:$0x3] 0.0
        %1382 = vst [vmem:[#allocation2 + $0x18] sm:$0xff] 0.0
        %1383 = vst [vmem:[#allocation2 + $0x20] sm:$0xff] 0.0
        %1384 = vst [vmem:[#allocation2 + $0x28] sm:$0x3] 0.0
        %1385 = vst [vmem:[#allocation2 + $0x30] sm:$0xff] 0.0
        %1386 = vst [vmem:[#allocation2 + $0x38] sm:$0xff] 0.0
        %1387 = vst [vmem:[#allocation2 + $0x40] sm:$0x3] 0.0
        %1388 = vst [vmem:[#allocation2 + $0x48] sm:$0xff] 0.0
        %1389 = vst [vmem:[#allocation2 + $0x50] sm:$0xff] 0.0
        %1390 = vst [vmem:[#allocation2 + $0x58] sm:$0x3] 0.0
        %1391 = vst [vmem:[#allocation2 + $0x60] sm:$0xff] 0.0
        %1392 = vst [vmem:[#allocation2 + $0x68] sm:$0xff] 0.0
        %1393 = vst [vmem:[#allocation2 + $0x70] sm:$0x3] 0.0
        %1394 = vst [vmem:[#allocation2 + $0x78] sm:$0xff] 0.0
        %1395 = vst [vmem:[#allocation2 + $0x80] sm:$0xff] 0.0
        %1396 = vst [vmem:[#allocation2 + $0x88] sm:$0x3] 0.0
        %s1397 = scalar_lea.vmem [#allocation2], 24
        %1398 = vst [vmem:[%s1397 + $0x1] sm:$0xff] %v1161
        %1399 = vst [vmem:[%s1397 + $0x9] sm:$0xff] %v1162
        %1400 = vst [vmem:[%s1397 + $0x19] sm:$0xff] %v1163
        %1401 = vst [vmem:[%s1397 + $0x21] sm:$0xff] %v1164
        %1402 = vst [vmem:[%s1397 + $0x31] sm:$0xff] %v1165
        %1403 = vst [vmem:[%s1397 + $0x39] sm:$0xff] %v1166
        %1404 = vst [vmem:[%s1397 + $0x49] sm:$0xff] %v1167
        %1405 = vst [vmem:[%s1397 + $0x51] sm:$0xff] %v1168
        %1406 = vst [vmem:[#allocation2 + $0x1] sm:$0xff] %v1272
        %1407 = vst [vmem:[#allocation2 + $0x9] sm:$0xff] %v1273
        %s1408 = scalar_lea.vmem [#allocation2], 120
        %1409 = vst [vmem:[%s1408 + $0x1] sm:$0xff] %v1377
        %1410 = vst [vmem:[%s1408 + $0x9] sm:$0xff] %v1378
        %v1411 = vld [vmem:[#allocation2] sm:$0xff]
        %v1412 = vld [vmem:[#allocation2 + $0x8] sm:$0xff]
        %v1413 = vld [vmem:[#allocation2 + $0x18] sm:$0xff]
        %v1414 = vld [vmem:[#allocation2 + $0x20] sm:$0xff]
        %v1415 = vld [vmem:[#allocation2 + $0x30] sm:$0xff]
        %v1416 = vld [vmem:[#allocation2 + $0x38] sm:$0xff]
        %v1417 = vld [vmem:[#allocation2 + $0x48] sm:$0xff]
        %v1418 = vld [vmem:[#allocation2 + $0x50] sm:$0xff]
        %v1419 = vpack.c.bf16 %v1412, %v1411
        %v1420 = vpack.c.bf16 %v1414, %v1413
        %v1421 = vpack.c.bf16 %v1416, %v1415
        %v1422 = vpack.c.bf16 %v1418, %v1417
        %v1423 = vld [vmem:[#allocation17] sm:$0xf]
        %v1424 = vld [vmem:[#allocation17 + $0x4] sm:$0xf]
        %v1425 = vld [vmem:[#allocation17 + $0x8] sm:$0xf]
        %v1426 = vld [vmem:[#allocation17 + $0xc] sm:$0xf]
        %v1427 = vld [vmem:[#allocation17 + $0x10] sm:$0xf]
        %v1428 = vld [vmem:[#allocation17 + $0x14] sm:$0xf]
        %v1429 = vld [vmem:[#allocation17 + $0x18] sm:$0xf]
        %v1430 = vld [vmem:[#allocation17 + $0x1c] sm:$0xf]
        %v1431 = vld [vmem:[#allocation17 + $0x20] sm:$0xf]
        %v1432 = vld [vmem:[#allocation17 + $0x24] sm:$0xf]
        %v1433 = vld [vmem:[#allocation17 + $0x28] sm:$0xf]
        %v1434 = vld [vmem:[#allocation17 + $0x2c] sm:$0xf]
        %v1435 = vld [vmem:[#allocation17 + $0x30] sm:$0xf]
        %v1436 = vld [vmem:[#allocation17 + $0x34] sm:$0xf]
        %v1437 = vld [vmem:[#allocation17 + $0x38] sm:$0xf]
        %v1438 = vld [vmem:[#allocation17 + $0x3c] sm:$0xf]
        %v1439 = vld [vmem:[#allocation2 + $0x1] sm:$0xff]
        %v1440 = vld [vmem:[#allocation2 + $0x9] sm:$0xff]
        %v1441 = vld [vmem:[#allocation2 + $0x19] sm:$0xff]
        %v1442 = vld [vmem:[#allocation2 + $0x21] sm:$0xff]
        %v1443 = vld [vmem:[#allocation2 + $0x31] sm:$0xff]
        %v1444 = vld [vmem:[#allocation2 + $0x39] sm:$0xff]
        %v1445 = vld [vmem:[#allocation2 + $0x49] sm:$0xff]
        %v1446 = vld [vmem:[#allocation2 + $0x51] sm:$0xff]
        %v1447 = vpack.c.bf16 %v1440, %v1439
        %v1448 = vpack.c.bf16 %v1442, %v1441
        %v1449 = vpack.c.bf16 %v1444, %v1443
        %v1450 = vpack.c.bf16 %v1446, %v1445
        %s1451 = scalar_lea.vmem [#allocation17], 64
        %v1452 = vld [vmem:[%s1451] sm:$0xf]
        %v1453 = vld [vmem:[%s1451 + $0x4] sm:$0xf]
        %v1454 = vld [vmem:[%s1451 + $0x8] sm:$0xf]
        %v1455 = vld [vmem:[%s1451 + $0xc] sm:$0xf]
        %v1456 = vld [vmem:[%s1451 + $0x10] sm:$0xf]
        %v1457 = vld [vmem:[%s1451 + $0x14] sm:$0xf]
        %v1458 = vld [vmem:[%s1451 + $0x18] sm:$0xf]
        %v1459 = vld [vmem:[%s1451 + $0x1c] sm:$0xf]
        %v1460 = vld [vmem:[%s1451 + $0x20] sm:$0xf]
        %v1461 = vld [vmem:[%s1451 + $0x24] sm:$0xf]
        %v1462 = vld [vmem:[%s1451 + $0x28] sm:$0xf]
        %v1463 = vld [vmem:[%s1451 + $0x2c] sm:$0xf]
        %v1464 = vld [vmem:[%s1451 + $0x30] sm:$0xf]
        %v1465 = vld [vmem:[%s1451 + $0x34] sm:$0xf]
        %v1466 = vld [vmem:[%s1451 + $0x38] sm:$0xf]
        %v1467 = vld [vmem:[%s1451 + $0x3c] sm:$0xf]
        %v1484 = vunpack.c.l.b16 %v1452
        %v1485 = vunpack.c.l.b16 %v1453
        %v1486 = vunpack.c.l.b16 %v1454
        %v1487 = vunpack.c.l.b16 %v1455
        %v1488 = vunpack.c.l.b16 %v1456
        %v1489 = vunpack.c.l.b16 %v1457
        %v1490 = vunpack.c.l.b16 %v1458
        %v1491 = vunpack.c.l.b16 %v1459
        %v1492 = vunpack.c.l.b16 %v1460
        %v1493 = vunpack.c.l.b16 %v1461
        %v1494 = vunpack.c.l.b16 %v1462
        %v1495 = vunpack.c.l.b16 %v1463
        %v1496 = vunpack.c.l.b16 %v1464
        %v1497 = vunpack.c.l.b16 %v1465
        %v1498 = vunpack.c.l.b16 %v1466
        %v1499 = vunpack.c.l.b16 %v1467
        %v1500 = vpack.c.b16 %v1485, %v1484
        %v1501 = vpack.c.b16 %v1487, %v1486
        %v1502 = vpack.c.b16 %v1489, %v1488
        %v1503 = vpack.c.b16 %v1491, %v1490
        %v1504 = vpack.c.b16 %v1493, %v1492
        %v1505 = vpack.c.b16 %v1495, %v1494
        %v1506 = vpack.c.b16 %v1497, %v1496
        %v1507 = vpack.c.b16 %v1499, %v1498
        %1516 = vmatprep.subr.bf16.mxu0 0
        %1517 = vmatpush1.bf16.msra.mxu0 %v1500
        %1518 = vmatprep.subr.bf16.mxu0 0
        %1519 = vmatpush1.bf16.msra.mxu0 %v1501
        %1520 = vmatprep.subr.bf16.mxu0 0
        %1521 = vmatpush1.bf16.msra.mxu0 %v1502
        %1522 = vmatprep.subr.bf16.mxu0 0
        %1523 = vmatpush1.bf16.msra.mxu0 %v1503
        %1524 = vmatprep.subr.bf16.mxu0 0
        %1525 = vmatpush1.bf16.msra.mxu0 %v1504
        %1526 = vmatprep.subr.bf16.mxu0 0
        %1527 = vmatpush1.bf16.msra.mxu0 %v1505
        %1528 = vmatprep.subr.bf16.mxu0 0
        %1529 = vmatpush1.bf16.msra.mxu0 %v1506
        %1530 = vmatprep.subr.bf16.mxu0 0
        %1531 = vmatpush1.bf16.msra.mxu0 %v1507
        %1532 = vmatprep.subr.bf16.mxu0 0
        %1533 = vmatpush1.bf16.msra.mxu0 0
        %1534 = vmatprep.subr.bf16.mxu0 0
        %1535 = vmatpush1.bf16.msra.mxu0 0
        %1536 = vmatprep.subr.bf16.mxu0 0
        %1537 = vmatpush1.bf16.msra.mxu0 0
        %1538 = vmatprep.subr.bf16.mxu0 0
        %1539 = vmatpush1.bf16.msra.mxu0 0
        %1540 = vmatprep.subr.bf16.mxu0 0
        %1541 = vmatpush1.bf16.msra.mxu0 0
        %1542 = vmatprep.subr.bf16.mxu0 0
        %1543 = vmatpush1.bf16.msra.mxu0 0
        %1544 = vmatprep.subr.bf16.mxu0 0
        %1545 = vmatpush1.bf16.msra.mxu0 0
        %1546 = vmatprep.subr.bf16.mxu0 0
        %1547 = vmatpush1.bf16.msra.mxu0 0
        %1548 = vmatprep.mubr.bf16.mxu0 0
        %1549 = vmatmul.mubr.bf16.gmra.mrb[0].mxu0 %v1447
        %v1550 = vpop.f32.mrb[0].mxu0
        %v1551 = vadd.f32 0.0, %v1550
        %v1552 = vpop.f32.mrb[0].mxu0
        %v1553 = vpop.f32.mrb[0].mxu0
        %v1554 = vadd.f32 0.0, %v1553
        %v1555 = vpop.f32.mrb[0].mxu0
        %1556 = vmatprep.mubr.bf16.mxu0 0
        %1557 = vmatmul.mubr.bf16.gmra.mrb[0].mxu0 %v1448
        %v1558 = vpop.f32.mrb[0].mxu0
        %v1559 = vadd.f32 0.0, %v1558
        %v1560 = vpop.f32.mrb[0].mxu0
        %v1561 = vpop.f32.mrb[0].mxu0
        %v1562 = vadd.f32 0.0, %v1561
        %v1563 = vpop.f32.mrb[0].mxu0
        %1564 = vmatprep.mubr.bf16.mxu0 0
        %1565 = vmatmul.mubr.bf16.gmra.mrb[0].mxu0 %v1449
        %v1566 = vpop.f32.mrb[0].mxu0
        %v1567 = vadd.f32 0.0, %v1566
        %v1568 = vpop.f32.mrb[0].mxu0
        %v1569 = vpop.f32.mrb[0].mxu0
        %v1570 = vadd.f32 0.0, %v1569
        %v1571 = vpop.f32.mrb[0].mxu0
        %1572 = vmatprep.mubr.bf16.mxu0 0
        %1573 = vmatmul.mubr.bf16.gmra.mrb[0].mxu0 %v1450
        %v1574 = vpop.f32.mrb[0].mxu0
        %v1575 = vadd.f32 0.0, %v1574
        %v1576 = vpop.f32.mrb[0].mxu0
        %v1577 = vpop.f32.mrb[0].mxu0
        %v1578 = vadd.f32 0.0, %v1577
        %v1579 = vpop.f32.mrb[0].mxu0
        %1580 = vdwg.mxu0
        %v1597 = vunpack.c.l.b16 %v1423
        %v1598 = vunpack.c.l.b16 %v1424
        %v1599 = vunpack.c.l.b16 %v1425
        %v1600 = vunpack.c.l.b16 %v1426
        %v1601 = vunpack.c.l.b16 %v1427
        %v1602 = vunpack.c.l.b16 %v1428
        %v1603 = vunpack.c.l.b16 %v1429
        %v1604 = vunpack.c.l.b16 %v1430
        %v1605 = vunpack.c.l.b16 %v1431
        %v1606 = vunpack.c.l.b16 %v1432
        %v1607 = vunpack.c.l.b16 %v1433
        %v1608 = vunpack.c.l.b16 %v1434
        %v1609 = vunpack.c.l.b16 %v1435
        %v1610 = vunpack.c.l.b16 %v1436
        %v1611 = vunpack.c.l.b16 %v1437
        %v1612 = vunpack.c.l.b16 %v1438
        %v1613 = vpack.c.b16 %v1598, %v1597
        %v1614 = vpack.c.b16 %v1600, %v1599
        %v1615 = vpack.c.b16 %v1602, %v1601
        %v1616 = vpack.c.b16 %v1604, %v1603
        %v1617 = vpack.c.b16 %v1606, %v1605
        %v1618 = vpack.c.b16 %v1608, %v1607
        %v1619 = vpack.c.b16 %v1610, %v1609
        %v1620 = vpack.c.b16 %v1612, %v1611
        %1629 = vmatprep.subr.bf16.mxu0 0
        %1630 = vmatpush1.bf16.msra.mxu0 %v1613
        %1631 = vmatprep.subr.bf16.mxu0 0
        %1632 = vmatpush1.bf16.msra.mxu0 %v1614
        %1633 = vmatprep.subr.bf16.mxu0 0
        %1634 = vmatpush1.bf16.msra.mxu0 %v1615
        %1635 = vmatprep.subr.bf16.mxu0 0
        %1636 = vmatpush1.bf16.msra.mxu0 %v1616
        %1637 = vmatprep.subr.bf16.mxu0 0
        %1638 = vmatpush1.bf16.msra.mxu0 %v1617
        %1639 = vmatprep.subr.bf16.mxu0 0
        %1640 = vmatpush1.bf16.msra.mxu0 %v1618
        %1641 = vmatprep.subr.bf16.mxu0 0
        %1642 = vmatpush1.bf16.msra.mxu0 %v1619
        %1643 = vmatprep.subr.bf16.mxu0 0
        %1644 = vmatpush1.bf16.msra.mxu0 %v1620
        %1645 = vmatprep.subr.bf16.mxu0 0
        %1646 = vmatpush1.bf16.msra.mxu0 0
        %1647 = vmatprep.subr.bf16.mxu0 0
        %1648 = vmatpush1.bf16.msra.mxu0 0
        %1649 = vmatprep.subr.bf16.mxu0 0
        %1650 = vmatpush1.bf16.msra.mxu0 0
        %1651 = vmatprep.subr.bf16.mxu0 0
        %1652 = vmatpush1.bf16.msra.mxu0 0
        %1653 = vmatprep.subr.bf16.mxu0 0
        %1654 = vmatpush1.bf16.msra.mxu0 0
        %1655 = vmatprep.subr.bf16.mxu0 0
        %1656 = vmatpush1.bf16.msra.mxu0 0
        %1657 = vmatprep.subr.bf16.mxu0 0
        %1658 = vmatpush1.bf16.msra.mxu0 0
        %1659 = vmatprep.subr.bf16.mxu0 0
        %1660 = vmatpush1.bf16.msra.mxu0 0
        %1661 = vmatprep.mubr.bf16.mxu0 0
        %1662 = vmatmul.mubr.bf16.gmra.mrb[0].mxu0 %v1419
        %v1663 = vpop.f32.mrb[0].mxu0
        %v1664 = vadd.f32 %v1551, %v1663
        %v1665 = vpop.f32.mrb[0].mxu0
        %v1666 = vpop.f32.mrb[0].mxu0
        %v1667 = vadd.f32 %v1554, %v1666
        %v1668 = vpop.f32.mrb[0].mxu0
        %1669 = vmatprep.mubr.bf16.mxu0 0
        %1670 = vmatmul.mubr.bf16.gmra.mrb[0].mxu0 %v1420
        %v1671 = vpop.f32.mrb[0].mxu0
        %v1672 = vadd.f32 %v1559, %v1671
        %v1673 = vpop.f32.mrb[0].mxu0
        %v1674 = vpop.f32.mrb[0].mxu0
        %v1675 = vadd.f32 %v1562, %v1674
        %v1676 = vpop.f32.mrb[0].mxu0
        %1677 = vmatprep.mubr.bf16.mxu0 0
        %1678 = vmatmul.mubr.bf16.gmra.mrb[0].mxu0 %v1421
        %v1679 = vpop.f32.mrb[0].mxu0
        %v1680 = vadd.f32 %v1567, %v1679
        %v1681 = vpop.f32.mrb[0].mxu0
        %v1682 = vpop.f32.mrb[0].mxu0
        %v1683 = vadd.f32 %v1570, %v1682
        %v1684 = vpop.f32.mrb[0].mxu0
        %1685 = vmatprep.mubr.bf16.mxu0 0
        %1686 = vmatmul.mubr.bf16.gmra.mrb[0].mxu0 %v1422
        %v1687 = vpop.f32.mrb[0].mxu0
        %v1688 = vadd.f32 %v1575, %v1687
        %v1689 = vpop.f32.mrb[0].mxu0
        %v1690 = vpop.f32.mrb[0].mxu0
        %v1691 = vadd.f32 %v1578, %v1690
        %v1692 = vpop.f32.mrb[0].mxu0
        %1693 = vdwg.mxu0
        %v1694 = vld [vmem:[#allocation2 + $0x2] sm:$0xff]
        %v1695 = vld [vmem:[#allocation2 + $0xa] sm:$0xff]
        %v1696 = vld [vmem:[#allocation2 + $0x1a] sm:$0xff]
        %v1697 = vld [vmem:[#allocation2 + $0x22] sm:$0xff]
        %v1698 = vld [vmem:[#allocation2 + $0x32] sm:$0xff]
        %v1699 = vld [vmem:[#allocation2 + $0x3a] sm:$0xff]
        %v1700 = vld [vmem:[#allocation2 + $0x4a] sm:$0xff]
        %v1701 = vld [vmem:[#allocation2 + $0x52] sm:$0xff]
        %v1702 = vpack.c.bf16 %v1695, %v1694
        %v1703 = vpack.c.bf16 %v1697, %v1696
        %v1704 = vpack.c.bf16 %v1699, %v1698
        %v1705 = vpack.c.bf16 %v1701, %v1700
        %s1706 = scalar_lea.vmem [#allocation17], 128
        %v1707 = vld [vmem:[%s1706] sm:$0xf]
        %v1708 = vld [vmem:[%s1706 + $0x4] sm:$0xf]
        %v1709 = vld [vmem:[%s1706 + $0x8] sm:$0xf]
        %v1710 = vld [vmem:[%s1706 + $0xc] sm:$0xf]
        %v1711 = vld [vmem:[%s1706 + $0x10] sm:$0xf]
        %v1712 = vld [vmem:[%s1706 + $0x14] sm:$0xf]
        %v1713 = vld [vmem:[%s1706 + $0x18] sm:$0xf]
        %v1714 = vld [vmem:[%s1706 + $0x1c] sm:$0xf]
        %v1715 = vld [vmem:[%s1706 + $0x20] sm:$0xf]
        %v1716 = vld [vmem:[%s1706 + $0x24] sm:$0xf]
        %v1717 = vld [vmem:[%s1706 + $0x28] sm:$0xf]
        %v1718 = vld [vmem:[%s1706 + $0x2c] sm:$0xf]
        %v1719 = vld [vmem:[%s1706 + $0x30] sm:$0xf]
        %v1720 = vld [vmem:[%s1706 + $0x34] sm:$0xf]
        %v1721 = vld [vmem:[%s1706 + $0x38] sm:$0xf]
        %v1722 = vld [vmem:[%s1706 + $0x3c] sm:$0xf]
        %v1739 = vunpack.c.l.b16 %v1707
        %v1740 = vunpack.c.l.b16 %v1708
        %v1741 = vunpack.c.l.b16 %v1709
        %v1742 = vunpack.c.l.b16 %v1710
        %v1743 = vunpack.c.l.b16 %v1711
        %v1744 = vunpack.c.l.b16 %v1712
        %v1745 = vunpack.c.l.b16 %v1713
        %v1746 = vunpack.c.l.b16 %v1714
        %v1747 = vunpack.c.l.b16 %v1715
        %v1748 = vunpack.c.l.b16 %v1716
        %v1749 = vunpack.c.l.b16 %v1717
        %v1750 = vunpack.c.l.b16 %v1718
        %v1751 = vunpack.c.l.b16 %v1719
        %v1752 = vunpack.c.l.b16 %v1720
        %v1753 = vunpack.c.l.b16 %v1721
        %v1754 = vunpack.c.l.b16 %v1722
        %v1755 = vpack.c.b16 %v1740, %v1739
        %v1756 = vpack.c.b16 %v1742, %v1741
        %v1757 = vpack.c.b16 %v1744, %v1743
        %v1758 = vpack.c.b16 %v1746, %v1745
        %v1759 = vpack.c.b16 %v1748, %v1747
        %v1760 = vpack.c.b16 %v1750, %v1749
        %v1761 = vpack.c.b16 %v1752, %v1751
        %v1762 = vpack.c.b16 %v1754, %v1753
        %1771 = vmatprep.subr.bf16.mxu0 0
        %1772 = vmatpush1.bf16.msra.mxu0 %v1755
        %1773 = vmatprep.subr.bf16.mxu0 0
        %1774 = vmatpush1.bf16.msra.mxu0 %v1756
        %1775 = vmatprep.subr.bf16.mxu0 0
        %1776 = vmatpush1.bf16.msra.mxu0 %v1757
        %1777 = vmatprep.subr.bf16.mxu0 0
        %1778 = vmatpush1.bf16.msra.mxu0 %v1758
        %1779 = vmatprep.subr.bf16.mxu0 0
        %1780 = vmatpush1.bf16.msra.mxu0 %v1759
        %1781 = vmatprep.subr.bf16.mxu0 0
        %1782 = vmatpush1.bf16.msra.mxu0 %v1760
        %1783 = vmatprep.subr.bf16.mxu0 0
        %1784 = vmatpush1.bf16.msra.mxu0 %v1761
        %1785 = vmatprep.subr.bf16.mxu0 0
        %1786 = vmatpush1.bf16.msra.mxu0 %v1762
        %1787 = vmatprep.subr.bf16.mxu0 0
        %1788 = vmatpush1.bf16.msra.mxu0 0
        %1789 = vmatprep.subr.bf16.mxu0 0
        %1790 = vmatpush1.bf16.msra.mxu0 0
        %1791 = vmatprep.subr.bf16.mxu0 0
        %1792 = vmatpush1.bf16.msra.mxu0 0
        %1793 = vmatprep.subr.bf16.mxu0 0
        %1794 = vmatpush1.bf16.msra.mxu0 0
        %1795 = vmatprep.subr.bf16.mxu0 0
        %1796 = vmatpush1.bf16.msra.mxu0 0
        %1797 = vmatprep.subr.bf16.mxu0 0
        %1798 = vmatpush1.bf16.msra.mxu0 0
        %1799 = vmatprep.subr.bf16.mxu0 0
        %1800 = vmatpush1.bf16.msra.mxu0 0
        %1801 = vmatprep.subr.bf16.mxu0 0
        %1802 = vmatpush1.bf16.msra.mxu0 0
        %1803 = vmatprep.mubr.bf16.mxu0 0
        %1804 = vmatmul.mubr.bf16.gmra.mrb[0].mxu0 %v1702
        %v1805 = vpop.f32.mrb[0].mxu0
        %v1806 = vadd.f32 0.0, %v1805
        %v1807 = vpop.f32.mrb[0].mxu0
        %v1808 = vpop.f32.mrb[0].mxu0
        %v1809 = vadd.f32 0.0, %v1808
        %v1810 = vpop.f32.mrb[0].mxu0
        %1811 = vmatprep.mubr.bf16.mxu0 0
        %1812 = vmatmul.mubr.bf16.gmra.mrb[0].mxu0 %v1703
        %v1813 = vpop.f32.mrb[0].mxu0
        %v1814 = vadd.f32 0.0, %v1813
        %v1815 = vpop.f32.mrb[0].mxu0
        %v1816 = vpop.f32.mrb[0].mxu0
        %v1817 = vadd.f32 0.0, %v1816
        %v1818 = vpop.f32.mrb[0].mxu0
        %1819 = vmatprep.mubr.bf16.mxu0 0
        %1820 = vmatmul.mubr.bf16.gmra.mrb[0].mxu0 %v1704
        %v1821 = vpop.f32.mrb[0].mxu0
        %v1822 = vadd.f32 0.0, %v1821
        %v1823 = vpop.f32.mrb[0].mxu0
        %v1824 = vpop.f32.mrb[0].mxu0
        %v1825 = vadd.f32 0.0, %v1824
        %v1826 = vpop.f32.mrb[0].mxu0
        %1827 = vmatprep.mubr.bf16.mxu0 0
        %1828 = vmatmul.mubr.bf16.gmra.mrb[0].mxu0 %v1705
        %v1829 = vpop.f32.mrb[0].mxu0
        %v1830 = vadd.f32 0.0, %v1829
        %v1831 = vpop.f32.mrb[0].mxu0
        %v1832 = vpop.f32.mrb[0].mxu0
        %v1833 = vadd.f32 0.0, %v1832
        %v1834 = vpop.f32.mrb[0].mxu0
        %1835 = vdwg.mxu0
        %v1836 = vadd.f32 %v1664, %v1806
        %v1837 = vadd.f32 %v1667, %v1809
        %v1838 = vadd.f32 %v1672, %v1814
        %v1839 = vadd.f32 %v1675, %v1817
        %v1840 = vadd.f32 %v1680, %v1822
        %v1841 = vadd.f32 %v1683, %v1825
        %v1842 = vadd.f32 %v1688, %v1830
        %v1843 = vadd.f32 %v1691, %v1833
        %v1844 = vld [vmem:[%s1397] sm:$0xff]
        %v1845 = vld [vmem:[%s1397 + $0x8] sm:$0xff]
        %v1846 = vld [vmem:[%s1397 + $0x18] sm:$0xff]
        %v1847 = vld [vmem:[%s1397 + $0x20] sm:$0xff]
        %v1848 = vld [vmem:[%s1397 + $0x30] sm:$0xff]
        %v1849 = vld [vmem:[%s1397 + $0x38] sm:$0xff]
        %v1850 = vld [vmem:[%s1397 + $0x48] sm:$0xff]
        %v1851 = vld [vmem:[%s1397 + $0x50] sm:$0xff]
        %v1852 = vpack.c.bf16 %v1845, %v1844
        %v1853 = vpack.c.bf16 %v1847, %v1846
        %v1854 = vpack.c.bf16 %v1849, %v1848
        %v1855 = vpack.c.bf16 %v1851, %v1850
        %s1856 = scalar_lea.vmem [#allocation17], 192
        %v1857 = vld [vmem:[%s1856] sm:$0xf]
        %v1858 = vld [vmem:[%s1856 + $0x4] sm:$0xf]
        %v1859 = vld [vmem:[%s1856 + $0x8] sm:$0xf]
        %v1860 = vld [vmem:[%s1856 + $0xc] sm:$0xf]
        %v1861 = vld [vmem:[%s1856 + $0x10] sm:$0xf]
        %v1862 = vld [vmem:[%s1856 + $0x14] sm:$0xf]
        %v1863 = vld [vmem:[%s1856 + $0x18] sm:$0xf]
        %v1864 = vld [vmem:[%s1856 + $0x1c] sm:$0xf]
        %v1865 = vld [vmem:[%s1856 + $0x20] sm:$0xf]
        %v1866 = vld [vmem:[%s1856 + $0x24] sm:$0xf]
        %v1867 = vld [vmem:[%s1856 + $0x28] sm:$0xf]
        %v1868 = vld [vmem:[%s1856 + $0x2c] sm:$0xf]
        %v1869 = vld [vmem:[%s1856 + $0x30] sm:$0xf]
        %v1870 = vld [vmem:[%s1856 + $0x34] sm:$0xf]
        %v1871 = vld [vmem:[%s1856 + $0x38] sm:$0xf]
        %v1872 = vld [vmem:[%s1856 + $0x3c] sm:$0xf]
        %v1889 = vunpack.c.l.b16 %v1857
        %v1890 = vunpack.c.l.b16 %v1858
        %v1891 = vunpack.c.l.b16 %v1859
        %v1892 = vunpack.c.l.b16 %v1860
        %v1893 = vunpack.c.l.b16 %v1861
        %v1894 = vunpack.c.l.b16 %v1862
        %v1895 = vunpack.c.l.b16 %v1863
        %v1896 = vunpack.c.l.b16 %v1864
        %v1897 = vunpack.c.l.b16 %v1865
        %v1898 = vunpack.c.l.b16 %v1866
        %v1899 = vunpack.c.l.b16 %v1867
        %v1900 = vunpack.c.l.b16 %v1868
        %v1901 = vunpack.c.l.b16 %v1869
        %v1902 = vunpack.c.l.b16 %v1870
        %v1903 = vunpack.c.l.b16 %v1871
        %v1904 = vunpack.c.l.b16 %v1872
        %v1905 = vpack.c.b16 %v1890, %v1889
        %v1906 = vpack.c.b16 %v1892, %v1891
        %v1907 = vpack.c.b16 %v1894, %v1893
        %v1908 = vpack.c.b16 %v1896, %v1895
        %v1909 = vpack.c.b16 %v1898, %v1897
        %v1910 = vpack.c.b16 %v1900, %v1899
        %v1911 = vpack.c.b16 %v1902, %v1901
        %v1912 = vpack.c.b16 %v1904, %v1903
        %1921 = vmatprep.subr.bf16.mxu0 0
        %1922 = vmatpush1.bf16.msra.mxu0 %v1905
        %1923 = vmatprep.subr.bf16.mxu0 0
        %1924 = vmatpush1.bf16.msra.mxu0 %v1906
        %1925 = vmatprep.subr.bf16.mxu0 0
        %1926 = vmatpush1.bf16.msra.mxu0 %v1907
        %1927 = vmatprep.subr.bf16.mxu0 0
        %1928 = vmatpush1.bf16.msra.mxu0 %v1908
        %1929 = vmatprep.subr.bf16.mxu0 0
        %1930 = vmatpush1.bf16.msra.mxu0 %v1909
        %1931 = vmatprep.subr.bf16.mxu0 0
        %1932 = vmatpush1.bf16.msra.mxu0 %v1910
        %1933 = vmatprep.subr.bf16.mxu0 0
        %1934 = vmatpush1.bf16.msra.mxu0 %v1911
        %1935 = vmatprep.subr.bf16.mxu0 0
        %1936 = vmatpush1.bf16.msra.mxu0 %v1912
        %1937 = vmatprep.subr.bf16.mxu0 0
        %1938 = vmatpush1.bf16.msra.mxu0 0
        %1939 = vmatprep.subr.bf16.mxu0 0
        %1940 = vmatpush1.bf16.msra.mxu0 0
        %1941 = vmatprep.subr.bf16.mxu0 0
        %1942 = vmatpush1.bf16.msra.mxu0 0
        %1943 = vmatprep.subr.bf16.mxu0 0
        %1944 = vmatpush1.bf16.msra.mxu0 0
        %1945 = vmatprep.subr.bf16.mxu0 0
        %1946 = vmatpush1.bf16.msra.mxu0 0
        %1947 = vmatprep.subr.bf16.mxu0 0
        %1948 = vmatpush1.bf16.msra.mxu0 0
        %1949 = vmatprep.subr.bf16.mxu0 0
        %1950 = vmatpush1.bf16.msra.mxu0 0
        %1951 = vmatprep.subr.bf16.mxu0 0
        %1952 = vmatpush1.bf16.msra.mxu0 0
        %1953 = vmatprep.mubr.bf16.mxu0 0
        %1954 = vmatmul.mubr.bf16.gmra.mrb[0].mxu0 %v1852
        %v1955 = vpop.f32.mrb[0].mxu0
        %v1956 = vadd.f32 0.0, %v1955
        %v1957 = vpop.f32.mrb[0].mxu0
        %v1958 = vpop.f32.mrb[0].mxu0
        %v1959 = vadd.f32 0.0, %v1958
        %v1960 = vpop.f32.mrb[0].mxu0
        %1961 = vmatprep.mubr.bf16.mxu0 0
        %1962 = vmatmul.mubr.bf16.gmra.mrb[0].mxu0 %v1853
        %v1963 = vpop.f32.mrb[0].mxu0
        %v1964 = vadd.f32 0.0, %v1963
        %v1965 = vpop.f32.mrb[0].mxu0
        %v1966 = vpop.f32.mrb[0].mxu0
        %v1967 = vadd.f32 0.0, %v1966
        %v1968 = vpop.f32.mrb[0].mxu0
        %1969 = vmatprep.mubr.bf16.mxu0 0
        %1970 = vmatmul.mubr.bf16.gmra.mrb[0].mxu0 %v1854
        %v1971 = vpop.f32.mrb[0].mxu0
        %v1972 = vadd.f32 0.0, %v1971
        %v1973 = vpop.f32.mrb[0].mxu0
        %v1974 = vpop.f32.mrb[0].mxu0
        %v1975 = vadd.f32 0.0, %v1974
        %v1976 = vpop.f32.mrb[0].mxu0
        %1977 = vmatprep.mubr.bf16.mxu0 0
        %1978 = vmatmul.mubr.bf16.gmra.mrb[0].mxu0 %v1855
        %v1979 = vpop.f32.mrb[0].mxu0
        %v1980 = vadd.f32 0.0, %v1979
        %v1981 = vpop.f32.mrb[0].mxu0
        %v1982 = vpop.f32.mrb[0].mxu0
        %v1983 = vadd.f32 0.0, %v1982
        %v1984 = vpop.f32.mrb[0].mxu0
        %1985 = vdwg.mxu0
        %v1986 = vadd.f32 %v1836, %v1956
        %v1987 = vadd.f32 %v1837, %v1959
        %v1988 = vadd.f32 %v1838, %v1964
        %v1989 = vadd.f32 %v1839, %v1967
        %v1990 = vadd.f32 %v1840, %v1972
        %v1991 = vadd.f32 %v1841, %v1975
        %v1992 = vadd.f32 %v1842, %v1980
        %v1993 = vadd.f32 %v1843, %v1983
        %v1994 = vld [vmem:[%s1397 + $0x1] sm:$0xff]
        %v1995 = vld [vmem:[%s1397 + $0x9] sm:$0xff]
        %v1996 = vld [vmem:[%s1397 + $0x19] sm:$0xff]
        %v1997 = vld [vmem:[%s1397 + $0x21] sm:$0xff]
        %v1998 = vld [vmem:[%s1397 + $0x31] sm:$0xff]
        %v1999 = vld [vmem:[%s1397 + $0x39] sm:$0xff]
        %v2000 = vld [vmem:[%s1397 + $0x49] sm:$0xff]
        %v2001 = vld [vmem:[%s1397 + $0x51] sm:$0xff]
        %v2002 = vpack.c.bf16 %v1995, %v1994
        %v2003 = vpack.c.bf16 %v1997, %v1996
        %v2004 = vpack.c.bf16 %v1999, %v1998
        %v2005 = vpack.c.bf16 %v2001, %v2000
        %s2006 = scalar_lea.vmem [#allocation17], 256
        %v2007 = vld [vmem:[%s2006] sm:$0xf]
        %v2008 = vld [vmem:[%s2006 + $0x4] sm:$0xf]
        %v2009 = vld [vmem:[%s2006 + $0x8] sm:$0xf]
        %v2010 = vld [vmem:[%s2006 + $0xc] sm:$0xf]
        %v2011 = vld [vmem:[%s2006 + $0x10] sm:$0xf]
        %v2012 = vld [vmem:[%s2006 + $0x14] sm:$0xf]
        %v2013 = vld [vmem:[%s2006 + $0x18] sm:$0xf]
        %v2014 = vld [vmem:[%s2006 + $0x1c] sm:$0xf]
        %v2015 = vld [vmem:[%s2006 + $0x20] sm:$0xf]
        %v2016 = vld [vmem:[%s2006 + $0x24] sm:$0xf]
        %v2017 = vld [vmem:[%s2006 + $0x28] sm:$0xf]
        %v2018 = vld [vmem:[%s2006 + $0x2c] sm:$0xf]
        %v2019 = vld [vmem:[%s2006 + $0x30] sm:$0xf]
        %v2020 = vld [vmem:[%s2006 + $0x34] sm:$0xf]
        %v2021 = vld [vmem:[%s2006 + $0x38] sm:$0xf]
        %v2022 = vld [vmem:[%s2006 + $0x3c] sm:$0xf]
        %v2039 = vunpack.c.l.b16 %v2007
        %v2040 = vunpack.c.l.b16 %v2008
        %v2041 = vunpack.c.l.b16 %v2009
        %v2042 = vunpack.c.l.b16 %v2010
        %v2043 = vunpack.c.l.b16 %v2011
        %v2044 = vunpack.c.l.b16 %v2012
        %v2045 = vunpack.c.l.b16 %v2013
        %v2046 = vunpack.c.l.b16 %v2014
        %v2047 = vunpack.c.l.b16 %v2015
        %v2048 = vunpack.c.l.b16 %v2016
        %v2049 = vunpack.c.l.b16 %v2017
        %v2050 = vunpack.c.l.b16 %v2018
        %v2051 = vunpack.c.l.b16 %v2019
        %v2052 = vunpack.c.l.b16 %v2020
        %v2053 = vunpack.c.l.b16 %v2021
        %v2054 = vunpack.c.l.b16 %v2022
        %v2055 = vpack.c.b16 %v2040, %v2039
        %v2056 = vpack.c.b16 %v2042, %v2041
        %v2057 = vpack.c.b16 %v2044, %v2043
        %v2058 = vpack.c.b16 %v2046, %v2045
        %v2059 = vpack.c.b16 %v2048, %v2047
        %v2060 = vpack.c.b16 %v2050, %v2049
        %v2061 = vpack.c.b16 %v2052, %v2051
        %v2062 = vpack.c.b16 %v2054, %v2053
        %2071 = vmatprep.subr.bf16.mxu0 0
        %2072 = vmatpush1.bf16.msra.mxu0 %v2055
        %2073 = vmatprep.subr.bf16.mxu0 0
        %2074 = vmatpush1.bf16.msra.mxu0 %v2056
        %2075 = vmatprep.subr.bf16.mxu0 0
        %2076 = vmatpush1.bf16.msra.mxu0 %v2057
        %2077 = vmatprep.subr.bf16.mxu0 0
        %2078 = vmatpush1.bf16.msra.mxu0 %v2058
        %2079 = vmatprep.subr.bf16.mxu0 0
        %2080 = vmatpush1.bf16.msra.mxu0 %v2059
        %2081 = vmatprep.subr.bf16.mxu0 0
        %2082 = vmatpush1.bf16.msra.mxu0 %v2060
        %2083 = vmatprep.subr.bf16.mxu0 0
        %2084 = vmatpush1.bf16.msra.mxu0 %v2061
        %2085 = vmatprep.subr.bf16.mxu0 0
        %2086 = vmatpush1.bf16.msra.mxu0 %v2062
        %2087 = vmatprep.subr.bf16.mxu0 0
        %2088 = vmatpush1.bf16.msra.mxu0 0
        %2089 = vmatprep.subr.bf16.mxu0 0
        %2090 = vmatpush1.bf16.msra.mxu0 0
        %2091 = vmatprep.subr.bf16.mxu0 0
        %2092 = vmatpush1.bf16.msra.mxu0 0
        %2093 = vmatprep.subr.bf16.mxu0 0
        %2094 = vmatpush1.bf16.msra.mxu0 0
        %2095 = vmatprep.subr.bf16.mxu0 0
        %2096 = vmatpush1.bf16.msra.mxu0 0
        %2097 = vmatprep.subr.bf16.mxu0 0
        %2098 = vmatpush1.bf16.msra.mxu0 0
        %2099 = vmatprep.subr.bf16.mxu0 0
        %2100 = vmatpush1.bf16.msra.mxu0 0
        %2101 = vmatprep.subr.bf16.mxu0 0
        %2102 = vmatpush1.bf16.msra.mxu0 0
        %2103 = vmatprep.mubr.bf16.mxu0 0
        %2104 = vmatmul.mubr.bf16.gmra.mrb[0].mxu0 %v2002
        %v2105 = vpop.f32.mrb[0].mxu0
        %v2106 = vadd.f32 0.0, %v2105
        %v2107 = vpop.f32.mrb[0].mxu0
        %v2108 = vpop.f32.mrb[0].mxu0
        %v2109 = vadd.f32 0.0, %v2108
        %v2110 = vpop.f32.mrb[0].mxu0
        %2111 = vmatprep.mubr.bf16.mxu0 0
        %2112 = vmatmul.mubr.bf16.gmra.mrb[0].mxu0 %v2003
        %v2113 = vpop.f32.mrb[0].mxu0
        %v2114 = vadd.f32 0.0, %v2113
        %v2115 = vpop.f32.mrb[0].mxu0
        %v2116 = vpop.f32.mrb[0].mxu0
        %v2117 = vadd.f32 0.0, %v2116
        %v2118 = vpop.f32.mrb[0].mxu0
        %2119 = vmatprep.mubr.bf16.mxu0 0
        %2120 = vmatmul.mubr.bf16.gmra.mrb[0].mxu0 %v2004
        %v2121 = vpop.f32.mrb[0].mxu0
        %v2122 = vadd.f32 0.0, %v2121
        %v2123 = vpop.f32.mrb[0].mxu0
        %v2124 = vpop.f32.mrb[0].mxu0
        %v2125 = vadd.f32 0.0, %v2124
        %v2126 = vpop.f32.mrb[0].mxu0
        %2127 = vmatprep.mubr.bf16.mxu0 0
        %2128 = vmatmul.mubr.bf16.gmra.mrb[0].mxu0 %v2005
        %v2129 = vpop.f32.mrb[0].mxu0
        %v2130 = vadd.f32 0.0, %v2129
        %v2131 = vpop.f32.mrb[0].mxu0
        %v2132 = vpop.f32.mrb[0].mxu0
        %v2133 = vadd.f32 0.0, %v2132
        %v2134 = vpop.f32.mrb[0].mxu0
        %2135 = vdwg.mxu0
        %v2136 = vadd.f32 %v1986, %v2106
        %v2137 = vadd.f32 %v1987, %v2109
        %v2138 = vadd.f32 %v1988, %v2114
        %v2139 = vadd.f32 %v1989, %v2117
        %v2140 = vadd.f32 %v1990, %v2122
        %v2141 = vadd.f32 %v1991, %v2125
        %v2142 = vadd.f32 %v1992, %v2130
        %v2143 = vadd.f32 %v1993, %v2133
        %v2144 = vld [vmem:[%s1397 + $0x2] sm:$0xff]
        %v2145 = vld [vmem:[%s1397 + $0xa] sm:$0xff]
        %v2146 = vld [vmem:[%s1397 + $0x1a] sm:$0xff]
        %v2147 = vld [vmem:[%s1397 + $0x22] sm:$0xff]
        %v2148 = vld [vmem:[%s1397 + $0x32] sm:$0xff]
        %v2149 = vld [vmem:[%s1397 + $0x3a] sm:$0xff]
        %v2150 = vld [vmem:[%s1397 + $0x4a] sm:$0xff]
        %v2151 = vld [vmem:[%s1397 + $0x52] sm:$0xff]
        %v2152 = vpack.c.bf16 %v2145, %v2144
        %v2153 = vpack.c.bf16 %v2147, %v2146
        %v2154 = vpack.c.bf16 %v2149, %v2148
        %v2155 = vpack.c.bf16 %v2151, %v2150
        %s2156 = scalar_lea.vmem [#allocation17], 320
        %v2157 = vld [vmem:[%s2156] sm:$0xf]
        %v2158 = vld [vmem:[%s2156 + $0x4] sm:$0xf]
        %v2159 = vld [vmem:[%s2156 + $0x8] sm:$0xf]
        %v2160 = vld [vmem:[%s2156 + $0xc] sm:$0xf]
        %v2161 = vld [vmem:[%s2156 + $0x10] sm:$0xf]
        %v2162 = vld [vmem:[%s2156 + $0x14] sm:$0xf]
        %v2163 = vld [vmem:[%s2156 + $0x18] sm:$0xf]
        %v2164 = vld [vmem:[%s2156 + $0x1c] sm:$0xf]
        %v2165 = vld [vmem:[%s2156 + $0x20] sm:$0xf]
        %v2166 = vld [vmem:[%s2156 + $0x24] sm:$0xf]
        %v2167 = vld [vmem:[%s2156 + $0x28] sm:$0xf]
        %v2168 = vld [vmem:[%s2156 + $0x2c] sm:$0xf]
        %v2169 = vld [vmem:[%s2156 + $0x30] sm:$0xf]
        %v2170 = vld [vmem:[%s2156 + $0x34] sm:$0xf]
        %v2171 = vld [vmem:[%s2156 + $0x38] sm:$0xf]
        %v2172 = vld [vmem:[%s2156 + $0x3c] sm:$0xf]
        %v2189 = vunpack.c.l.b16 %v2157
        %v2190 = vunpack.c.l.b16 %v2158
        %v2191 = vunpack.c.l.b16 %v2159
        %v2192 = vunpack.c.l.b16 %v2160
        %v2193 = vunpack.c.l.b16 %v2161
        %v2194 = vunpack.c.l.b16 %v2162
        %v2195 = vunpack.c.l.b16 %v2163
        %v2196 = vunpack.c.l.b16 %v2164
        %v2197 = vunpack.c.l.b16 %v2165
        %v2198 = vunpack.c.l.b16 %v2166
        %v2199 = vunpack.c.l.b16 %v2167
        %v2200 = vunpack.c.l.b16 %v2168
        %v2201 = vunpack.c.l.b16 %v2169
        %v2202 = vunpack.c.l.b16 %v2170
        %v2203 = vunpack.c.l.b16 %v2171
        %v2204 = vunpack.c.l.b16 %v2172
        %v2205 = vpack.c.b16 %v2190, %v2189
        %v2206 = vpack.c.b16 %v2192, %v2191
        %v2207 = vpack.c.b16 %v2194, %v2193
        %v2208 = vpack.c.b16 %v2196, %v2195
        %v2209 = vpack.c.b16 %v2198, %v2197
        %v2210 = vpack.c.b16 %v2200, %v2199
        %v2211 = vpack.c.b16 %v2202, %v2201
        %v2212 = vpack.c.b16 %v2204, %v2203
        %2221 = vmatprep.subr.bf16.mxu0 0
        %2222 = vmatpush1.bf16.msra.mxu0 %v2205
        %2223 = vmatprep.subr.bf16.mxu0 0
        %2224 = vmatpush1.bf16.msra.mxu0 %v2206
        %2225 = vmatprep.subr.bf16.mxu0 0
        %2226 = vmatpush1.bf16.msra.mxu0 %v2207
        %2227 = vmatprep.subr.bf16.mxu0 0
        %2228 = vmatpush1.bf16.msra.mxu0 %v2208
        %2229 = vmatprep.subr.bf16.mxu0 0
        %2230 = vmatpush1.bf16.msra.mxu0 %v2209
        %2231 = vmatprep.subr.bf16.mxu0 0
        %2232 = vmatpush1.bf16.msra.mxu0 %v2210
        %2233 = vmatprep.subr.bf16.mxu0 0
        %2234 = vmatpush1.bf16.msra.mxu0 %v2211
        %2235 = vmatprep.subr.bf16.mxu0 0
        %2236 = vmatpush1.bf16.msra.mxu0 %v2212
        %2237 = vmatprep.subr.bf16.mxu0 0
        %2238 = vmatpush1.bf16.msra.mxu0 0
        %2239 = vmatprep.subr.bf16.mxu0 0
        %2240 = vmatpush1.bf16.msra.mxu0 0
        %2241 = vmatprep.subr.bf16.mxu0 0
        %2242 = vmatpush1.bf16.msra.mxu0 0
        %2243 = vmatprep.subr.bf16.mxu0 0
        %2244 = vmatpush1.bf16.msra.mxu0 0
        %2245 = vmatprep.subr.bf16.mxu0 0
        %2246 = vmatpush1.bf16.msra.mxu0 0
        %2247 = vmatprep.subr.bf16.mxu0 0
        %2248 = vmatpush1.bf16.msra.mxu0 0
        %2249 = vmatprep.subr.bf16.mxu0 0
        %2250 = vmatpush1.bf16.msra.mxu0 0
        %2251 = vmatprep.subr.bf16.mxu0 0
        %2252 = vmatpush1.bf16.msra.mxu0 0
        %2253 = vmatprep.mubr.bf16.mxu0 0
        %2254 = vmatmul.mubr.bf16.gmra.mrb[0].mxu0 %v2152
        %v2255 = vpop.f32.mrb[0].mxu0
        %v2256 = vadd.f32 0.0, %v2255
        %v2257 = vpop.f32.mrb[0].mxu0
        %v2258 = vpop.f32.mrb[0].mxu0
        %v2259 = vadd.f32 0.0, %v2258
        %v2260 = vpop.f32.mrb[0].mxu0
        %2261 = vmatprep.mubr.bf16.mxu0 0
        %2262 = vmatmul.mubr.bf16.gmra.mrb[0].mxu0 %v2153
        %v2263 = vpop.f32.mrb[0].mxu0
        %v2264 = vadd.f32 0.0, %v2263
        %v2265 = vpop.f32.mrb[0].mxu0
        %v2266 = vpop.f32.mrb[0].mxu0
        %v2267 = vadd.f32 0.0, %v2266
        %v2268 = vpop.f32.mrb[0].mxu0
        %2269 = vmatprep.mubr.bf16.mxu0 0
        %2270 = vmatmul.mubr.bf16.gmra.mrb[0].mxu0 %v2154
        %v2271 = vpop.f32.mrb[0].mxu0
        %v2272 = vadd.f32 0.0, %v2271
        %v2273 = vpop.f32.mrb[0].mxu0
        %v2274 = vpop.f32.mrb[0].mxu0
        %v2275 = vadd.f32 0.0, %v2274
        %v2276 = vpop.f32.mrb[0].mxu0
        %2277 = vmatprep.mubr.bf16.mxu0 0
        %2278 = vmatmul.mubr.bf16.gmra.mrb[0].mxu0 %v2155
        %v2279 = vpop.f32.mrb[0].mxu0
        %v2280 = vadd.f32 0.0, %v2279
        %v2281 = vpop.f32.mrb[0].mxu0
        %v2282 = vpop.f32.mrb[0].mxu0
        %v2283 = vadd.f32 0.0, %v2282
        %v2284 = vpop.f32.mrb[0].mxu0
        %2285 = vdwg.mxu0
        %v2286 = vadd.f32 %v2136, %v2256
        %v2287 = vadd.f32 %v2137, %v2259
        %v2288 = vadd.f32 %v2138, %v2264
        %v2289 = vadd.f32 %v2139, %v2267
        %v2290 = vadd.f32 %v2140, %v2272
        %v2291 = vadd.f32 %v2141, %v2275
        %v2292 = vadd.f32 %v2142, %v2280
        %v2293 = vadd.f32 %v2143, %v2283
        %s2294 = scalar_lea.vmem [#allocation2], 48
        %v2295 = vld [vmem:[%s2294] sm:$0xff]
        %v2296 = vld [vmem:[%s2294 + $0x8] sm:$0xff]
        %v2297 = vld [vmem:[%s2294 + $0x18] sm:$0xff]
        %v2298 = vld [vmem:[%s2294 + $0x20] sm:$0xff]
        %v2299 = vld [vmem:[%s2294 + $0x30] sm:$0xff]
        %v2300 = vld [vmem:[%s2294 + $0x38] sm:$0xff]
        %v2301 = vld [vmem:[%s2294 + $0x48] sm:$0xff]
        %v2302 = vld [vmem:[%s2294 + $0x50] sm:$0xff]
        %v2303 = vpack.c.bf16 %v2296, %v2295
        %v2304 = vpack.c.bf16 %v2298, %v2297
        %v2305 = vpack.c.bf16 %v2300, %v2299
        %v2306 = vpack.c.bf16 %v2302, %v2301
        %s2307 = scalar_lea.vmem [#allocation17], 384
        %v2308 = vld [vmem:[%s2307] sm:$0xf]
        %v2309 = vld [vmem:[%s2307 + $0x4] sm:$0xf]
        %v2310 = vld [vmem:[%s2307 + $0x8] sm:$0xf]
        %v2311 = vld [vmem:[%s2307 + $0xc] sm:$0xf]
        %v2312 = vld [vmem:[%s2307 + $0x10] sm:$0xf]
        %v2313 = vld [vmem:[%s2307 + $0x14] sm:$0xf]
        %v2314 = vld [vmem:[%s2307 + $0x18] sm:$0xf]
        %v2315 = vld [vmem:[%s2307 + $0x1c] sm:$0xf]
        %v2316 = vld [vmem:[%s2307 + $0x20] sm:$0xf]
        %v2317 = vld [vmem:[%s2307 + $0x24] sm:$0xf]
        %v2318 = vld [vmem:[%s2307 + $0x28] sm:$0xf]
        %v2319 = vld [vmem:[%s2307 + $0x2c] sm:$0xf]
        %v2320 = vld [vmem:[%s2307 + $0x30] sm:$0xf]
        %v2321 = vld [vmem:[%s2307 + $0x34] sm:$0xf]
        %v2322 = vld [vmem:[%s2307 + $0x38] sm:$0xf]
        %v2323 = vld [vmem:[%s2307 + $0x3c] sm:$0xf]
        %v2340 = vunpack.c.l.b16 %v2308
        %v2341 = vunpack.c.l.b16 %v2309
        %v2342 = vunpack.c.l.b16 %v2310
        %v2343 = vunpack.c.l.b16 %v2311
        %v2344 = vunpack.c.l.b16 %v2312
        %v2345 = vunpack.c.l.b16 %v2313
        %v2346 = vunpack.c.l.b16 %v2314
        %v2347 = vunpack.c.l.b16 %v2315
        %v2348 = vunpack.c.l.b16 %v2316
        %v2349 = vunpack.c.l.b16 %v2317
        %v2350 = vunpack.c.l.b16 %v2318
        %v2351 = vunpack.c.l.b16 %v2319
        %v2352 = vunpack.c.l.b16 %v2320
        %v2353 = vunpack.c.l.b16 %v2321
        %v2354 = vunpack.c.l.b16 %v2322
        %v2355 = vunpack.c.l.b16 %v2323
        %v2356 = vpack.c.b16 %v2341, %v2340
        %v2357 = vpack.c.b16 %v2343, %v2342
        %v2358 = vpack.c.b16 %v2345, %v2344
        %v2359 = vpack.c.b16 %v2347, %v2346
        %v2360 = vpack.c.b16 %v2349, %v2348
        %v2361 = vpack.c.b16 %v2351, %v2350
        %v2362 = vpack.c.b16 %v2353, %v2352
        %v2363 = vpack.c.b16 %v2355, %v2354
        %2372 = vmatprep.subr.bf16.mxu0 0
        %2373 = vmatpush1.bf16.msra.mxu0 %v2356
        %2374 = vmatprep.subr.bf16.mxu0 0
        %2375 = vmatpush1.bf16.msra.mxu0 %v2357
        %2376 = vmatprep.subr.bf16.mxu0 0
        %2377 = vmatpush1.bf16.msra.mxu0 %v2358
        %2378 = vmatprep.subr.bf16.mxu0 0
        %2379 = vmatpush1.bf16.msra.mxu0 %v2359
        %2380 = vmatprep.subr.bf16.mxu0 0
        %2381 = vmatpush1.bf16.msra.mxu0 %v2360
        %2382 = vmatprep.subr.bf16.mxu0 0
        %2383 = vmatpush1.bf16.msra.mxu0 %v2361
        %2384 = vmatprep.subr.bf16.mxu0 0
        %2385 = vmatpush1.bf16.msra.mxu0 %v2362
        %2386 = vmatprep.subr.bf16.mxu0 0
        %2387 = vmatpush1.bf16.msra.mxu0 %v2363
        %2388 = vmatprep.subr.bf16.mxu0 0
        %2389 = vmatpush1.bf16.msra.mxu0 0
        %2390 = vmatprep.subr.bf16.mxu0 0
        %2391 = vmatpush1.bf16.msra.mxu0 0
        %2392 = vmatprep.subr.bf16.mxu0 0
        %2393 = vmatpush1.bf16.msra.mxu0 0
        %2394 = vmatprep.subr.bf16.mxu0 0
        %2395 = vmatpush1.bf16.msra.mxu0 0
        %2396 = vmatprep.subr.bf16.mxu0 0
        %2397 = vmatpush1.bf16.msra.mxu0 0
        %2398 = vmatprep.subr.bf16.mxu0 0
        %2399 = vmatpush1.bf16.msra.mxu0 0
        %2400 = vmatprep.subr.bf16.mxu0 0
        %2401 = vmatpush1.bf16.msra.mxu0 0
        %2402 = vmatprep.subr.bf16.mxu0 0
        %2403 = vmatpush1.bf16.msra.mxu0 0
        %2404 = vmatprep.mubr.bf16.mxu0 0
        %2405 = vmatmul.mubr.bf16.gmra.mrb[0].mxu0 %v2303
        %v2406 = vpop.f32.mrb[0].mxu0
        %v2407 = vadd.f32 0.0, %v2406
        %v2408 = vpop.f32.mrb[0].mxu0
        %v2409 = vpop.f32.mrb[0].mxu0
        %v2410 = vadd.f32 0.0, %v2409
        %v2411 = vpop.f32.mrb[0].mxu0
        %2412 = vmatprep.mubr.bf16.mxu0 0
        %2413 = vmatmul.mubr.bf16.gmra.mrb[0].mxu0 %v2304
        %v2414 = vpop.f32.mrb[0].mxu0
        %v2415 = vadd.f32 0.0, %v2414
        %v2416 = vpop.f32.mrb[0].mxu0
        %v2417 = vpop.f32.mrb[0].mxu0
        %v2418 = vadd.f32 0.0, %v2417
        %v2419 = vpop.f32.mrb[0].mxu0
        %2420 = vmatprep.mubr.bf16.mxu0 0
        %2421 = vmatmul.mubr.bf16.gmra.mrb[0].mxu0 %v2305
        %v2422 = vpop.f32.mrb[0].mxu0
        %v2423 = vadd.f32 0.0, %v2422
        %v2424 = vpop.f32.mrb[0].mxu0
        %v2425 = vpop.f32.mrb[0].mxu0
        %v2426 = vadd.f32 0.0, %v2425
        %v2427 = vpop.f32.mrb[0].mxu0
        %2428 = vmatprep.mubr.bf16.mxu0 0
        %2429 = vmatmul.mubr.bf16.gmra.mrb[0].mxu0 %v2306
        %v2430 = vpop.f32.mrb[0].mxu0
        %v2431 = vadd.f32 0.0, %v2430
        %v2432 = vpop.f32.mrb[0].mxu0
        %v2433 = vpop.f32.mrb[0].mxu0
        %v2434 = vadd.f32 0.0, %v2433
        %v2435 = vpop.f32.mrb[0].mxu0
        %2436 = vdwg.mxu0
        %v2437 = vadd.f32 %v2286, %v2407
        %v2438 = vadd.f32 %v2287, %v2410
        %v2439 = vadd.f32 %v2288, %v2415
        %v2440 = vadd.f32 %v2289, %v2418
        %v2441 = vadd.f32 %v2290, %v2423
        %v2442 = vadd.f32 %v2291, %v2426
        %v2443 = vadd.f32 %v2292, %v2431
        %v2444 = vadd.f32 %v2293, %v2434
        %v2445 = vld [vmem:[%s2294 + $0x1] sm:$0xff]
        %v2446 = vld [vmem:[%s2294 + $0x9] sm:$0xff]
        %v2447 = vld [vmem:[%s2294 + $0x19] sm:$0xff]
        %v2448 = vld [vmem:[%s2294 + $0x21] sm:$0xff]
        %v2449 = vld [vmem:[%s2294 + $0x31] sm:$0xff]
        %v2450 = vld [vmem:[%s2294 + $0x39] sm:$0xff]
        %v2451 = vld [vmem:[%s2294 + $0x49] sm:$0xff]
        %v2452 = vld [vmem:[%s2294 + $0x51] sm:$0xff]
        %v2453 = vpack.c.bf16 %v2446, %v2445
        %v2454 = vpack.c.bf16 %v2448, %v2447
        %v2455 = vpack.c.bf16 %v2450, %v2449
        %v2456 = vpack.c.bf16 %v2452, %v2451
        %s2457 = scalar_lea.vmem [#allocation17], 448
        %v2458 = vld [vmem:[%s2457] sm:$0xf]
        %v2459 = vld [vmem:[%s2457 + $0x4] sm:$0xf]
        %v2460 = vld [vmem:[%s2457 + $0x8] sm:$0xf]
        %v2461 = vld [vmem:[%s2457 + $0xc] sm:$0xf]
        %v2462 = vld [vmem:[%s2457 + $0x10] sm:$0xf]
        %v2463 = vld [vmem:[%s2457 + $0x14] sm:$0xf]
        %v2464 = vld [vmem:[%s2457 + $0x18] sm:$0xf]
        %v2465 = vld [vmem:[%s2457 + $0x1c] sm:$0xf]
        %v2466 = vld [vmem:[%s2457 + $0x20] sm:$0xf]
        %v2467 = vld [vmem:[%s2457 + $0x24] sm:$0xf]
        %v2468 = vld [vmem:[%s2457 + $0x28] sm:$0xf]
        %v2469 = vld [vmem:[%s2457 + $0x2c] sm:$0xf]
        %v2470 = vld [vmem:[%s2457 + $0x30] sm:$0xf]
        %v2471 = vld [vmem:[%s2457 + $0x34] sm:$0xf]
        %v2472 = vld [vmem:[%s2457 + $0x38] sm:$0xf]
        %v2473 = vld [vmem:[%s2457 + $0x3c] sm:$0xf]
        %v2490 = vunpack.c.l.b16 %v2458
        %v2491 = vunpack.c.l.b16 %v2459
        %v2492 = vunpack.c.l.b16 %v2460
        %v2493 = vunpack.c.l.b16 %v2461
        %v2494 = vunpack.c.l.b16 %v2462
        %v2495 = vunpack.c.l.b16 %v2463
        %v2496 = vunpack.c.l.b16 %v2464
        %v2497 = vunpack.c.l.b16 %v2465
        %v2498 = vunpack.c.l.b16 %v2466
        %v2499 = vunpack.c.l.b16 %v2467
        %v2500 = vunpack.c.l.b16 %v2468
        %v2501 = vunpack.c.l.b16 %v2469
        %v2502 = vunpack.c.l.b16 %v2470
        %v2503 = vunpack.c.l.b16 %v2471
        %v2504 = vunpack.c.l.b16 %v2472
        %v2505 = vunpack.c.l.b16 %v2473
        %v2506 = vpack.c.b16 %v2491, %v2490
        %v2507 = vpack.c.b16 %v2493, %v2492
        %v2508 = vpack.c.b16 %v2495, %v2494
        %v2509 = vpack.c.b16 %v2497, %v2496
        %v2510 = vpack.c.b16 %v2499, %v2498
        %v2511 = vpack.c.b16 %v2501, %v2500
        %v2512 = vpack.c.b16 %v2503, %v2502
        %v2513 = vpack.c.b16 %v2505, %v2504
        %2522 = vmatprep.subr.bf16.mxu0 0
        %2523 = vmatpush1.bf16.msra.mxu0 %v2506
        %2524 = vmatprep.subr.bf16.mxu0 0
        %2525 = vmatpush1.bf16.msra.mxu0 %v2507
        %2526 = vmatprep.subr.bf16.mxu0 0
        %2527 = vmatpush1.bf16.msra.mxu0 %v2508
        %2528 = vmatprep.subr.bf16.mxu0 0
        %2529 = vmatpush1.bf16.msra.mxu0 %v2509
        %2530 = vmatprep.subr.bf16.mxu0 0
        %2531 = vmatpush1.bf16.msra.mxu0 %v2510
        %2532 = vmatprep.subr.bf16.mxu0 0
        %2533 = vmatpush1.bf16.msra.mxu0 %v2511
        %2534 = vmatprep.subr.bf16.mxu0 0
        %2535 = vmatpush1.bf16.msra.mxu0 %v2512
        %2536 = vmatprep.subr.bf16.mxu0 0
        %2537 = vmatpush1.bf16.msra.mxu0 %v2513
        %2538 = vmatprep.subr.bf16.mxu0 0
        %2539 = vmatpush1.bf16.msra.mxu0 0
        %2540 = vmatprep.subr.bf16.mxu0 0
        %2541 = vmatpush1.bf16.msra.mxu0 0
        %2542 = vmatprep.subr.bf16.mxu0 0
        %2543 = vmatpush1.bf16.msra.mxu0 0
        %2544 = vmatprep.subr.bf16.mxu0 0
        %2545 = vmatpush1.bf16.msra.mxu0 0
        %2546 = vmatprep.subr.bf16.mxu0 0
        %2547 = vmatpush1.bf16.msra.mxu0 0
        %2548 = vmatprep.subr.bf16.mxu0 0
        %2549 = vmatpush1.bf16.msra.mxu0 0
        %2550 = vmatprep.subr.bf16.mxu0 0
        %2551 = vmatpush1.bf16.msra.mxu0 0
        %2552 = vmatprep.subr.bf16.mxu0 0
        %2553 = vmatpush1.bf16.msra.mxu0 0
        %2554 = vmatprep.mubr.bf16.mxu0 0
        %2555 = vmatmul.mubr.bf16.gmra.mrb[0].mxu0 %v2453
        %v2556 = vpop.f32.mrb[0].mxu0
        %v2557 = vadd.f32 0.0, %v2556
        %v2558 = vpop.f32.mrb[0].mxu0
        %v2559 = vpop.f32.mrb[0].mxu0
        %v2560 = vadd.f32 0.0, %v2559
        %v2561 = vpop.f32.mrb[0].mxu0
        %2562 = vmatprep.mubr.bf16.mxu0 0
        %2563 = vmatmul.mubr.bf16.gmra.mrb[0].mxu0 %v2454
        %v2564 = vpop.f32.mrb[0].mxu0
        %v2565 = vadd.f32 0.0, %v2564
        %v2566 = vpop.f32.mrb[0].mxu0
        %v2567 = vpop.f32.mrb[0].mxu0
        %v2568 = vadd.f32 0.0, %v2567
        %v2569 = vpop.f32.mrb[0].mxu0
        %2570 = vmatprep.mubr.bf16.mxu0 0
        %2571 = vmatmul.mubr.bf16.gmra.mrb[0].mxu0 %v2455
        %v2572 = vpop.f32.mrb[0].mxu0
        %v2573 = vadd.f32 0.0, %v2572
        %v2574 = vpop.f32.mrb[0].mxu0
        %v2575 = vpop.f32.mrb[0].mxu0
        %v2576 = vadd.f32 0.0, %v2575
        %v2577 = vpop.f32.mrb[0].mxu0
        %2578 = vmatprep.mubr.bf16.mxu0 0
        %2579 = vmatmul.mubr.bf16.gmra.mrb[0].mxu0 %v2456
        %v2580 = vpop.f32.mrb[0].mxu0
        %v2581 = vadd.f32 0.0, %v2580
        %v2582 = vpop.f32.mrb[0].mxu0
        %v2583 = vpop.f32.mrb[0].mxu0
        %v2584 = vadd.f32 0.0, %v2583
        %v2585 = vpop.f32.mrb[0].mxu0
        %2586 = vdwg.mxu0
        %v2587 = vadd.f32 %v2437, %v2557
        %v2588 = vadd.f32 %v2438, %v2560
        %v2589 = vadd.f32 %v2439, %v2565
        %v2590 = vadd.f32 %v2440, %v2568
        %v2591 = vadd.f32 %v2441, %v2573
        %v2592 = vadd.f32 %v2442, %v2576
        %v2593 = vadd.f32 %v2443, %v2581
        %v2594 = vadd.f32 %v2444, %v2584
        %v2595 = vld [vmem:[%s2294 + $0x2] sm:$0xff]
        %v2596 = vld [vmem:[%s2294 + $0xa] sm:$0xff]
        %v2597 = vld [vmem:[%s2294 + $0x1a] sm:$0xff]
        %v2598 = vld [vmem:[%s2294 + $0x22] sm:$0xff]
        %v2599 = vld [vmem:[%s2294 + $0x32] sm:$0xff]
        %v2600 = vld [vmem:[%s2294 + $0x3a] sm:$0xff]
        %v2601 = vld [vmem:[%s2294 + $0x4a] sm:$0xff]
        %v2602 = vld [vmem:[%s2294 + $0x52] sm:$0xff]
        %v2603 = vpack.c.bf16 %v2596, %v2595
        %v2604 = vpack.c.bf16 %v2598, %v2597
        %v2605 = vpack.c.bf16 %v2600, %v2599
        %v2606 = vpack.c.bf16 %v2602, %v2601
        %s2607 = scalar_lea.vmem [#allocation17], 512
        %v2608 = vld [vmem:[%s2607] sm:$0xf]
        %v2609 = vld [vmem:[%s2607 + $0x4] sm:$0xf]
        %v2610 = vld [vmem:[%s2607 + $0x8] sm:$0xf]
        %v2611 = vld [vmem:[%s2607 + $0xc] sm:$0xf]
        %v2612 = vld [vmem:[%s2607 + $0x10] sm:$0xf]
        %v2613 = vld [vmem:[%s2607 + $0x14] sm:$0xf]
        %v2614 = vld [vmem:[%s2607 + $0x18] sm:$0xf]
        %v2615 = vld [vmem:[%s2607 + $0x1c] sm:$0xf]
        %v2616 = vld [vmem:[%s2607 + $0x20] sm:$0xf]
        %v2617 = vld [vmem:[%s2607 + $0x24] sm:$0xf]
        %v2618 = vld [vmem:[%s2607 + $0x28] sm:$0xf]
        %v2619 = vld [vmem:[%s2607 + $0x2c] sm:$0xf]
        %v2620 = vld [vmem:[%s2607 + $0x30] sm:$0xf]
        %v2621 = vld [vmem:[%s2607 + $0x34] sm:$0xf]
        %v2622 = vld [vmem:[%s2607 + $0x38] sm:$0xf]
        %v2623 = vld [vmem:[%s2607 + $0x3c] sm:$0xf]
        %v2640 = vunpack.c.l.b16 %v2608
        %v2641 = vunpack.c.l.b16 %v2609
        %v2642 = vunpack.c.l.b16 %v2610
        %v2643 = vunpack.c.l.b16 %v2611
        %v2644 = vunpack.c.l.b16 %v2612
        %v2645 = vunpack.c.l.b16 %v2613
        %v2646 = vunpack.c.l.b16 %v2614
        %v2647 = vunpack.c.l.b16 %v2615
        %v2648 = vunpack.c.l.b16 %v2616
        %v2649 = vunpack.c.l.b16 %v2617
        %v2650 = vunpack.c.l.b16 %v2618
        %v2651 = vunpack.c.l.b16 %v2619
        %v2652 = vunpack.c.l.b16 %v2620
        %v2653 = vunpack.c.l.b16 %v2621
        %v2654 = vunpack.c.l.b16 %v2622
        %v2655 = vunpack.c.l.b16 %v2623
        %v2656 = vpack.c.b16 %v2641, %v2640
        %v2657 = vpack.c.b16 %v2643, %v2642
        %v2658 = vpack.c.b16 %v2645, %v2644
        %v2659 = vpack.c.b16 %v2647, %v2646
        %v2660 = vpack.c.b16 %v2649, %v2648
        %v2661 = vpack.c.b16 %v2651, %v2650
        %v2662 = vpack.c.b16 %v2653, %v2652
        %v2663 = vpack.c.b16 %v2655, %v2654
        %2672 = vmatprep.subr.bf16.mxu0 0
        %2673 = vmatpush1.bf16.msra.mxu0 %v2656
        %2674 = vmatprep.subr.bf16.mxu0 0
        %2675 = vmatpush1.bf16.msra.mxu0 %v2657
        %2676 = vmatprep.subr.bf16.mxu0 0
        %2677 = vmatpush1.bf16.msra.mxu0 %v2658
        %2678 = vmatprep.subr.bf16.mxu0 0
        %2679 = vmatpush1.bf16.msra.mxu0 %v2659
        %2680 = vmatprep.subr.bf16.mxu0 0
        %2681 = vmatpush1.bf16.msra.mxu0 %v2660
        %2682 = vmatprep.subr.bf16.mxu0 0
        %2683 = vmatpush1.bf16.msra.mxu0 %v2661
        %2684 = vmatprep.subr.bf16.mxu0 0
        %2685 = vmatpush1.bf16.msra.mxu0 %v2662
        %2686 = vmatprep.subr.bf16.mxu0 0
        %2687 = vmatpush1.bf16.msra.mxu0 %v2663
        %2688 = vmatprep.subr.bf16.mxu0 0
        %2689 = vmatpush1.bf16.msra.mxu0 0
        %2690 = vmatprep.subr.bf16.mxu0 0
        %2691 = vmatpush1.bf16.msra.mxu0 0
        %2692 = vmatprep.subr.bf16.mxu0 0
        %2693 = vmatpush1.bf16.msra.mxu0 0
        %2694 = vmatprep.subr.bf16.mxu0 0
        %2695 = vmatpush1.bf16.msra.mxu0 0
        %2696 = vmatprep.subr.bf16.mxu0 0
        %2697 = vmatpush1.bf16.msra.mxu0 0
        %2698 = vmatprep.subr.bf16.mxu0 0
        %2699 = vmatpush1.bf16.msra.mxu0 0
        %2700 = vmatprep.subr.bf16.mxu0 0
        %2701 = vmatpush1.bf16.msra.mxu0 0
        %2702 = vmatprep.subr.bf16.mxu0 0
        %2703 = vmatpush1.bf16.msra.mxu0 0
        %2704 = vmatprep.mubr.bf16.mxu0 0
        %2705 = vmatmul.mubr.bf16.gmra.mrb[0].mxu0 %v2603
        %v2706 = vpop.f32.mrb[0].mxu0
        %v2707 = vadd.f32 0.0, %v2706
        %v2708 = vpop.f32.mrb[0].mxu0
        %v2709 = vpop.f32.mrb[0].mxu0
        %v2710 = vadd.f32 0.0, %v2709
        %v2711 = vpop.f32.mrb[0].mxu0
        %2712 = vmatprep.mubr.bf16.mxu0 0
        %2713 = vmatmul.mubr.bf16.gmra.mrb[0].mxu0 %v2604
        %v2714 = vpop.f32.mrb[0].mxu0
        %v2715 = vadd.f32 0.0, %v2714
        %v2716 = vpop.f32.mrb[0].mxu0
        %v2717 = vpop.f32.mrb[0].mxu0
        %v2718 = vadd.f32 0.0, %v2717
        %v2719 = vpop.f32.mrb[0].mxu0
        %2720 = vmatprep.mubr.bf16.mxu0 0
        %2721 = vmatmul.mubr.bf16.gmra.mrb[0].mxu0 %v2605
        %v2722 = vpop.f32.mrb[0].mxu0
        %v2723 = vadd.f32 0.0, %v2722
        %v2724 = vpop.f32.mrb[0].mxu0
        %v2725 = vpop.f32.mrb[0].mxu0
        %v2726 = vadd.f32 0.0, %v2725
        %v2727 = vpop.f32.mrb[0].mxu0
        %2728 = vmatprep.mubr.bf16.mxu0 0
        %2729 = vmatmul.mubr.bf16.gmra.mrb[0].mxu0 %v2606
        %v2730 = vpop.f32.mrb[0].mxu0
        %v2731 = vadd.f32 0.0, %v2730
        %v2732 = vpop.f32.mrb[0].mxu0
        %v2733 = vpop.f32.mrb[0].mxu0
        %v2734 = vadd.f32 0.0, %v2733
        %v2735 = vpop.f32.mrb[0].mxu0
        %2736 = vdwg.mxu0
        %v2737 = vadd.f32 %v2587, %v2707
        %v2738 = vadd.f32 %v2588, %v2710
        %v2739 = vadd.f32 %v2589, %v2715
        %v2740 = vadd.f32 %v2590, %v2718
        %v2741 = vadd.f32 %v2591, %v2723
        %v2742 = vadd.f32 %v2592, %v2726
        %v2743 = vadd.f32 %v2593, %v2731
        %v2744 = vadd.f32 %v2594, %v2734
        %v2745 = vld [vmem:[%s828] sm:$0x1]
        %v2746 = vld [vmem:[%s11] sm:$0x1]
        %v2748 = vlaneseq
        %v2749 = vshrl.u32 %v2748, 7
        %v2750 = vsub.s32 0, %v2749
        %v2751 = vrot.slane %v2746, %v2750
        %v2753 = vadd.f32 %v2737, %v2751
        %v2754 = vadd.f32 %v2738, %v2751
        %v2755 = vadd.f32 %v2739, %v2751
        %v2756 = vadd.f32 %v2740, %v2751
        %v2757 = vadd.f32 %v2741, %v2751
        %v2758 = vadd.f32 %v2742, %v2751
        %v2759 = vadd.f32 %v2743, %v2751
        %v2760 = vadd.f32 %v2744, %v2751
        %v2762 = vlaneseq
        %v2763 = vshrl.u32 %v2762, 7
        %v2764 = vsub.s32 0, %v2763
        %v2765 = vrot.slane %v2745, %v2764
        %v2767 = vmul.f32 %v1161, %v2765
        %v2768 = vmul.f32 %v1162, %v2765
        %v2769 = vmul.f32 %v1163, %v2765
        %v2770 = vmul.f32 %v1164, %v2765
        %v2771 = vmul.f32 %v1165, %v2765
        %v2772 = vmul.f32 %v1166, %v2765
        %v2773 = vmul.f32 %v1167, %v2765
        %v2774 = vmul.f32 %v1168, %v2765
        %v2775 = vadd.f32 %v2753, %v2767
        %v2776 = vadd.f32 %v2754, %v2768
        %v2777 = vadd.f32 %v2755, %v2769
        %v2778 = vadd.f32 %v2756, %v2770
        %v2779 = vadd.f32 %v2757, %v2771
        %v2780 = vadd.f32 %v2758, %v2772
        %v2781 = vadd.f32 %v2759, %v2773
        %v2782 = vadd.f32 %v2760, %v2774
        %v2783 = vunpack.c.l.bf16 %v865
        %v2784 = vunpack.c.l.bf16 %v866
        %v2785 = vunpack.c.l.bf16 %v867
        %v2786 = vunpack.c.l.bf16 %v868
        %v2787 = vunpack.c.l.bf16 %v869
        %v2788 = vunpack.c.l.bf16 %v870
        %v2789 = vunpack.c.l.bf16 %v871
        %v2790 = vunpack.c.l.bf16 %v872
        %v2791 = vadd.f32 %v2783, %v2775
        %v2792 = vadd.f32 %v2784, %v2776
        %v2793 = vadd.f32 %v2785, %v2777
        %v2794 = vadd.f32 %v2786, %v2778
        %v2795 = vadd.f32 %v2787, %v2779
        %v2796 = vadd.f32 %v2788, %v2780
        %v2797 = vadd.f32 %v2789, %v2781
        %v2798 = vadd.f32 %v2790, %v2782
        %2799 = vst [vmem:[%s800] sm:$0xff] %v2791
        %2800 = vst [vmem:[%s800 + $0x8] sm:$0xff] %v2792
        %2801 = vst [vmem:[%s800 + $0x10] sm:$0xff] %v2793
        %2802 = vst [vmem:[%s800 + $0x18] sm:$0xff] %v2794
        %2803 = vst [vmem:[%s800 + $0x20] sm:$0xff] %v2795
        %2804 = vst [vmem:[%s800 + $0x28] sm:$0xff] %v2796
        %2805 = vst [vmem:[%s800 + $0x30] sm:$0xff] %v2797
        %2806 = vst [vmem:[%s800 + $0x38] sm:$0xff] %v2798
        %v2807 = vunpack.c.l.bf16 %v873
        %v2808 = vunpack.c.l.bf16 %v874
        %v2809 = vunpack.c.l.bf16 %v875
        %v2810 = vunpack.c.l.bf16 %v876
        %v2811 = vunpack.c.l.bf16 %v877
        %v2812 = vunpack.c.l.bf16 %v878
        %v2813 = vunpack.c.l.bf16 %v879
        %v2814 = vunpack.c.l.bf16 %v880
        %v2815 = vadd.f32 %v2807, %v2775
        %v2816 = vadd.f32 %v2808, %v2776
        %v2817 = vadd.f32 %v2809, %v2777
        %v2818 = vadd.f32 %v2810, %v2778
        %v2819 = vadd.f32 %v2811, %v2779
        %v2820 = vadd.f32 %v2812, %v2780
        %v2821 = vadd.f32 %v2813, %v2781
        %v2822 = vadd.f32 %v2814, %v2782
        %2823 = vst [vmem:[%s807] sm:$0xff] %v2815
        %2824 = vst [vmem:[%s807 + $0x8] sm:$0xff] %v2816
        %2825 = vst [vmem:[%s807 + $0x10] sm:$0xff] %v2817
        %2826 = vst [vmem:[%s807 + $0x18] sm:$0xff] %v2818
        %2827 = vst [vmem:[%s807 + $0x20] sm:$0xff] %v2819
        %2828 = vst [vmem:[%s807 + $0x28] sm:$0xff] %v2820
        %2829 = vst [vmem:[%s807 + $0x30] sm:$0xff] %v2821
        %2830 = vst [vmem:[%s807 + $0x38] sm:$0xff] %v2822
        %s2831 = sand.u32 %s397, 1
        %s2832 = scalar_lea.sflag [#allocation5], %s2831
        %s2833 = sand.u32 %s397, 1
        %s2834 = smul.addr %s2833, 64
        %s2835 = scalar_lea.vmem [#allocation18], %s2834
        %s2836 = sand.u32 %s425, 1
        %s2837 = scalar_lea.sflag [#allocation20], %s2836
        %s2838 = sand.u32 %s425, 1
        %s2839 = smul.addr %s2838, 64
        %s2840 = scalar_lea.vmem [#allocation19], %s2839
        // Predicated region
        $region105: #{tpu_custom_call.1} parent=67 // pred_check
          %p2841 = pneg %p407
        $region106: #{tpu_custom_call.1} parent=67 // pred_check_branch
          %2843 = sbr.rel (%p2841) target = $region108
        $region107: #{tpu_custom_call.1} parent=67 // pred_region
          %s2844 = smul.u32 4, %s49
          %s2846 = ssub.s32 1024, 1024
          %2847 = vsyncadd %s2832, %s2846
          %s2848 = smul.addr %s2844, 2
          %s2849 = smul.addr %s48, 32
          %s2850 = sadd.s32 %s2848, %s2849
          %s2851 = smul.addr %s2850, 128
          %s2852 = scalar_lea.hbm %s12, %s2851
          %s2853 = sshll.u32 %s2835, 4
          %s2854 = int_to_ptr.vmem [resolvable:$true] %s2853
          %2859 = dma.vmem_to_hbm [thread:$0]  %s2854, 1024, %s2852, %s2832, 128, 128, 8
        $region108: #{tpu_custom_call.1} parent=67 // pred_fallthru
          _
        // Predicated region
        $region109: #{tpu_custom_call.1} parent=67 // pred_check
          %p2860 = pneg %p435
        $region110: #{tpu_custom_call.1} parent=67 // pred_check_branch
          %2862 = sbr.rel (%p2860) target = $region112
        $region111: #{tpu_custom_call.1} parent=67 // pred_region
          %s2863 = smul.u32 4, %s49
          %s2865 = ssub.s32 1024, 1024
          %2866 = vsyncadd %s2837, %s2865
          %s2867 = smul.addr %s2863, 2
          %s2868 = smul.addr %s48, 32
          %s2869 = sadd.s32 %s2867, %s2868
          %s2870 = smul.addr %s2869, 128
          %s2871 = scalar_lea.hbm %s13, %s2870
          %s2872 = sshll.u32 %s2840, 4
          %s2873 = int_to_ptr.vmem [resolvable:$true] %s2872
          %2878 = dma.vmem_to_hbm [thread:$0]  %s2873, 1024, %s2871, %s2837, 128, 128, 8
        $region112: #{tpu_custom_call.1} parent=67 // pred_fallthru
          _
      $region68: #{tpu_custom_call.1} parent=5 // pred_fallthru
        _
      %p2879 = scmp.le.s32.totalorder 2, %s39
      // Predicated region
      $region113: #{tpu_custom_call.1} parent=5 // pred_check
        %p2880 = pneg %p2879
      $region114: #{tpu_custom_call.1} parent=5 // pred_check_branch
        %2882 = sbr.rel (%p2880) target = $region116
      $region115: #{tpu_custom_call.1} parent=5 // pred_region
        %s2883 = ssub.s32 %s39, 2
        // Predicated region
        $region117: #{tpu_custom_call.1} parent=115 // pred_check
          %p2884 = pneg %p413
        $region118: #{tpu_custom_call.1} parent=115 // pred_check_branch
          %2886 = sbr.rel (%p2884) target = $region120
        $region119: #{tpu_custom_call.1} parent=115 // pred_region
          %s2887 = sand.u32 %s398, 1
          %s2888 = scalar_lea.sflag [#allocation5], %s2887
          %s2889 = sand.u32 %s398, 1
          %s2890 = smul.addr %s2889, 64
          %s2891 = scalar_lea.vmem [#allocation18], %s2890
          %2892 = dma.done %s2888, 1024
        $region120: #{tpu_custom_call.1} parent=115 // pred_fallthru
          _
        // Predicated region
        $region121: #{tpu_custom_call.1} parent=115 // pred_check
          %p2893 = pneg %p441
        $region122: #{tpu_custom_call.1} parent=115 // pred_check_branch
          %2895 = sbr.rel (%p2893) target = $region124
        $region123: #{tpu_custom_call.1} parent=115 // pred_region
          %s2896 = sand.u32 %s426, 1
          %s2897 = scalar_lea.sflag [#allocation20], %s2896
          %s2898 = sand.u32 %s426, 1
          %s2899 = smul.addr %s2898, 64
          %s2900 = scalar_lea.vmem [#allocation19], %s2899
          %2901 = dma.done %s2897, 1024
        $region124: #{tpu_custom_call.1} parent=115 // pred_fallthru
          _
      $region116: #{tpu_custom_call.1} parent=5 // pred_fallthru
        _
    $region6: #{tpu_custom_call.1} parent=1 // loop_footer
      %s43 = sadd.s32 1, %s39
    $region7: #{tpu_custom_call.1} parent=1 // loop_footer_branch
      %38 = sbr.rel target = $region3
    $region8: #{tpu_custom_call.1} parent=1 // loop_exit
      _
    %2902 = vsyncpa [#allocation4], 1
    %s2903 = scalar_lea.sflag [#allocation4], 1
    %2904 = vsyncpa %s2903, 1
    %2905 = vsyncpa [#allocation7], 1
    %s2906 = scalar_lea.sflag [#allocation7], 1
    %2907 = vsyncpa %s2906, 1
    %2908 = vsyncpa [#allocation10], 1
    %s2909 = scalar_lea.sflag [#allocation10], 1
    %2910 = vsyncpa %s2909, 1
    %2911 = vsyncpa [#allocation13], 1
    %s2912 = scalar_lea.sflag [#allocation13], 1
    %2913 = vsyncpa %s2912, 1
    %2914 = vsyncpa [#allocation16], 1
    %2915 = vsyncpa [#allocation5], 1
    %s2916 = scalar_lea.sflag [#allocation5], 1
    %2917 = vsyncpa %s2916, 1
    %2918 = vsyncpa [#allocation20], 1
    %s2919 = scalar_lea.sflag [#allocation20], 1
    %2920 = vsyncpa %s2919, 1

</llo_original>
